<compile_context>
chip_gen: v5e
topology: v5e:2x2
jax: 0.10.0
libtpu: 0.0.40
codegen_flags: <defaults>
</compile_context>

<pallas_src>
import functools

import jax
import jax.numpy as jnp
from jax.experimental import pallas as pl
from jax.experimental.pallas import tpu as pltpu


def _dae_kernel(noise_factor,
                x_ref, noise_ref,
                w1_ref, b1_ref, w2_ref, b2_ref,
                w3_ref, b3_ref, w4_ref, b4_ref,
                dec_ref, enc_ref):
    # Elementwise noise injection in f32 (VPU).  noise_factor is a static Python
    # float, so it lowers to an immediate (no captured constant).
    noisy = x_ref[...] + noise_factor * noise_ref[...]

    def linear(a_f32, w_ref, b_ref):
        # bf16 MXU operands, f32 accumulation; bias add stays in f32.
        return jnp.dot(a_f32.astype(jnp.bfloat16), w_ref[...],
                       preferred_element_type=jnp.float32) + b_ref[...]

    # Encoder: Linear -> ReLU -> Linear
    h1 = jnp.maximum(linear(noisy, w1_ref, b1_ref), 0.0)
    enc = linear(h1, w2_ref, b2_ref)

    # Decoder: Linear -> ReLU -> Linear
    h2 = jnp.maximum(linear(enc, w3_ref, b3_ref), 0.0)
    dec = linear(h2, w4_ref, b4_ref)

    enc_ref[...] = enc.astype(enc_ref.dtype)
    dec_ref[...] = dec.astype(dec_ref.dtype)


def dae_forward(x, noise, params, *, noise_factor=0.1, block_b=128):
    """Run the DAE forward pass in a Pallas kernel.

    x, noise : (B, input_dim) float32
    params   : dict with w1 (D,H), b1 (1,H), w2 (H,H), b2 (1,H),
                         w3 (H,H), b3 (1,H), w4 (H,D), b4 (1,D)   (float32)
    returns (decoded (B, D), encoded (B, H)) in float32.
    """
    B, D = x.shape
    H = params["w1"].shape[1]
    block_b = min(block_b, B)
    assert B % block_b == 0, "batch must be a multiple of block_b"
    grid = (B // block_b,)

    # Weights are cast to bf16 once on the host (halves weight DMA); biases stay f32.
    w1 = params["w1"].astype(jnp.bfloat16)
    w2 = params["w2"].astype(jnp.bfloat16)
    w3 = params["w3"].astype(jnp.bfloat16)
    w4 = params["w4"].astype(jnp.bfloat16)
    b1, b2, b3, b4 = params["b1"], params["b2"], params["b3"], params["b4"]

    def row_spec(cols):
        return pl.BlockSpec((block_b, cols), lambda i: (i, 0))

    def full_spec(r, c):
        return pl.BlockSpec((r, c), lambda i: (0, 0))

    # TODO(synk): optionally generate the Gaussian noise in-kernel
    # (pltpu.prng_seed + pltpu.stateful_normal) to drop the streamed noise input;
    # kept host-side here so the output is deterministic and verifiable.
    kernel = functools.partial(_dae_kernel, float(noise_factor))

    flops = 2 * B * (D * H + H * H + H * H + H * D)
    bytes_accessed = (
        2 * B * D * 4                      # x + noise (f32 in)
        + B * D * 4 + B * H * 4            # decoded + encoded (f32 out)
        + 2 * (D * H + H * H + H * H + H * D)   # bf16 weights
        + 4 * (3 * H + D)                  # f32 biases
    )

    decoded, encoded = pl.pallas_call(
        kernel,
        out_shape=(
            jax.ShapeDtypeStruct((B, D), x.dtype),   # decoded
            jax.ShapeDtypeStruct((B, H), x.dtype),   # encoded
        ),
        grid_spec=pltpu.PrefetchScalarGridSpec(
            num_scalar_prefetch=0,
            grid=grid,
            in_specs=[
                row_spec(D),            # x
                row_spec(D),            # noise
                full_spec(D, H),        # w1
                full_spec(1, H),        # b1
                full_spec(H, H),        # w2
                full_spec(1, H),        # b2
                full_spec(H, H),        # w3
                full_spec(1, H),        # b3
                full_spec(H, D),        # w4
                full_spec(1, D),        # b4
            ],
            out_specs=[
                row_spec(D),            # decoded
                row_spec(H),            # encoded
            ],
        ),
        compiler_params=pltpu.CompilerParams(
            dimension_semantics=("parallel",),
            vmem_limit_bytes=32 * 1024 * 1024,
        ),
        cost_estimate=pl.CostEstimate(
            flops=flops, transcendentals=0, bytes_accessed=bytes_accessed),
    )(x, noise, w1, b1, w2, b2, w3, b3, w4, b4)

    return decoded, encoded


def init_params(key, input_dim, hidden_dim, dtype=jnp.float32):
    """Deterministic synthetic parameters (PyTorch Linear shapes, stored transposed)."""
    ks = jax.random.split(key, 8)

    def linear(kw, kb, fan_in, fan_out):
        bound = 1.0 / jnp.sqrt(fan_in)
        w = jax.random.uniform(kw, (fan_in, fan_out), dtype, -bound, bound)
        b = jax.random.uniform(kb, (1, fan_out), dtype, -bound, bound)
        return w, b

    w1, b1 = linear(ks[0], ks[1], input_dim, hidden_dim)
    w2, b2 = linear(ks[2], ks[3], hidden_dim, hidden_dim)
    w3, b3 = linear(ks[4], ks[5], hidden_dim, hidden_dim)
    w4, b4 = linear(ks[6], ks[7], hidden_dim, input_dim)
    return dict(w1=w1, b1=b1, w2=w2, b2=b2, w3=w3, b3=b3, w4=w4, b4=b4)


def dae_reference(x, noise, params, noise_factor=0.1, matmul_dtype=jnp.float32):
    """Pure-JAX reference.  With matmul_dtype=bf16 it mirrors the kernel's precision."""
    def linear(a, w, b):
        return jnp.dot(a.astype(matmul_dtype), w.astype(matmul_dtype),
                       preferred_element_type=jnp.float32) + b

    noisy = x + noise_factor * noise
    h1 = jnp.maximum(linear(noisy, params["w1"], params["b1"]), 0.0)
    enc = linear(h1, params["w2"], params["b2"])
    h2 = jnp.maximum(linear(enc, params["w3"], params["b3"]), 0.0)
    dec = linear(h2, params["w4"], params["b4"])
    return dec, enc


if __name__ == "__main__":
    INPUT_DIM = 512
    HIDDEN_DIM = 256
    BATCH = 256            # 2 grid steps of 128 rows -> MXU-shaped tiles, megacore-friendly
    NOISE_FACTOR = 0.1

    key = jax.random.PRNGKey(0)
    k_x, k_noise, k_params = jax.random.split(key, 3)

    x = jax.random.normal(k_x, (BATCH, INPUT_DIM), jnp.float32)
    # Gaussian noise generated host-side (deterministic), injected inside the kernel.
    noise = jax.random.normal(k_noise, (BATCH, INPUT_DIM), jnp.float32)
    params = init_params(k_params, INPUT_DIM, HIDDEN_DIM)

    decoded, encoded = dae_forward(x, noise, params,
                                   noise_factor=NOISE_FACTOR, block_b=128)
    jax.block_until_ready((decoded, encoded))

    assert decoded.shape == (BATCH, INPUT_DIM) and encoded.shape == (BATCH, HIDDEN_DIM)

    # Precision-matched reference (bf16 matmul operands, f32 accumulation) -> tight check.
    dec_m, enc_m = dae_reference(x, noise, params, NOISE_FACTOR, matmul_dtype=jnp.bfloat16)
    assert jnp.allclose(decoded, dec_m, atol=2e-3, rtol=2e-3)
    assert jnp.allclose(encoded, enc_m, atol=2e-3, rtol=2e-3)

    # Full-f32 reference -> loose sanity check (bf16 MXU operands lose ~8 mantissa bits).
    dec_f, enc_f = dae_reference(x, noise, params, NOISE_FACTOR, matmul_dtype=jnp.float32)
    assert jnp.allclose(decoded, dec_f, atol=5e-2, rtol=5e-2)
    assert jnp.allclose(encoded, enc_f, atol=5e-2, rtol=5e-2)

    print("KERNEL_OK")
</pallas_src>

<mosaic_0001>
module attributes {stable_mosaic.version = 11 : i64} {
  func.func @_dae_kernel(%arg0: i32, %arg1: memref<128x512xf32, #tpu.memory_space<vmem>>, %arg2: memref<128x512xf32, #tpu.memory_space<vmem>>, %arg3: memref<512x256xbf16, #tpu.memory_space<vmem>>, %arg4: memref<1x256xf32, #tpu.memory_space<vmem>>, %arg5: memref<256x256xbf16, #tpu.memory_space<vmem>>, %arg6: memref<1x256xf32, #tpu.memory_space<vmem>>, %arg7: memref<256x256xbf16, #tpu.memory_space<vmem>>, %arg8: memref<1x256xf32, #tpu.memory_space<vmem>>, %arg9: memref<256x512xbf16, #tpu.memory_space<vmem>>, %arg10: memref<1x512xf32, #tpu.memory_space<vmem>>, %arg11: memref<128x512xf32, #tpu.memory_space<vmem>>, %arg12: memref<128x256xf32, #tpu.memory_space<vmem>>) attributes {dimension_semantics = [#tpu.dimension_semantics<parallel>], iteration_bounds = array<i64: 2>, scalar_prefetch = 0 : i64, scratch_operands = 0 : i64, tpu.core_type = #tpu.core_type<tc>, window_params = [{transform_indices = @transform_0, window_bounds = array<i64: 128, 512>}, {transform_indices = @transform_1, window_bounds = array<i64: 128, 512>}, {pipeline_mode = #tpu.pipeline_mode<synchronous>, transform_indices = @transform_2, window_bounds = array<i64: 512, 256>}, {pipeline_mode = #tpu.pipeline_mode<synchronous>, transform_indices = @transform_3, window_bounds = array<i64: 1, 256>}, {pipeline_mode = #tpu.pipeline_mode<synchronous>, transform_indices = @transform_4, window_bounds = array<i64: 256, 256>}, {pipeline_mode = #tpu.pipeline_mode<synchronous>, transform_indices = @transform_5, window_bounds = array<i64: 1, 256>}, {pipeline_mode = #tpu.pipeline_mode<synchronous>, transform_indices = @transform_6, window_bounds = array<i64: 256, 256>}, {pipeline_mode = #tpu.pipeline_mode<synchronous>, transform_indices = @transform_7, window_bounds = array<i64: 1, 256>}, {pipeline_mode = #tpu.pipeline_mode<synchronous>, transform_indices = @transform_8, window_bounds = array<i64: 256, 512>}, {pipeline_mode = #tpu.pipeline_mode<synchronous>, transform_indices = @transform_9, window_bounds = array<i64: 1, 512>}, {transform_indices = @transform_10, window_bounds = array<i64: 128, 512>}, {transform_indices = @transform_11, window_bounds = array<i64: 128, 256>}]} {
    %c0 = arith.constant 0 : index
    %c0_0 = arith.constant 0 : index
    %0 = vector.load %arg1[%c0, %c0_0] : memref<128x512xf32, #tpu.memory_space<vmem>>, vector<128x512xf32>
    %c0_1 = arith.constant 0 : index
    %c0_2 = arith.constant 0 : index
    %1 = vector.load %arg2[%c0_1, %c0_2] : memref<128x512xf32, #tpu.memory_space<vmem>>, vector<128x512xf32>
    %cst = arith.constant 1.000000e-01 : f32
    %2 = vector.broadcast %cst : f32 to vector<128x512xf32>
    %3 = arith.mulf %2, %1 : vector<128x512xf32>
    %4 = arith.addf %0, %3 : vector<128x512xf32>
    %5 = arith.truncf %4 : vector<128x512xf32> to vector<128x512xbf16>
    %c0_3 = arith.constant 0 : index
    %c0_4 = arith.constant 0 : index
    %6 = vector.load %arg3[%c0_3, %c0_4] : memref<512x256xbf16, #tpu.memory_space<vmem>>, vector<512x256xbf16>
    %cst_5 = arith.constant dense<0.000000e+00> : vector<128x256xf32>
    %7 = tpu.matmul %5, %6, %cst_5 {dimension_numbers = #tpu.dot_dimension_numbers<[1], [0], [0], [1], [0, 0, 1, 1], [], []>} : vector<128x512xbf16>, vector<512x256xbf16>, vector<128x256xf32> -> vector<128x256xf32>
    %c0_6 = arith.constant 0 : index
    %c0_7 = arith.constant 0 : index
    %8 = vector.load %arg4[%c0_6, %c0_7] : memref<1x256xf32, #tpu.memory_space<vmem>>, vector<1x256xf32>
    %9 = vector.broadcast %8 : vector<1x256xf32> to vector<128x256xf32>
    %10 = arith.addf %7, %9 : vector<128x256xf32>
    %cst_8 = arith.constant 0.000000e+00 : f32
    %11 = vector.broadcast %cst_8 : f32 to vector<128x256xf32>
    %12 = arith.maximumf %10, %11 : vector<128x256xf32>
    %13 = arith.truncf %12 : vector<128x256xf32> to vector<128x256xbf16>
    %c0_9 = arith.constant 0 : index
    %c0_10 = arith.constant 0 : index
    %14 = vector.load %arg5[%c0_9, %c0_10] : memref<256x256xbf16, #tpu.memory_space<vmem>>, vector<256x256xbf16>
    %cst_11 = arith.constant dense<0.000000e+00> : vector<128x256xf32>
    %15 = tpu.matmul %13, %14, %cst_11 {dimension_numbers = #tpu.dot_dimension_numbers<[1], [0], [0], [1], [0, 0, 1, 1], [], []>} : vector<128x256xbf16>, vector<256x256xbf16>, vector<128x256xf32> -> vector<128x256xf32>
    %c0_12 = arith.constant 0 : index
    %c0_13 = arith.constant 0 : index
    %16 = vector.load %arg6[%c0_12, %c0_13] : memref<1x256xf32, #tpu.memory_space<vmem>>, vector<1x256xf32>
    %17 = vector.broadcast %16 : vector<1x256xf32> to vector<128x256xf32>
    %18 = arith.addf %15, %17 : vector<128x256xf32>
    %19 = arith.truncf %18 : vector<128x256xf32> to vector<128x256xbf16>
    %c0_14 = arith.constant 0 : index
    %c0_15 = arith.constant 0 : index
    %20 = vector.load %arg7[%c0_14, %c0_15] : memref<256x256xbf16, #tpu.memory_space<vmem>>, vector<256x256xbf16>
    %cst_16 = arith.constant dense<0.000000e+00> : vector<128x256xf32>
    %21 = tpu.matmul %19, %20, %cst_16 {dimension_numbers = #tpu.dot_dimension_numbers<[1], [0], [0], [1], [0, 0, 1, 1], [], []>} : vector<128x256xbf16>, vector<256x256xbf16>, vector<128x256xf32> -> vector<128x256xf32>
    %c0_17 = arith.constant 0 : index
    %c0_18 = arith.constant 0 : index
    %22 = vector.load %arg8[%c0_17, %c0_18] : memref<1x256xf32, #tpu.memory_space<vmem>>, vector<1x256xf32>
    %23 = vector.broadcast %22 : vector<1x256xf32> to vector<128x256xf32>
    %24 = arith.addf %21, %23 : vector<128x256xf32>
    %cst_19 = arith.constant 0.000000e+00 : f32
    %25 = vector.broadcast %cst_19 : f32 to vector<128x256xf32>
    %26 = arith.maximumf %24, %25 : vector<128x256xf32>
    %27 = arith.truncf %26 : vector<128x256xf32> to vector<128x256xbf16>
    %c0_20 = arith.constant 0 : index
    %c0_21 = arith.constant 0 : index
    %28 = vector.load %arg9[%c0_20, %c0_21] : memref<256x512xbf16, #tpu.memory_space<vmem>>, vector<256x512xbf16>
    %cst_22 = arith.constant dense<0.000000e+00> : vector<128x512xf32>
    %29 = tpu.matmul %27, %28, %cst_22 {dimension_numbers = #tpu.dot_dimension_numbers<[1], [0], [0], [1], [0, 0, 1, 1], [], []>} : vector<128x256xbf16>, vector<256x512xbf16>, vector<128x512xf32> -> vector<128x512xf32>
    %c0_23 = arith.constant 0 : index
    %c0_24 = arith.constant 0 : index
    %30 = vector.load %arg10[%c0_23, %c0_24] : memref<1x512xf32, #tpu.memory_space<vmem>>, vector<1x512xf32>
    %31 = vector.broadcast %30 : vector<1x512xf32> to vector<128x512xf32>
    %32 = arith.addf %29, %31 : vector<128x512xf32>
    %c0_25 = arith.constant 0 : index
    %c0_26 = arith.constant 0 : index
    %33 = vector.load %arg12[%c0_25, %c0_26] : memref<128x256xf32, #tpu.memory_space<vmem>>, vector<128x256xf32>
    tpu.vector_store %arg12[%c0_25, %c0_26], %18 {strides = array<i32>} : memref<128x256xf32, #tpu.memory_space<vmem>>, vector<128x256xf32>,
    %c0_27 = arith.constant 0 : index
    %c0_28 = arith.constant 0 : index
    %34 = vector.load %arg11[%c0_27, %c0_28] : memref<128x512xf32, #tpu.memory_space<vmem>>, vector<128x512xf32>
    tpu.vector_store %arg11[%c0_27, %c0_28], %32 {strides = array<i32>} : memref<128x512xf32, #tpu.memory_space<vmem>>, vector<128x512xf32>,
    return
  }
  func.func @transform_0(%arg0: i32) -> (i32, i32) {
    %c0_i32 = arith.constant 0 : i32
    %c0_i32_0 = arith.constant 0 : i32
    return %arg0, %c0_i32 : i32, i32
  }
  func.func @transform_1(%arg0: i32) -> (i32, i32) {
    %c0_i32 = arith.constant 0 : i32
    %c0_i32_0 = arith.constant 0 : i32
    return %arg0, %c0_i32 : i32, i32
  }
  func.func @transform_2(%arg0: i32) -> (i32, i32) {
    %c0_i32 = arith.constant 0 : i32
    %c0_i32_0 = arith.constant 0 : i32
    %c0_i32_1 = arith.constant 0 : i32
    return %c0_i32, %c0_i32_0 : i32, i32
  }
  func.func @transform_3(%arg0: i32) -> (i32, i32) {
    %c0_i32 = arith.constant 0 : i32
    %c0_i32_0 = arith.constant 0 : i32
    %c0_i32_1 = arith.constant 0 : i32
    return %c0_i32, %c0_i32_0 : i32, i32
  }
  func.func @transform_4(%arg0: i32) -> (i32, i32) {
    %c0_i32 = arith.constant 0 : i32
    %c0_i32_0 = arith.constant 0 : i32
    %c0_i32_1 = arith.constant 0 : i32
    return %c0_i32, %c0_i32_0 : i32, i32
  }
  func.func @transform_5(%arg0: i32) -> (i32, i32) {
    %c0_i32 = arith.constant 0 : i32
    %c0_i32_0 = arith.constant 0 : i32
    %c0_i32_1 = arith.constant 0 : i32
    return %c0_i32, %c0_i32_0 : i32, i32
  }
  func.func @transform_6(%arg0: i32) -> (i32, i32) {
    %c0_i32 = arith.constant 0 : i32
    %c0_i32_0 = arith.constant 0 : i32
    %c0_i32_1 = arith.constant 0 : i32
    return %c0_i32, %c0_i32_0 : i32, i32
  }
  func.func @transform_7(%arg0: i32) -> (i32, i32) {
    %c0_i32 = arith.constant 0 : i32
    %c0_i32_0 = arith.constant 0 : i32
    %c0_i32_1 = arith.constant 0 : i32
    return %c0_i32, %c0_i32_0 : i32, i32
  }
  func.func @transform_8(%arg0: i32) -> (i32, i32) {
    %c0_i32 = arith.constant 0 : i32
    %c0_i32_0 = arith.constant 0 : i32
    %c0_i32_1 = arith.constant 0 : i32
    return %c0_i32, %c0_i32_0 : i32, i32
  }
  func.func @transform_9(%arg0: i32) -> (i32, i32) {
    %c0_i32 = arith.constant 0 : i32
    %c0_i32_0 = arith.constant 0 : i32
    %c0_i32_1 = arith.constant 0 : i32
    return %c0_i32, %c0_i32_0 : i32, i32
  }
  func.func @transform_10(%arg0: i32) -> (i32, i32) {
    %c0_i32 = arith.constant 0 : i32
    %c0_i32_0 = arith.constant 0 : i32
    return %arg0, %c0_i32 : i32, i32
  }
  func.func @transform_11(%arg0: i32) -> (i32, i32) {
    %c0_i32 = arith.constant 0 : i32
    %c0_i32_0 = arith.constant 0 : i32
    return %arg0, %c0_i32 : i32, i32
  }
}

</mosaic_0001>

<llo_original>
// kernel: tpu_custom_call.1
$region0: #{tpu_custom_call.1}
  #allocation0 [shape = 'u32[]', space=smem, size = 0x4, offset = 0x4, fixed_abs, tag = 'smem constant byte address 0x4 - core index']
  #allocation1 [shape = 'u32[72,128]{1,0:T(1,128)}', space=vmem, size = 0x9000, scoped, tag = 'internal scratch']
  %s0 = inlined_call_operand.hbm [shape: f32[256,512], index: 0, kind: input, shape index: {}]
  %s1 = inlined_call_operand.hbm [shape: f32[256,512], index: 1, kind: input, shape index: {}]
  %s2 = inlined_call_operand.hbm [shape: bf16[512,256], index: 2, kind: input, shape index: {}]
  %s3 = inlined_call_operand.vmem [shape: f32[1,256], index: 3, kind: input, shape index: {}]
  %s4 = inlined_call_operand.hbm [shape: bf16[256,256], index: 4, kind: input, shape index: {}]
  %s5 = inlined_call_operand.hbm [shape: f32[1,256], index: 5, kind: input, shape index: {}]
  %s6 = inlined_call_operand.hbm [shape: bf16[256,256], index: 6, kind: input, shape index: {}]
  %s7 = inlined_call_operand.hbm [shape: f32[1,256], index: 7, kind: input, shape index: {}]
  %s8 = inlined_call_operand.hbm [shape: bf16[256,512], index: 8, kind: input, shape index: {}]
  %s9 = inlined_call_operand.vmem [shape: f32[1,512], index: 9, kind: input, shape index: {}]
  %s10 = inlined_call_operand.hbm [shape: f32[256,512], index: 10, kind: output, shape index: {0}]
  %s11 = inlined_call_operand.hbm [shape: f32[256,256], index: 11, kind: output, shape index: {1}]
  %12 = xla_tuple %s10, %s11
  %s13 = sld [smem:[#allocation0]]
  $region113: #{tpu_custom_call.1} parent=0
    _
  %s15 = ssub.s32 1, %s13
  %s16 = scalar_select 0, %s15, %s13
  $region1: #{tpu_custom_call.1} parent=0
    #allocation2 [shape = 'u8[524288]{0}', space=vmem, size = 0x80000, scoped, tag = 'input window, operand 0']
    #allocation3 [shape = 's32[2]{0}', space=sflag, size = 0x8, scoped, tag = 'scoped memory for tpu_custom_call.1']
    #allocation4 [shape = 's32[2]{0}', space=sflag, size = 0x8, scoped, tag = 'scoped memory for tpu_custom_call.1']
    #allocation5 [shape = 'u8[524288]{0}', space=vmem, size = 0x80000, scoped, tag = 'input window, operand 1']
    #allocation6 [shape = 's32[2]{0}', space=sflag, size = 0x8, scoped, tag = 'scoped memory for tpu_custom_call.1']
    #allocation7 [shape = 'u8[262144]{0}', space=vmem, size = 0x40000, scoped, tag = 'input window, operand 2, single buffered']
    #allocation8 [shape = 'u8[131072]{0}', space=vmem, size = 0x20000, scoped, tag = 'input window, operand 4, single buffered']
    #allocation9 [shape = 's32[1]{0}', space=sflag, size = 0x4, scoped, tag = 'scoped memory for tpu_custom_call.1']
    #allocation10 [shape = 'u8[1024]{0}', space=vmem, size = 0x400, scoped, tag = 'input window, operand 5, single buffered']
    #allocation11 [shape = 'u8[131072]{0}', space=vmem, size = 0x20000, scoped, tag = 'input window, operand 6, single buffered']
    #allocation12 [shape = 's32[1]{0}', space=sflag, size = 0x4, scoped, tag = 'scoped memory for tpu_custom_call.1']
    #allocation13 [shape = 'u8[1024]{0}', space=vmem, size = 0x400, scoped, tag = 'input window, operand 7, single buffered']
    #allocation14 [shape = 'u8[262144]{0}', space=vmem, size = 0x40000, scoped, tag = 'input window, operand 8, single buffered']
    #allocation15 [shape = 's32[1]{0}', space=sflag, size = 0x4, scoped, tag = 'scoped memory for tpu_custom_call.1']
    #allocation16 [shape = 'u8[524288]{0}', space=vmem, size = 0x80000, scoped, tag = 'output window, operand 0']
    #allocation17 [shape = 'u8[262144]{0}', space=vmem, size = 0x40000, scoped, tag = 'output window, operand 1']
    #allocation18 [shape = 's32[2]{0}', space=sflag, size = 0x8, scoped, tag = 'scoped memory for tpu_custom_call.1']
    %17 = vsyncpa [#allocation3], 0
    %s18 = scalar_lea.sflag [#allocation3], 1
    %19 = vsyncpa %s18, 0
    %20 = vsyncpa [#allocation6], 0
    %s21 = scalar_lea.sflag [#allocation6], 1
    %22 = vsyncpa %s21, 0
    %23 = vsyncpa [#allocation9], 0
    %24 = vsyncpa [#allocation12], 0
    %25 = vsyncpa [#allocation15], 0
    %26 = vsyncpa [#allocation4], 0
    %s27 = scalar_lea.sflag [#allocation4], 1
    %28 = vsyncpa %s27, 0
    %29 = vsyncpa [#allocation18], 0
    %s30 = scalar_lea.sflag [#allocation18], 1
    %31 = vsyncpa %s30, 0
    loop: start=0, step=1, limit=4
    $region2: #{tpu_custom_call.1} parent=1 // loop_pre_header
      _
    $region3: #{tpu_custom_call.1} parent=1 // loop_header
      %s33 = sphi 0, %s37
      %p34 = scmp.ge.s32.totalorder %s33, 4
      %s43 = sphi 0, %s45
      %s46 = sphi 0, %s43
      %s47 = sphi 0, %s46
      %s63 = sphi 0, %s47
      %s69 = sphi 0, %s71
      %s72 = sphi 0, %s69
      %s73 = sphi 0, %s72
      %s89 = sphi 0, %s73
      %s93 = sphi 0, %s93
      %s95 = sphi 0, %s93
      %s96 = sphi 0, %s95
      %s110 = sphi 0, %s96
      %s114 = sphi 0, %s114
      %s116 = sphi 0, %s114
      %s117 = sphi 0, %s116
      %s131 = sphi 0, %s117
      %s135 = sphi 0, %s135
      %s137 = sphi 0, %s135
      %s138 = sphi 0, %s137
      %s152 = sphi 0, %s138
      %s156 = sphi 0, %s156
      %s158 = sphi 0, %s156
      %s159 = sphi 0, %s158
      %s173 = sphi 0, %s159
      %s177 = sphi 0, %s177
      %s179 = sphi 0, %s177
      %s180 = sphi 0, %s179
      %s194 = sphi 0, %s180
      %s198 = sphi 0, %s198
      %s200 = sphi 0, %s198
      %s201 = sphi 0, %s200
      %s215 = sphi 0, %s201
      %s219 = sphi 0, %s219
      %s221 = sphi 0, %s219
      %s222 = sphi 0, %s221
      %s236 = sphi 0, %s222
      %s240 = sphi 0, %s240
      %s242 = sphi 0, %s240
      %s243 = sphi 0, %s242
      %s257 = sphi 0, %s243
      %s263 = sphi 0, %s265
      %s266 = sphi 0, %s263
      %s267 = sphi 0, %s266
      %s283 = sphi 0, %s267
      %s289 = sphi 0, %s291
      %s292 = sphi 0, %s289
      %s293 = sphi 0, %s292
      %s309 = sphi 0, %s293
    $region4: #{tpu_custom_call.1} parent=1 // loop_header_branch
      %36 = sbr.rel (%p34) target = $region8
    $region5: #{tpu_custom_call.1} parent=1 // loop_body
      %s38 = ssub.s32 %s33, 1
      %s39 = ssub.s32 %s33, 2
      %s40 = sadd.s32 %s33, 1
      %s41 = ssub.s32 %s33, %s40
      %p42 = scmp.eq.s32.totalorder %s41, 0
      %s44 = sadd.s32 %s43, 1
      %s45 = scalar_select %p42, %s43, %s44
      %p48 = pneg %p42
      %p49 = scmp.eq.s32.totalorder %s33, 1
      %p50 = por %p48, %p49
      %p51 = scmp.ne.s32.totalorder %s43, %s46
      %p52 = scmp.eq.s32.totalorder %s33, 0
      %p53 = por %p51, %p52
      %p54 = scmp.ne.s32.totalorder %s43, %s46
      %p55 = scmp.eq.s32.totalorder %s38, 1
      %p56 = por %p54, %p55
      %p57 = scmp.ne.s32.totalorder %s46, %s47
      %p58 = scmp.eq.s32.totalorder %s38, 0
      %p59 = por %p57, %p58
      %p60 = scmp.ne.s32.totalorder %s46, %s47
      %p61 = scmp.eq.s32.totalorder %s39, 1
      %p62 = por %p60, %p61
      %p64 = scmp.ne.s32.totalorder %s47, %s63
      %p65 = scmp.eq.s32.totalorder %s39, 0
      %p66 = por %p64, %p65
      %s67 = ssub.s32 %s33, %s40
      %p68 = scmp.eq.s32.totalorder %s67, 0
      %s70 = sadd.s32 %s69, 1
      %s71 = scalar_select %p68, %s69, %s70
      %p74 = pneg %p68
      %p75 = scmp.eq.s32.totalorder %s33, 1
      %p76 = por %p74, %p75
      %p77 = scmp.ne.s32.totalorder %s69, %s72
      %p78 = scmp.eq.s32.totalorder %s33, 0
      %p79 = por %p77, %p78
      %p80 = scmp.ne.s32.totalorder %s69, %s72
      %p81 = scmp.eq.s32.totalorder %s38, 1
      %p82 = por %p80, %p81
      %p83 = scmp.ne.s32.totalorder %s72, %s73
      %p84 = scmp.eq.s32.totalorder %s38, 0
      %p85 = por %p83, %p84
      %p86 = scmp.ne.s32.totalorder %s72, %s73
      %p87 = scmp.eq.s32.totalorder %s39, 1
      %p88 = por %p86, %p87
      %p90 = scmp.ne.s32.totalorder %s73, %s89
      %p91 = scmp.eq.s32.totalorder %s39, 0
      %p92 = por %p90, %p91
      %s94 = sadd.s32 %s93, 1
      %p97 = scmp.eq.s32.totalorder %s33, 1
      %p98 = scmp.ne.s32.totalorder %s93, %s95
      %p99 = scmp.eq.s32.totalorder %s33, 0
      %p100 = por %p98, %p99
      %p101 = scmp.ne.s32.totalorder %s93, %s95
      %p102 = scmp.eq.s32.totalorder %s38, 1
      %p103 = por %p101, %p102
      %p104 = scmp.ne.s32.totalorder %s95, %s96
      %p105 = scmp.eq.s32.totalorder %s38, 0
      %p106 = por %p104, %p105
      %p107 = scmp.ne.s32.totalorder %s95, %s96
      %p108 = scmp.eq.s32.totalorder %s39, 1
      %p109 = por %p107, %p108
      %p111 = scmp.ne.s32.totalorder %s96, %s110
      %p112 = scmp.eq.s32.totalorder %s39, 0
      %p113 = por %p111, %p112
      %s115 = sadd.s32 %s114, 1
      %p118 = scmp.eq.s32.totalorder %s33, 1
      %p119 = scmp.ne.s32.totalorder %s114, %s116
      %p120 = scmp.eq.s32.totalorder %s33, 0
      %p121 = por %p119, %p120
      %p122 = scmp.ne.s32.totalorder %s114, %s116
      %p123 = scmp.eq.s32.totalorder %s38, 1
      %p124 = por %p122, %p123
      %p125 = scmp.ne.s32.totalorder %s116, %s117
      %p126 = scmp.eq.s32.totalorder %s38, 0
      %p127 = por %p125, %p126
      %p128 = scmp.ne.s32.totalorder %s116, %s117
      %p129 = scmp.eq.s32.totalorder %s39, 1
      %p130 = por %p128, %p129
      %p132 = scmp.ne.s32.totalorder %s117, %s131
      %p133 = scmp.eq.s32.totalorder %s39, 0
      %p134 = por %p132, %p133
      %s136 = sadd.s32 %s135, 1
      %p139 = scmp.eq.s32.totalorder %s33, 1
      %p140 = scmp.ne.s32.totalorder %s135, %s137
      %p141 = scmp.eq.s32.totalorder %s33, 0
      %p142 = por %p140, %p141
      %p143 = scmp.ne.s32.totalorder %s135, %s137
      %p144 = scmp.eq.s32.totalorder %s38, 1
      %p145 = por %p143, %p144
      %p146 = scmp.ne.s32.totalorder %s137, %s138
      %p147 = scmp.eq.s32.totalorder %s38, 0
      %p148 = por %p146, %p147
      %p149 = scmp.ne.s32.totalorder %s137, %s138
      %p150 = scmp.eq.s32.totalorder %s39, 1
      %p151 = por %p149, %p150
      %p153 = scmp.ne.s32.totalorder %s138, %s152
      %p154 = scmp.eq.s32.totalorder %s39, 0
      %p155 = por %p153, %p154
      %s157 = sadd.s32 %s156, 1
      %p160 = scmp.eq.s32.totalorder %s33, 1
      %p161 = scmp.ne.s32.totalorder %s156, %s158
      %p162 = scmp.eq.s32.totalorder %s33, 0
      %p163 = por %p161, %p162
      %p164 = scmp.ne.s32.totalorder %s156, %s158
      %p165 = scmp.eq.s32.totalorder %s38, 1
      %p166 = por %p164, %p165
      %p167 = scmp.ne.s32.totalorder %s158, %s159
      %p168 = scmp.eq.s32.totalorder %s38, 0
      %p169 = por %p167, %p168
      %p170 = scmp.ne.s32.totalorder %s158, %s159
      %p171 = scmp.eq.s32.totalorder %s39, 1
      %p172 = por %p170, %p171
      %p174 = scmp.ne.s32.totalorder %s159, %s173
      %p175 = scmp.eq.s32.totalorder %s39, 0
      %p176 = por %p174, %p175
      %s178 = sadd.s32 %s177, 1
      %p181 = scmp.eq.s32.totalorder %s33, 1
      %p182 = scmp.ne.s32.totalorder %s177, %s179
      %p183 = scmp.eq.s32.totalorder %s33, 0
      %p184 = por %p182, %p183
      %p185 = scmp.ne.s32.totalorder %s177, %s179
      %p186 = scmp.eq.s32.totalorder %s38, 1
      %p187 = por %p185, %p186
      %p188 = scmp.ne.s32.totalorder %s179, %s180
      %p189 = scmp.eq.s32.totalorder %s38, 0
      %p190 = por %p188, %p189
      %p191 = scmp.ne.s32.totalorder %s179, %s180
      %p192 = scmp.eq.s32.totalorder %s39, 1
      %p193 = por %p191, %p192
      %p195 = scmp.ne.s32.totalorder %s180, %s194
      %p196 = scmp.eq.s32.totalorder %s39, 0
      %p197 = por %p195, %p196
      %s199 = sadd.s32 %s198, 1
      %p202 = scmp.eq.s32.totalorder %s33, 1
      %p203 = scmp.ne.s32.totalorder %s198, %s200
      %p204 = scmp.eq.s32.totalorder %s33, 0
      %p205 = por %p203, %p204
      %p206 = scmp.ne.s32.totalorder %s198, %s200
      %p207 = scmp.eq.s32.totalorder %s38, 1
      %p208 = por %p206, %p207
      %p209 = scmp.ne.s32.totalorder %s200, %s201
      %p210 = scmp.eq.s32.totalorder %s38, 0
      %p211 = por %p209, %p210
      %p212 = scmp.ne.s32.totalorder %s200, %s201
      %p213 = scmp.eq.s32.totalorder %s39, 1
      %p214 = por %p212, %p213
      %p216 = scmp.ne.s32.totalorder %s201, %s215
      %p217 = scmp.eq.s32.totalorder %s39, 0
      %p218 = por %p216, %p217
      %s220 = sadd.s32 %s219, 1
      %p223 = scmp.eq.s32.totalorder %s33, 1
      %p224 = scmp.ne.s32.totalorder %s219, %s221
      %p225 = scmp.eq.s32.totalorder %s33, 0
      %p226 = por %p224, %p225
      %p227 = scmp.ne.s32.totalorder %s219, %s221
      %p228 = scmp.eq.s32.totalorder %s38, 1
      %p229 = por %p227, %p228
      %p230 = scmp.ne.s32.totalorder %s221, %s222
      %p231 = scmp.eq.s32.totalorder %s38, 0
      %p232 = por %p230, %p231
      %p233 = scmp.ne.s32.totalorder %s221, %s222
      %p234 = scmp.eq.s32.totalorder %s39, 1
      %p235 = por %p233, %p234
      %p237 = scmp.ne.s32.totalorder %s222, %s236
      %p238 = scmp.eq.s32.totalorder %s39, 0
      %p239 = por %p237, %p238
      %s241 = sadd.s32 %s240, 1
      %p244 = scmp.eq.s32.totalorder %s33, 1
      %p245 = scmp.ne.s32.totalorder %s240, %s242
      %p246 = scmp.eq.s32.totalorder %s33, 0
      %p247 = por %p245, %p246
      %p248 = scmp.ne.s32.totalorder %s240, %s242
      %p249 = scmp.eq.s32.totalorder %s38, 1
      %p250 = por %p248, %p249
      %p251 = scmp.ne.s32.totalorder %s242, %s243
      %p252 = scmp.eq.s32.totalorder %s38, 0
      %p253 = por %p251, %p252
      %p254 = scmp.ne.s32.totalorder %s242, %s243
      %p255 = scmp.eq.s32.totalorder %s39, 1
      %p256 = por %p254, %p255
      %p258 = scmp.ne.s32.totalorder %s243, %s257
      %p259 = scmp.eq.s32.totalorder %s39, 0
      %p260 = por %p258, %p259
      %s261 = ssub.s32 %s33, %s40
      %p262 = scmp.eq.s32.totalorder %s261, 0
      %s264 = sadd.s32 %s263, 1
      %s265 = scalar_select %p262, %s263, %s264
      %p268 = pneg %p262
      %p269 = scmp.eq.s32.totalorder %s33, 1
      %p270 = por %p268, %p269
      %p271 = scmp.ne.s32.totalorder %s263, %s266
      %p272 = scmp.eq.s32.totalorder %s33, 0
      %p273 = por %p271, %p272
      %p274 = scmp.ne.s32.totalorder %s263, %s266
      %p275 = scmp.eq.s32.totalorder %s38, 1
      %p276 = por %p274, %p275
      %p277 = scmp.ne.s32.totalorder %s266, %s267
      %p278 = scmp.eq.s32.totalorder %s38, 0
      %p279 = por %p277, %p278
      %p280 = scmp.ne.s32.totalorder %s266, %s267
      %p281 = scmp.eq.s32.totalorder %s39, 1
      %p282 = por %p280, %p281
      %p284 = scmp.ne.s32.totalorder %s267, %s283
      %p285 = scmp.eq.s32.totalorder %s39, 0
      %p286 = por %p284, %p285
      %s287 = ssub.s32 %s33, %s40
      %p288 = scmp.eq.s32.totalorder %s287, 0
      %s290 = sadd.s32 %s289, 1
      %s291 = scalar_select %p288, %s289, %s290
      %p294 = pneg %p288
      %p295 = scmp.eq.s32.totalorder %s33, 1
      %p296 = por %p294, %p295
      %p297 = scmp.ne.s32.totalorder %s289, %s292
      %p298 = scmp.eq.s32.totalorder %s33, 0
      %p299 = por %p297, %p298
      %p300 = scmp.ne.s32.totalorder %s289, %s292
      %p301 = scmp.eq.s32.totalorder %s38, 1
      %p302 = por %p300, %p301
      %p303 = scmp.ne.s32.totalorder %s292, %s293
      %p304 = scmp.eq.s32.totalorder %s38, 0
      %p305 = por %p303, %p304
      %p306 = scmp.ne.s32.totalorder %s292, %s293
      %p307 = scmp.eq.s32.totalorder %s39, 1
      %p308 = por %p306, %p307
      %p310 = scmp.ne.s32.totalorder %s293, %s309
      %p311 = scmp.eq.s32.totalorder %s39, 0
      %p312 = por %p310, %p311
      %p313 = scmp.le.s32.totalorder 1, %s33
      %p314 = scmp.lt.s32.totalorder %s33, 3
      %p315 = pnand %p313, %p314
      %p316 = pneg %p315
      // Predicated region
      $region9: #{tpu_custom_call.1} parent=5 // pred_check
        _
      $region10: #{tpu_custom_call.1} parent=5 // pred_check_branch
        %318 = sbr.rel (%p315) target = $region12
      $region11: #{tpu_custom_call.1} parent=5 // pred_region
        %s319 = ssub.s32 %s33, 1
        // Predicated region
        $region13: #{tpu_custom_call.1} parent=11 // pred_check
          %p320 = pneg %p106
        $region14: #{tpu_custom_call.1} parent=11 // pred_check_branch
          %322 = sbr.rel (%p320) target = $region16
        $region15: #{tpu_custom_call.1} parent=11 // pred_region
          %324 = vsyncadd [#allocation6], 0
          %s325 = sshll.u32 %s2, 4
          %s326 = int_to_ptr.hbm [resolvable:$true] %s325
          %s327 = sshll.u32 [#allocation7], 4
          %s328 = int_to_ptr.vmem [resolvable:$true] %s327
          %333 = dma.hbm_to_vmem [thread:$0]  %s326, 8192, %s328, [#allocation6], 128, 128, 8
        $region16: #{tpu_custom_call.1} parent=11 // pred_fallthru
          _
        // Predicated region
        $region17: #{tpu_custom_call.1} parent=11 // pred_check
          %p334 = pneg %p127
        $region18: #{tpu_custom_call.1} parent=11 // pred_check_branch
          %336 = sbr.rel (%p334) target = $region20
        $region19: #{tpu_custom_call.1} parent=11 // pred_region
          _
        $region20: #{tpu_custom_call.1} parent=11 // pred_fallthru
          _
        // Predicated region
        $region21: #{tpu_custom_call.1} parent=11 // pred_check
          %p337 = pneg %p148
        $region22: #{tpu_custom_call.1} parent=11 // pred_check_branch
          %339 = sbr.rel (%p337) target = $region24
        $region23: #{tpu_custom_call.1} parent=11 // pred_region
          %341 = vsyncadd [#allocation9], 0
          %s342 = sshll.u32 %s4, 4
          %s343 = int_to_ptr.hbm [resolvable:$true] %s342
          %s344 = sshll.u32 [#allocation8], 4
          %s345 = int_to_ptr.vmem [resolvable:$true] %s344
          %350 = dma.hbm_to_vmem [thread:$0]  %s343, 4096, %s345, [#allocation9], 128, 128, 8
        $region24: #{tpu_custom_call.1} parent=11 // pred_fallthru
          _
        // Predicated region
        $region25: #{tpu_custom_call.1} parent=11 // pred_check
          %p351 = pneg %p169
        $region26: #{tpu_custom_call.1} parent=11 // pred_check_branch
          %353 = sbr.rel (%p351) target = $region28
        $region27: #{tpu_custom_call.1} parent=11 // pred_region
          %355 = vsyncadd [#allocation9], 0
          %s357 = sshll.u32 %s5, 4
          %s358 = int_to_ptr.hbm [resolvable:$true] %s357
          %s359 = sshll.u32 [#allocation10], 4
          %s360 = int_to_ptr.vmem [resolvable:$true] %s359
          %362 = dma.hbm_to_vmem [thread:$0]  %s358, 32, %s360, [#allocation9]
        $region28: #{tpu_custom_call.1} parent=11 // pred_fallthru
          _
        // Predicated region
        $region29: #{tpu_custom_call.1} parent=11 // pred_check
          %p363 = pneg %p190
        $region30: #{tpu_custom_call.1} parent=11 // pred_check_branch
          %365 = sbr.rel (%p363) target = $region32
        $region31: #{tpu_custom_call.1} parent=11 // pred_region
          %367 = vsyncadd [#allocation12], 0
          %s368 = sshll.u32 %s6, 4
          %s369 = int_to_ptr.hbm [resolvable:$true] %s368
          %s370 = sshll.u32 [#allocation11], 4
          %s371 = int_to_ptr.vmem [resolvable:$true] %s370
          %376 = dma.hbm_to_vmem [thread:$0]  %s369, 4096, %s371, [#allocation12], 128, 128, 8
        $region32: #{tpu_custom_call.1} parent=11 // pred_fallthru
          _
        // Predicated region
        $region33: #{tpu_custom_call.1} parent=11 // pred_check
          %p377 = pneg %p211
        $region34: #{tpu_custom_call.1} parent=11 // pred_check_branch
          %379 = sbr.rel (%p377) target = $region36
        $region35: #{tpu_custom_call.1} parent=11 // pred_region
          %381 = vsyncadd [#allocation12], 0
          %s383 = sshll.u32 %s7, 4
          %s384 = int_to_ptr.hbm [resolvable:$true] %s383
          %s385 = sshll.u32 [#allocation13], 4
          %s386 = int_to_ptr.vmem [resolvable:$true] %s385
          %388 = dma.hbm_to_vmem [thread:$0]  %s384, 32, %s386, [#allocation12]
        $region36: #{tpu_custom_call.1} parent=11 // pred_fallthru
          _
        // Predicated region
        $region37: #{tpu_custom_call.1} parent=11 // pred_check
          %p389 = pneg %p232
        $region38: #{tpu_custom_call.1} parent=11 // pred_check_branch
          %391 = sbr.rel (%p389) target = $region40
        $region39: #{tpu_custom_call.1} parent=11 // pred_region
          %393 = vsyncadd [#allocation15], 0
          %s394 = sshll.u32 %s8, 4
          %s395 = int_to_ptr.hbm [resolvable:$true] %s394
          %s396 = sshll.u32 [#allocation14], 4
          %s397 = int_to_ptr.vmem [resolvable:$true] %s396
          %402 = dma.hbm_to_vmem [thread:$0]  %s395, 8192, %s397, [#allocation15], 256, 256, 16
        $region40: #{tpu_custom_call.1} parent=11 // pred_fallthru
          _
        // Predicated region
        $region41: #{tpu_custom_call.1} parent=11 // pred_check
          %p403 = pneg %p253
        $region42: #{tpu_custom_call.1} parent=11 // pred_check_branch
          %405 = sbr.rel (%p403) target = $region44
        $region43: #{tpu_custom_call.1} parent=11 // pred_region
          _
        $region44: #{tpu_custom_call.1} parent=11 // pred_fallthru
          _
      $region12: #{tpu_custom_call.1} parent=5 // pred_fallthru
        _
      %p406 = scmp.lt.s32.totalorder %s33, 2
      // Predicated region
      $region45: #{tpu_custom_call.1} parent=5 // pred_check
        %p407 = pneg %p406
      $region46: #{tpu_custom_call.1} parent=5 // pred_check_branch
        %409 = sbr.rel (%p407) target = $region48
      $region47: #{tpu_custom_call.1} parent=5 // pred_region
        // Predicated region
        $region49: #{tpu_custom_call.1} parent=47 // pred_check
          %p410 = pneg %p53
        $region50: #{tpu_custom_call.1} parent=47 // pred_check_branch
          %412 = sbr.rel (%p410) target = $region52
        $region51: #{tpu_custom_call.1} parent=47 // pred_region
          %s413 = sand.u32 %s43, 1
          %s414 = scalar_lea.sflag [#allocation3], %s413
          %s415 = sand.u32 %s43, 1
          %s416 = smul.addr %s415, 512
          %s417 = scalar_lea.vmem [#allocation2], %s416
          %s418 = smul.u32 16, %s33
          %420 = vsyncadd %s414, 0
          %s421 = smul.addr %s418, 4
          %s422 = smul.addr %s421, 8
          %s423 = scalar_lea.hbm %s0, %s422
          %s424 = sshll.u32 %s423, 4
          %s425 = int_to_ptr.hbm [resolvable:$true] %s424
          %s426 = sshll.u32 %s417, 4
          %s427 = int_to_ptr.vmem [resolvable:$true] %s426
          %432 = dma.hbm_to_vmem [thread:$0]  %s425, 8192, %s427, %s414, 512, 512, 32
        $region52: #{tpu_custom_call.1} parent=47 // pred_fallthru
          _
        // Predicated region
        $region53: #{tpu_custom_call.1} parent=47 // pred_check
          %p433 = pneg %p79
        $region54: #{tpu_custom_call.1} parent=47 // pred_check_branch
          %435 = sbr.rel (%p433) target = $region56
        $region55: #{tpu_custom_call.1} parent=47 // pred_region
          %s436 = sand.u32 %s33, 1
          %s437 = scalar_lea.sflag [#allocation6], %s436
          %s438 = sand.u32 %s69, 1
          %s439 = smul.addr %s438, 512
          %s440 = scalar_lea.vmem [#allocation5], %s439
          %s441 = smul.u32 16, %s33
          %443 = vsyncadd %s437, 0
          %s444 = smul.addr %s441, 4
          %s445 = smul.addr %s444, 8
          %s446 = scalar_lea.hbm %s1, %s445
          %s447 = sshll.u32 %s446, 4
          %s448 = int_to_ptr.hbm [resolvable:$true] %s447
          %s449 = sshll.u32 %s440, 4
          %s450 = int_to_ptr.vmem [resolvable:$true] %s449
          %455 = dma.hbm_to_vmem [thread:$0]  %s448, 8192, %s450, %s437, 512, 512, 32
        $region56: #{tpu_custom_call.1} parent=47 // pred_fallthru
          _
      $region48: #{tpu_custom_call.1} parent=5 // pred_fallthru
        _
      %p456 = scmp.le.s32.totalorder 1, %s33
      %p457 = scmp.lt.s32.totalorder %s33, 3
      %p458 = pnand %p456, %p457
      %p459 = pneg %p458
      // Predicated region
      $region57: #{tpu_custom_call.1} parent=5 // pred_check
        _
      $region58: #{tpu_custom_call.1} parent=5 // pred_check_branch
        %461 = sbr.rel (%p458) target = $region60
      $region59: #{tpu_custom_call.1} parent=5 // pred_region
        %s462 = ssub.s32 %s33, 1
        %s463 = sand.u32 %s46, 1
        %s464 = scalar_lea.sflag [#allocation3], %s463
        %s465 = sand.u32 %s46, 1
        %s466 = smul.addr %s465, 512
        %s467 = scalar_lea.vmem [#allocation2], %s466
        // Predicated region
        $region61: #{tpu_custom_call.1} parent=59 // pred_check
          %p468 = pneg %p59
        $region62: #{tpu_custom_call.1} parent=59 // pred_check_branch
          %470 = sbr.rel (%p468) target = $region64
        $region63: #{tpu_custom_call.1} parent=59 // pred_region
          %472 = dma.done %s464, 8192
        $region64: #{tpu_custom_call.1} parent=59 // pred_fallthru
          _
        %s473 = sand.u32 %s38, 1
        %s474 = scalar_lea.sflag [#allocation6], %s473
        %s475 = sand.u32 %s72, 1
        %s476 = smul.addr %s475, 512
        %s477 = scalar_lea.vmem [#allocation5], %s476
        // Predicated region
        $region65: #{tpu_custom_call.1} parent=59 // pred_check
          %p478 = pneg %p85
        $region66: #{tpu_custom_call.1} parent=59 // pred_check_branch
          %480 = sbr.rel (%p478) target = $region68
        $region67: #{tpu_custom_call.1} parent=59 // pred_region
          %482 = dma.done %s474, 8192
        $region68: #{tpu_custom_call.1} parent=59 // pred_fallthru
          _
        // Predicated region
        $region69: #{tpu_custom_call.1} parent=59 // pred_check
          %p483 = pneg %p106
        $region70: #{tpu_custom_call.1} parent=59 // pred_check_branch
          %485 = sbr.rel (%p483) target = $region72
        $region71: #{tpu_custom_call.1} parent=59 // pred_region
          %487 = dma.done [#allocation6], 8192
        $region72: #{tpu_custom_call.1} parent=59 // pred_fallthru
          _
        // Predicated region
        $region73: #{tpu_custom_call.1} parent=59 // pred_check
          %p488 = pneg %p148
        $region74: #{tpu_custom_call.1} parent=59 // pred_check_branch
          %490 = sbr.rel (%p488) target = $region76
        $region75: #{tpu_custom_call.1} parent=59 // pred_region
          %492 = dma.done [#allocation9], 4096
        $region76: #{tpu_custom_call.1} parent=59 // pred_fallthru
          _
        // Predicated region
        $region77: #{tpu_custom_call.1} parent=59 // pred_check
          %p493 = pneg %p169
        $region78: #{tpu_custom_call.1} parent=59 // pred_check_branch
          %495 = sbr.rel (%p493) target = $region80
        $region79: #{tpu_custom_call.1} parent=59 // pred_region
          %497 = dma.done [#allocation9], 32
        $region80: #{tpu_custom_call.1} parent=59 // pred_fallthru
          _
        // Predicated region
        $region81: #{tpu_custom_call.1} parent=59 // pred_check
          %p498 = pneg %p190
        $region82: #{tpu_custom_call.1} parent=59 // pred_check_branch
          %500 = sbr.rel (%p498) target = $region84
        $region83: #{tpu_custom_call.1} parent=59 // pred_region
          %502 = dma.done [#allocation12], 4096
        $region84: #{tpu_custom_call.1} parent=59 // pred_fallthru
          _
        // Predicated region
        $region85: #{tpu_custom_call.1} parent=59 // pred_check
          %p503 = pneg %p211
        $region86: #{tpu_custom_call.1} parent=59 // pred_check_branch
          %505 = sbr.rel (%p503) target = $region88
        $region87: #{tpu_custom_call.1} parent=59 // pred_region
          %507 = dma.done [#allocation12], 32
        $region88: #{tpu_custom_call.1} parent=59 // pred_fallthru
          _
        // Predicated region
        $region89: #{tpu_custom_call.1} parent=59 // pred_check
          %p508 = pneg %p232
        $region90: #{tpu_custom_call.1} parent=59 // pred_check_branch
          %510 = sbr.rel (%p508) target = $region92
        $region91: #{tpu_custom_call.1} parent=59 // pred_region
          %512 = dma.done [#allocation15], 8192
        $region92: #{tpu_custom_call.1} parent=59 // pred_fallthru
          _
        %s513 = sand.u32 %s46, 1
        %s514 = scalar_lea.sflag [#allocation3], %s513
        %s515 = sand.u32 %s46, 1
        %s516 = smul.addr %s515, 512
        %s517 = scalar_lea.vmem [#allocation2], %s516
        %p518 = pneg %p59
        %p519 = pneg %p56
        %s520 = sand.u32 %s38, 1
        %s521 = scalar_lea.sflag [#allocation6], %s520
        %s522 = sand.u32 %s72, 1
        %s523 = smul.addr %s522, 512
        %s524 = scalar_lea.vmem [#allocation5], %s523
        %p525 = pneg %p85
        %p526 = pneg %p82
        %p527 = pneg %p106
        %p528 = pneg %p103
        %p529 = pneg %p127
        %p530 = pneg %p124
        %p531 = pneg %p148
        %p532 = pneg %p145
        %p533 = pneg %p169
        %p534 = pneg %p166
        %p535 = pneg %p190
        %p536 = pneg %p187
        %p537 = pneg %p211
        %p538 = pneg %p208
        %p539 = pneg %p232
        %p540 = pneg %p229
        %p541 = pneg %p253
        %p542 = pneg %p250
        %p543 = pneg %p279
        %p544 = pneg %p276
        %s545 = sand.u32 %s266, 1
        %s546 = scalar_lea.sflag [#allocation4], %s545
        %s547 = sand.u32 %s266, 1
        %s548 = smul.addr %s547, 512
        %s549 = scalar_lea.vmem [#allocation16], %s548
        %p550 = pneg %p305
        %p551 = pneg %p302
        %s552 = sand.u32 %s292, 1
        %s553 = scalar_lea.sflag [#allocation18], %s552
        %s554 = sand.u32 %s292, 1
        %s555 = smul.addr %s554, 256
        %s556 = scalar_lea.vmem [#allocation17], %s555
        %s557 = smul.u32 16, %s38
        %s558 = smul.u32 16, %s38
        %s559 = smul.u32 16, %s38
        %s560 = smul.u32 16, %s38
        %v561 = vld [vmem:[%s467] sm:$0xff]
        %v562 = vld [vmem:[%s467 + $0x8] sm:$0xff]
        %v563 = vld [vmem:[%s467 + $0x10] sm:$0xff]
        %v564 = vld [vmem:[%s467 + $0x18] sm:$0xff]
        %v565 = vld [vmem:[%s467 + $0x20] sm:$0xff]
        %v566 = vld [vmem:[%s467 + $0x28] sm:$0xff]
        %v567 = vld [vmem:[%s467 + $0x30] sm:$0xff]
        %v568 = vld [vmem:[%s467 + $0x38] sm:$0xff]
        %v569 = vld [vmem:[%s467 + $0x40] sm:$0xff]
        %v570 = vld [vmem:[%s467 + $0x48] sm:$0xff]
        %v571 = vld [vmem:[%s467 + $0x50] sm:$0xff]
        %v572 = vld [vmem:[%s467 + $0x58] sm:$0xff]
        %v573 = vld [vmem:[%s467 + $0x60] sm:$0xff]
        %v574 = vld [vmem:[%s467 + $0x68] sm:$0xff]
        %v575 = vld [vmem:[%s467 + $0x70] sm:$0xff]
        %v576 = vld [vmem:[%s467 + $0x78] sm:$0xff]
        %v577 = vld [vmem:[%s467 + $0x80] sm:$0xff]
        %v578 = vld [vmem:[%s467 + $0x88] sm:$0xff]
        %v579 = vld [vmem:[%s467 + $0x90] sm:$0xff]
        %v580 = vld [vmem:[%s467 + $0x98] sm:$0xff]
        %v581 = vld [vmem:[%s467 + $0xa0] sm:$0xff]
        %v582 = vld [vmem:[%s467 + $0xa8] sm:$0xff]
        %v583 = vld [vmem:[%s467 + $0xb0] sm:$0xff]
        %v584 = vld [vmem:[%s467 + $0xb8] sm:$0xff]
        %v585 = vld [vmem:[%s467 + $0xc0] sm:$0xff]
        %v586 = vld [vmem:[%s467 + $0xc8] sm:$0xff]
        %v587 = vld [vmem:[%s467 + $0xd0] sm:$0xff]
        %v588 = vld [vmem:[%s467 + $0xd8] sm:$0xff]
        %v589 = vld [vmem:[%s467 + $0xe0] sm:$0xff]
        %v590 = vld [vmem:[%s467 + $0xe8] sm:$0xff]
        %v591 = vld [vmem:[%s467 + $0xf0] sm:$0xff]
        %v592 = vld [vmem:[%s467 + $0xf8] sm:$0xff]
        %v593 = vld [vmem:[%s467 + $0x100] sm:$0xff]
        %v594 = vld [vmem:[%s467 + $0x108] sm:$0xff]
        %v595 = vld [vmem:[%s467 + $0x110] sm:$0xff]
        %v596 = vld [vmem:[%s467 + $0x118] sm:$0xff]
        %v597 = vld [vmem:[%s467 + $0x120] sm:$0xff]
        %v598 = vld [vmem:[%s467 + $0x128] sm:$0xff]
        %v599 = vld [vmem:[%s467 + $0x130] sm:$0xff]
        %v600 = vld [vmem:[%s467 + $0x138] sm:$0xff]
        %v601 = vld [vmem:[%s467 + $0x140] sm:$0xff]
        %v602 = vld [vmem:[%s467 + $0x148] sm:$0xff]
        %v603 = vld [vmem:[%s467 + $0x150] sm:$0xff]
        %v604 = vld [vmem:[%s467 + $0x158] sm:$0xff]
        %v605 = vld [vmem:[%s467 + $0x160] sm:$0xff]
        %v606 = vld [vmem:[%s467 + $0x168] sm:$0xff]
        %v607 = vld [vmem:[%s467 + $0x170] sm:$0xff]
        %v608 = vld [vmem:[%s467 + $0x178] sm:$0xff]
        %v609 = vld [vmem:[%s467 + $0x180] sm:$0xff]
        %v610 = vld [vmem:[%s467 + $0x188] sm:$0xff]
        %v611 = vld [vmem:[%s467 + $0x190] sm:$0xff]
        %v612 = vld [vmem:[%s467 + $0x198] sm:$0xff]
        %v613 = vld [vmem:[%s467 + $0x1a0] sm:$0xff]
        %v614 = vld [vmem:[%s467 + $0x1a8] sm:$0xff]
        %v615 = vld [vmem:[%s467 + $0x1b0] sm:$0xff]
        %v616 = vld [vmem:[%s467 + $0x1b8] sm:$0xff]
        %v617 = vld [vmem:[%s467 + $0x1c0] sm:$0xff]
        %v618 = vld [vmem:[%s467 + $0x1c8] sm:$0xff]
        %v619 = vld [vmem:[%s467 + $0x1d0] sm:$0xff]
        %v620 = vld [vmem:[%s467 + $0x1d8] sm:$0xff]
        %v621 = vld [vmem:[%s467 + $0x1e0] sm:$0xff]
        %v622 = vld [vmem:[%s467 + $0x1e8] sm:$0xff]
        %v623 = vld [vmem:[%s467 + $0x1f0] sm:$0xff]
        %v624 = vld [vmem:[%s467 + $0x1f8] sm:$0xff]
        %v625 = vld [vmem:[%s477] sm:$0xff]
        %v626 = vld [vmem:[%s477 + $0x8] sm:$0xff]
        %v627 = vld [vmem:[%s477 + $0x10] sm:$0xff]
        %v628 = vld [vmem:[%s477 + $0x18] sm:$0xff]
        %v629 = vld [vmem:[%s477 + $0x20] sm:$0xff]
        %v630 = vld [vmem:[%s477 + $0x28] sm:$0xff]
        %v631 = vld [vmem:[%s477 + $0x30] sm:$0xff]
        %v632 = vld [vmem:[%s477 + $0x38] sm:$0xff]
        %v633 = vld [vmem:[%s477 + $0x40] sm:$0xff]
        %v634 = vld [vmem:[%s477 + $0x48] sm:$0xff]
        %v635 = vld [vmem:[%s477 + $0x50] sm:$0xff]
        %v636 = vld [vmem:[%s477 + $0x58] sm:$0xff]
        %v637 = vld [vmem:[%s477 + $0x60] sm:$0xff]
        %v638 = vld [vmem:[%s477 + $0x68] sm:$0xff]
        %v639 = vld [vmem:[%s477 + $0x70] sm:$0xff]
        %v640 = vld [vmem:[%s477 + $0x78] sm:$0xff]
        %v641 = vld [vmem:[%s477 + $0x80] sm:$0xff]
        %v642 = vld [vmem:[%s477 + $0x88] sm:$0xff]
        %v643 = vld [vmem:[%s477 + $0x90] sm:$0xff]
        %v644 = vld [vmem:[%s477 + $0x98] sm:$0xff]
        %v645 = vld [vmem:[%s477 + $0xa0] sm:$0xff]
        %v646 = vld [vmem:[%s477 + $0xa8] sm:$0xff]
        %v647 = vld [vmem:[%s477 + $0xb0] sm:$0xff]
        %v648 = vld [vmem:[%s477 + $0xb8] sm:$0xff]
        %v649 = vld [vmem:[%s477 + $0xc0] sm:$0xff]
        %v650 = vld [vmem:[%s477 + $0xc8] sm:$0xff]
        %v651 = vld [vmem:[%s477 + $0xd0] sm:$0xff]
        %v652 = vld [vmem:[%s477 + $0xd8] sm:$0xff]
        %v653 = vld [vmem:[%s477 + $0xe0] sm:$0xff]
        %v654 = vld [vmem:[%s477 + $0xe8] sm:$0xff]
        %v655 = vld [vmem:[%s477 + $0xf0] sm:$0xff]
        %v656 = vld [vmem:[%s477 + $0xf8] sm:$0xff]
        %v657 = vld [vmem:[%s477 + $0x100] sm:$0xff]
        %v658 = vld [vmem:[%s477 + $0x108] sm:$0xff]
        %v659 = vld [vmem:[%s477 + $0x110] sm:$0xff]
        %v660 = vld [vmem:[%s477 + $0x118] sm:$0xff]
        %v661 = vld [vmem:[%s477 + $0x120] sm:$0xff]
        %v662 = vld [vmem:[%s477 + $0x128] sm:$0xff]
        %v663 = vld [vmem:[%s477 + $0x130] sm:$0xff]
        %v664 = vld [vmem:[%s477 + $0x138] sm:$0xff]
        %v665 = vld [vmem:[%s477 + $0x140] sm:$0xff]
        %v666 = vld [vmem:[%s477 + $0x148] sm:$0xff]
        %v667 = vld [vmem:[%s477 + $0x150] sm:$0xff]
        %v668 = vld [vmem:[%s477 + $0x158] sm:$0xff]
        %v669 = vld [vmem:[%s477 + $0x160] sm:$0xff]
        %v670 = vld [vmem:[%s477 + $0x168] sm:$0xff]
        %v671 = vld [vmem:[%s477 + $0x170] sm:$0xff]
        %v672 = vld [vmem:[%s477 + $0x178] sm:$0xff]
        %v673 = vld [vmem:[%s477 + $0x180] sm:$0xff]
        %v674 = vld [vmem:[%s477 + $0x188] sm:$0xff]
        %v675 = vld [vmem:[%s477 + $0x190] sm:$0xff]
        %v676 = vld [vmem:[%s477 + $0x198] sm:$0xff]
        %v677 = vld [vmem:[%s477 + $0x1a0] sm:$0xff]
        %v678 = vld [vmem:[%s477 + $0x1a8] sm:$0xff]
        %v679 = vld [vmem:[%s477 + $0x1b0] sm:$0xff]
        %v680 = vld [vmem:[%s477 + $0x1b8] sm:$0xff]
        %v681 = vld [vmem:[%s477 + $0x1c0] sm:$0xff]
        %v682 = vld [vmem:[%s477 + $0x1c8] sm:$0xff]
        %v683 = vld [vmem:[%s477 + $0x1d0] sm:$0xff]
        %v684 = vld [vmem:[%s477 + $0x1d8] sm:$0xff]
        %v685 = vld [vmem:[%s477 + $0x1e0] sm:$0xff]
        %v686 = vld [vmem:[%s477 + $0x1e8] sm:$0xff]
        %v687 = vld [vmem:[%s477 + $0x1f0] sm:$0xff]
        %v688 = vld [vmem:[%s477 + $0x1f8] sm:$0xff]
        %v689 = vmul.f32 %v625, 0.1
        %v690 = vmul.f32 %v626, 0.1
        %v691 = vmul.f32 %v627, 0.1
        %v692 = vmul.f32 %v628, 0.1
        %v693 = vmul.f32 %v629, 0.1
        %v694 = vmul.f32 %v630, 0.1
        %v695 = vmul.f32 %v631, 0.1
        %v696 = vmul.f32 %v632, 0.1
        %v697 = vmul.f32 %v633, 0.1
        %v698 = vmul.f32 %v634, 0.1
        %v699 = vmul.f32 %v635, 0.1
        %v700 = vmul.f32 %v636, 0.1
        %v701 = vmul.f32 %v637, 0.1
        %v702 = vmul.f32 %v638, 0.1
        %v703 = vmul.f32 %v639, 0.1
        %v704 = vmul.f32 %v640, 0.1
        %v705 = vmul.f32 %v641, 0.1
        %v706 = vmul.f32 %v642, 0.1
        %v707 = vmul.f32 %v643, 0.1
        %v708 = vmul.f32 %v644, 0.1
        %v709 = vmul.f32 %v645, 0.1
        %v710 = vmul.f32 %v646, 0.1
        %v711 = vmul.f32 %v647, 0.1
        %v712 = vmul.f32 %v648, 0.1
        %v713 = vmul.f32 %v649, 0.1
        %v714 = vmul.f32 %v650, 0.1
        %v715 = vmul.f32 %v651, 0.1
        %v716 = vmul.f32 %v652, 0.1
        %v717 = vmul.f32 %v653, 0.1
        %v718 = vmul.f32 %v654, 0.1
        %v719 = vmul.f32 %v655, 0.1
        %v720 = vmul.f32 %v656, 0.1
        %v721 = vmul.f32 %v657, 0.1
        %v722 = vmul.f32 %v658, 0.1
        %v723 = vmul.f32 %v659, 0.1
        %v724 = vmul.f32 %v660, 0.1
        %v725 = vmul.f32 %v661, 0.1
        %v726 = vmul.f32 %v662, 0.1
        %v727 = vmul.f32 %v663, 0.1
        %v728 = vmul.f32 %v664, 0.1
        %v729 = vmul.f32 %v665, 0.1
        %v730 = vmul.f32 %v666, 0.1
        %v731 = vmul.f32 %v667, 0.1
        %v732 = vmul.f32 %v668, 0.1
        %v733 = vmul.f32 %v669, 0.1
        %v734 = vmul.f32 %v670, 0.1
        %v735 = vmul.f32 %v671, 0.1
        %v736 = vmul.f32 %v672, 0.1
        %v737 = vmul.f32 %v673, 0.1
        %v738 = vmul.f32 %v674, 0.1
        %v739 = vmul.f32 %v675, 0.1
        %v740 = vmul.f32 %v676, 0.1
        %v741 = vmul.f32 %v677, 0.1
        %v742 = vmul.f32 %v678, 0.1
        %v743 = vmul.f32 %v679, 0.1
        %v744 = vmul.f32 %v680, 0.1
        %v745 = vmul.f32 %v681, 0.1
        %v746 = vmul.f32 %v682, 0.1
        %v747 = vmul.f32 %v683, 0.1
        %v748 = vmul.f32 %v684, 0.1
        %v749 = vmul.f32 %v685, 0.1
        %v750 = vmul.f32 %v686, 0.1
        %v751 = vmul.f32 %v687, 0.1
        %v752 = vmul.f32 %v688, 0.1
        %v753 = vadd.f32 %v561, %v689
        %v754 = vadd.f32 %v562, %v690
        %v755 = vadd.f32 %v563, %v691
        %v756 = vadd.f32 %v564, %v692
        %v757 = vadd.f32 %v565, %v693
        %v758 = vadd.f32 %v566, %v694
        %v759 = vadd.f32 %v567, %v695
        %v760 = vadd.f32 %v568, %v696
        %v761 = vadd.f32 %v569, %v697
        %v762 = vadd.f32 %v570, %v698
        %v763 = vadd.f32 %v571, %v699
        %v764 = vadd.f32 %v572, %v700
        %v765 = vadd.f32 %v573, %v701
        %v766 = vadd.f32 %v574, %v702
        %v767 = vadd.f32 %v575, %v703
        %v768 = vadd.f32 %v576, %v704
        %v769 = vadd.f32 %v577, %v705
        %v770 = vadd.f32 %v578, %v706
        %v771 = vadd.f32 %v579, %v707
        %v772 = vadd.f32 %v580, %v708
        %v773 = vadd.f32 %v581, %v709
        %v774 = vadd.f32 %v582, %v710
        %v775 = vadd.f32 %v583, %v711
        %v776 = vadd.f32 %v584, %v712
        %v777 = vadd.f32 %v585, %v713
        %v778 = vadd.f32 %v586, %v714
        %v779 = vadd.f32 %v587, %v715
        %v780 = vadd.f32 %v588, %v716
        %v781 = vadd.f32 %v589, %v717
        %v782 = vadd.f32 %v590, %v718
        %v783 = vadd.f32 %v591, %v719
        %v784 = vadd.f32 %v592, %v720
        %v785 = vadd.f32 %v593, %v721
        %v786 = vadd.f32 %v594, %v722
        %v787 = vadd.f32 %v595, %v723
        %v788 = vadd.f32 %v596, %v724
        %v789 = vadd.f32 %v597, %v725
        %v790 = vadd.f32 %v598, %v726
        %v791 = vadd.f32 %v599, %v727
        %v792 = vadd.f32 %v600, %v728
        %v793 = vadd.f32 %v601, %v729
        %v794 = vadd.f32 %v602, %v730
        %v795 = vadd.f32 %v603, %v731
        %v796 = vadd.f32 %v604, %v732
        %v797 = vadd.f32 %v605, %v733
        %v798 = vadd.f32 %v606, %v734
        %v799 = vadd.f32 %v607, %v735
        %v800 = vadd.f32 %v608, %v736
        %v801 = vadd.f32 %v609, %v737
        %v802 = vadd.f32 %v610, %v738
        %v803 = vadd.f32 %v611, %v739
        %v804 = vadd.f32 %v612, %v740
        %v805 = vadd.f32 %v613, %v741
        %v806 = vadd.f32 %v614, %v742
        %v807 = vadd.f32 %v615, %v743
        %v808 = vadd.f32 %v616, %v744
        %v809 = vadd.f32 %v617, %v745
        %v810 = vadd.f32 %v618, %v746
        %v811 = vadd.f32 %v619, %v747
        %v812 = vadd.f32 %v620, %v748
        %v813 = vadd.f32 %v621, %v749
        %v814 = vadd.f32 %v622, %v750
        %v815 = vadd.f32 %v623, %v751
        %v816 = vadd.f32 %v624, %v752
        %v817 = vpack.c.bf16 %v757, %v753
        %v818 = vpack.c.bf16 %v758, %v754
        %v819 = vpack.c.bf16 %v759, %v755
        %v820 = vpack.c.bf16 %v760, %v756
        %v821 = vpack.c.bf16 %v765, %v761
        %v822 = vpack.c.bf16 %v766, %v762
        %v823 = vpack.c.bf16 %v767, %v763
        %v824 = vpack.c.bf16 %v768, %v764
        %v825 = vpack.c.bf16 %v773, %v769
        %v826 = vpack.c.bf16 %v774, %v770
        %v827 = vpack.c.bf16 %v775, %v771
        %v828 = vpack.c.bf16 %v776, %v772
        %v829 = vpack.c.bf16 %v781, %v777
        %v830 = vpack.c.bf16 %v782, %v778
        %v831 = vpack.c.bf16 %v783, %v779
        %v832 = vpack.c.bf16 %v784, %v780
        %v833 = vpack.c.bf16 %v789, %v785
        %v834 = vpack.c.bf16 %v790, %v786
        %v835 = vpack.c.bf16 %v791, %v787
        %v836 = vpack.c.bf16 %v792, %v788
        %v837 = vpack.c.bf16 %v797, %v793
        %v838 = vpack.c.bf16 %v798, %v794
        %v839 = vpack.c.bf16 %v799, %v795
        %v840 = vpack.c.bf16 %v800, %v796
        %v841 = vpack.c.bf16 %v805, %v801
        %v842 = vpack.c.bf16 %v806, %v802
        %v843 = vpack.c.bf16 %v807, %v803
        %v844 = vpack.c.bf16 %v808, %v804
        %v845 = vpack.c.bf16 %v813, %v809
        %v846 = vpack.c.bf16 %v814, %v810
        %v847 = vpack.c.bf16 %v815, %v811
        %v848 = vpack.c.bf16 %v816, %v812
        %v849 = vld [vmem:[#allocation7] sm:$0xff]
        %v850 = vld [vmem:[#allocation7 + $0x8] sm:$0xff]
        %v851 = vld [vmem:[#allocation7 + $0x10] sm:$0xff]
        %v852 = vld [vmem:[#allocation7 + $0x18] sm:$0xff]
        %v853 = vld [vmem:[#allocation7 + $0x20] sm:$0xff]
        %v854 = vld [vmem:[#allocation7 + $0x28] sm:$0xff]
        %v855 = vld [vmem:[#allocation7 + $0x30] sm:$0xff]
        %v856 = vld [vmem:[#allocation7 + $0x38] sm:$0xff]
        %v857 = vld [vmem:[#allocation7 + $0x40] sm:$0xff]
        %v858 = vld [vmem:[#allocation7 + $0x48] sm:$0xff]
        %v859 = vld [vmem:[#allocation7 + $0x50] sm:$0xff]
        %v860 = vld [vmem:[#allocation7 + $0x58] sm:$0xff]
        %v861 = vld [vmem:[#allocation7 + $0x60] sm:$0xff]
        %v862 = vld [vmem:[#allocation7 + $0x68] sm:$0xff]
        %v863 = vld [vmem:[#allocation7 + $0x70] sm:$0xff]
        %v864 = vld [vmem:[#allocation7 + $0x78] sm:$0xff]
        %v865 = vld [vmem:[#allocation7 + $0x80] sm:$0xff]
        %v866 = vld [vmem:[#allocation7 + $0x88] sm:$0xff]
        %v867 = vld [vmem:[#allocation7 + $0x90] sm:$0xff]
        %v868 = vld [vmem:[#allocation7 + $0x98] sm:$0xff]
        %v869 = vld [vmem:[#allocation7 + $0xa0] sm:$0xff]
        %v870 = vld [vmem:[#allocation7 + $0xa8] sm:$0xff]
        %v871 = vld [vmem:[#allocation7 + $0xb0] sm:$0xff]
        %v872 = vld [vmem:[#allocation7 + $0xb8] sm:$0xff]
        %v873 = vld [vmem:[#allocation7 + $0xc0] sm:$0xff]
        %v874 = vld [vmem:[#allocation7 + $0xc8] sm:$0xff]
        %v875 = vld [vmem:[#allocation7 + $0xd0] sm:$0xff]
        %v876 = vld [vmem:[#allocation7 + $0xd8] sm:$0xff]
        %v877 = vld [vmem:[#allocation7 + $0xe0] sm:$0xff]
        %v878 = vld [vmem:[#allocation7 + $0xe8] sm:$0xff]
        %v879 = vld [vmem:[#allocation7 + $0xf0] sm:$0xff]
        %v880 = vld [vmem:[#allocation7 + $0xf8] sm:$0xff]
        %v881 = vld [vmem:[#allocation7 + $0x100] sm:$0xff]
        %v882 = vld [vmem:[#allocation7 + $0x108] sm:$0xff]
        %v883 = vld [vmem:[#allocation7 + $0x110] sm:$0xff]
        %v884 = vld [vmem:[#allocation7 + $0x118] sm:$0xff]
        %v885 = vld [vmem:[#allocation7 + $0x120] sm:$0xff]
        %v886 = vld [vmem:[#allocation7 + $0x128] sm:$0xff]
        %v887 = vld [vmem:[#allocation7 + $0x130] sm:$0xff]
        %v888 = vld [vmem:[#allocation7 + $0x138] sm:$0xff]
        %v889 = vld [vmem:[#allocation7 + $0x140] sm:$0xff]
        %v890 = vld [vmem:[#allocation7 + $0x148] sm:$0xff]
        %v891 = vld [vmem:[#allocation7 + $0x150] sm:$0xff]
        %v892 = vld [vmem:[#allocation7 + $0x158] sm:$0xff]
        %v893 = vld [vmem:[#allocation7 + $0x160] sm:$0xff]
        %v894 = vld [vmem:[#allocation7 + $0x168] sm:$0xff]
        %v895 = vld [vmem:[#allocation7 + $0x170] sm:$0xff]
        %v896 = vld [vmem:[#allocation7 + $0x178] sm:$0xff]
        %v897 = vld [vmem:[#allocation7 + $0x180] sm:$0xff]
        %v898 = vld [vmem:[#allocation7 + $0x188] sm:$0xff]
        %v899 = vld [vmem:[#allocation7 + $0x190] sm:$0xff]
        %v900 = vld [vmem:[#allocation7 + $0x198] sm:$0xff]
        %v901 = vld [vmem:[#allocation7 + $0x1a0] sm:$0xff]
        %v902 = vld [vmem:[#allocation7 + $0x1a8] sm:$0xff]
        %v903 = vld [vmem:[#allocation7 + $0x1b0] sm:$0xff]
        %v904 = vld [vmem:[#allocation7 + $0x1b8] sm:$0xff]
        %v905 = vld [vmem:[#allocation7 + $0x1c0] sm:$0xff]
        %v906 = vld [vmem:[#allocation7 + $0x1c8] sm:$0xff]
        %v907 = vld [vmem:[#allocation7 + $0x1d0] sm:$0xff]
        %v908 = vld [vmem:[#allocation7 + $0x1d8] sm:$0xff]
        %v909 = vld [vmem:[#allocation7 + $0x1e0] sm:$0xff]
        %v910 = vld [vmem:[#allocation7 + $0x1e8] sm:$0xff]
        %v911 = vld [vmem:[#allocation7 + $0x1f0] sm:$0xff]
        %v912 = vld [vmem:[#allocation7 + $0x1f8] sm:$0xff]
        %v913 = vld [vmem:[%s3] sm:$0x3]
        %v915 = vperm.slane %v913, 0
        %v916 = vperm.slane %v913, 1
        %v983 = vunpack.c.l.b16 %v849
        %v984 = vunpack.c.h.b16 %v849
        %v985 = vunpack.c.l.b16 %v850
        %v986 = vunpack.c.h.b16 %v850
        %v987 = vunpack.c.l.b16 %v851
        %v988 = vunpack.c.h.b16 %v851
        %v989 = vunpack.c.l.b16 %v852
        %v990 = vunpack.c.h.b16 %v852
        %v991 = vunpack.c.l.b16 %v853
        %v992 = vunpack.c.h.b16 %v853
        %v993 = vunpack.c.l.b16 %v854
        %v994 = vunpack.c.h.b16 %v854
        %v995 = vunpack.c.l.b16 %v855
        %v996 = vunpack.c.h.b16 %v855
        %v997 = vunpack.c.l.b16 %v856
        %v998 = vunpack.c.h.b16 %v856
        %v999 = vunpack.c.l.b16 %v857
        %v1000 = vunpack.c.h.b16 %v857
        %v1001 = vunpack.c.l.b16 %v858
        %v1002 = vunpack.c.h.b16 %v858
        %v1003 = vunpack.c.l.b16 %v859
        %v1004 = vunpack.c.h.b16 %v859
        %v1005 = vunpack.c.l.b16 %v860
        %v1006 = vunpack.c.h.b16 %v860
        %v1007 = vunpack.c.l.b16 %v861
        %v1008 = vunpack.c.h.b16 %v861
        %v1009 = vunpack.c.l.b16 %v862
        %v1010 = vunpack.c.h.b16 %v862
        %v1011 = vunpack.c.l.b16 %v863
        %v1012 = vunpack.c.h.b16 %v863
        %v1013 = vunpack.c.l.b16 %v864
        %v1014 = vunpack.c.h.b16 %v864
        %v1015 = vunpack.c.l.b16 %v865
        %v1016 = vunpack.c.h.b16 %v865
        %v1017 = vunpack.c.l.b16 %v866
        %v1018 = vunpack.c.h.b16 %v866
        %v1019 = vunpack.c.l.b16 %v867
        %v1020 = vunpack.c.h.b16 %v867
        %v1021 = vunpack.c.l.b16 %v868
        %v1022 = vunpack.c.h.b16 %v868
        %v1023 = vunpack.c.l.b16 %v869
        %v1024 = vunpack.c.h.b16 %v869
        %v1025 = vunpack.c.l.b16 %v870
        %v1026 = vunpack.c.h.b16 %v870
        %v1027 = vunpack.c.l.b16 %v871
        %v1028 = vunpack.c.h.b16 %v871
        %v1029 = vunpack.c.l.b16 %v872
        %v1030 = vunpack.c.h.b16 %v872
        %v1031 = vunpack.c.l.b16 %v873
        %v1032 = vunpack.c.h.b16 %v873
        %v1033 = vunpack.c.l.b16 %v874
        %v1034 = vunpack.c.h.b16 %v874
        %v1035 = vunpack.c.l.b16 %v875
        %v1036 = vunpack.c.h.b16 %v875
        %v1037 = vunpack.c.l.b16 %v876
        %v1038 = vunpack.c.h.b16 %v876
        %v1039 = vunpack.c.l.b16 %v877
        %v1040 = vunpack.c.h.b16 %v877
        %v1041 = vunpack.c.l.b16 %v878
        %v1042 = vunpack.c.h.b16 %v878
        %v1043 = vunpack.c.l.b16 %v879
        %v1044 = vunpack.c.h.b16 %v879
        %v1045 = vunpack.c.l.b16 %v880
        %v1046 = vunpack.c.h.b16 %v880
        %v1047 = vunpack.c.l.b16 %v881
        %v1048 = vunpack.c.h.b16 %v881
        %v1049 = vunpack.c.l.b16 %v882
        %v1050 = vunpack.c.h.b16 %v882
        %v1051 = vunpack.c.l.b16 %v883
        %v1052 = vunpack.c.h.b16 %v883
        %v1053 = vunpack.c.l.b16 %v884
        %v1054 = vunpack.c.h.b16 %v884
        %v1055 = vunpack.c.l.b16 %v885
        %v1056 = vunpack.c.h.b16 %v885
        %v1057 = vunpack.c.l.b16 %v886
        %v1058 = vunpack.c.h.b16 %v886
        %v1059 = vunpack.c.l.b16 %v887
        %v1060 = vunpack.c.h.b16 %v887
        %v1061 = vunpack.c.l.b16 %v888
        %v1062 = vunpack.c.h.b16 %v888
        %v1063 = vunpack.c.l.b16 %v889
        %v1064 = vunpack.c.h.b16 %v889
        %v1065 = vunpack.c.l.b16 %v890
        %v1066 = vunpack.c.h.b16 %v890
        %v1067 = vunpack.c.l.b16 %v891
        %v1068 = vunpack.c.h.b16 %v891
        %v1069 = vunpack.c.l.b16 %v892
        %v1070 = vunpack.c.h.b16 %v892
        %v1071 = vunpack.c.l.b16 %v893
        %v1072 = vunpack.c.h.b16 %v893
        %v1073 = vunpack.c.l.b16 %v894
        %v1074 = vunpack.c.h.b16 %v894
        %v1075 = vunpack.c.l.b16 %v895
        %v1076 = vunpack.c.h.b16 %v895
        %v1077 = vunpack.c.l.b16 %v896
        %v1078 = vunpack.c.h.b16 %v896
        %v1079 = vunpack.c.l.b16 %v897
        %v1080 = vunpack.c.h.b16 %v897
        %v1081 = vunpack.c.l.b16 %v898
        %v1082 = vunpack.c.h.b16 %v898
        %v1083 = vunpack.c.l.b16 %v899
        %v1084 = vunpack.c.h.b16 %v899
        %v1085 = vunpack.c.l.b16 %v900
        %v1086 = vunpack.c.h.b16 %v900
        %v1087 = vunpack.c.l.b16 %v901
        %v1088 = vunpack.c.h.b16 %v901
        %v1089 = vunpack.c.l.b16 %v902
        %v1090 = vunpack.c.h.b16 %v902
        %v1091 = vunpack.c.l.b16 %v903
        %v1092 = vunpack.c.h.b16 %v903
        %v1093 = vunpack.c.l.b16 %v904
        %v1094 = vunpack.c.h.b16 %v904
        %v1095 = vunpack.c.l.b16 %v905
        %v1096 = vunpack.c.h.b16 %v905
        %v1097 = vunpack.c.l.b16 %v906
        %v1098 = vunpack.c.h.b16 %v906
        %v1099 = vunpack.c.l.b16 %v907
        %v1100 = vunpack.c.h.b16 %v907
        %v1101 = vunpack.c.l.b16 %v908
        %v1102 = vunpack.c.h.b16 %v908
        %v1103 = vunpack.c.l.b16 %v909
        %v1104 = vunpack.c.h.b16 %v909
        %v1105 = vunpack.c.l.b16 %v910
        %v1106 = vunpack.c.h.b16 %v910
        %v1107 = vunpack.c.l.b16 %v911
        %v1108 = vunpack.c.h.b16 %v911
        %v1109 = vunpack.c.l.b16 %v912
        %v1110 = vunpack.c.h.b16 %v912
        %v1111 = vpack.c.b16 %v985, %v983
        %v1112 = vpack.c.b16 %v986, %v984
        %v1113 = vpack.c.b16 %v989, %v987
        %v1114 = vpack.c.b16 %v990, %v988
        %v1115 = vpack.c.b16 %v993, %v991
        %v1116 = vpack.c.b16 %v994, %v992
        %v1117 = vpack.c.b16 %v997, %v995
        %v1118 = vpack.c.b16 %v998, %v996
        %v1119 = vpack.c.b16 %v1001, %v999
        %v1120 = vpack.c.b16 %v1002, %v1000
        %v1121 = vpack.c.b16 %v1005, %v1003
        %v1122 = vpack.c.b16 %v1006, %v1004
        %v1123 = vpack.c.b16 %v1009, %v1007
        %v1124 = vpack.c.b16 %v1010, %v1008
        %v1125 = vpack.c.b16 %v1013, %v1011
        %v1126 = vpack.c.b16 %v1014, %v1012
        %v1127 = vpack.c.b16 %v1017, %v1015
        %v1128 = vpack.c.b16 %v1018, %v1016
        %v1129 = vpack.c.b16 %v1021, %v1019
        %v1130 = vpack.c.b16 %v1022, %v1020
        %v1131 = vpack.c.b16 %v1025, %v1023
        %v1132 = vpack.c.b16 %v1026, %v1024
        %v1133 = vpack.c.b16 %v1029, %v1027
        %v1134 = vpack.c.b16 %v1030, %v1028
        %v1135 = vpack.c.b16 %v1033, %v1031
        %v1136 = vpack.c.b16 %v1034, %v1032
        %v1137 = vpack.c.b16 %v1037, %v1035
        %v1138 = vpack.c.b16 %v1038, %v1036
        %v1139 = vpack.c.b16 %v1041, %v1039
        %v1140 = vpack.c.b16 %v1042, %v1040
        %v1141 = vpack.c.b16 %v1045, %v1043
        %v1142 = vpack.c.b16 %v1046, %v1044
        %v1143 = vpack.c.b16 %v1049, %v1047
        %v1144 = vpack.c.b16 %v1050, %v1048
        %v1145 = vpack.c.b16 %v1053, %v1051
        %v1146 = vpack.c.b16 %v1054, %v1052
        %v1147 = vpack.c.b16 %v1057, %v1055
        %v1148 = vpack.c.b16 %v1058, %v1056
        %v1149 = vpack.c.b16 %v1061, %v1059
        %v1150 = vpack.c.b16 %v1062, %v1060
        %v1151 = vpack.c.b16 %v1065, %v1063
        %v1152 = vpack.c.b16 %v1066, %v1064
        %v1153 = vpack.c.b16 %v1069, %v1067
        %v1154 = vpack.c.b16 %v1070, %v1068
        %v1155 = vpack.c.b16 %v1073, %v1071
        %v1156 = vpack.c.b16 %v1074, %v1072
        %v1157 = vpack.c.b16 %v1077, %v1075
        %v1158 = vpack.c.b16 %v1078, %v1076
        %v1159 = vpack.c.b16 %v1081, %v1079
        %v1160 = vpack.c.b16 %v1082, %v1080
        %v1161 = vpack.c.b16 %v1085, %v1083
        %v1162 = vpack.c.b16 %v1086, %v1084
        %v1163 = vpack.c.b16 %v1089, %v1087
        %v1164 = vpack.c.b16 %v1090, %v1088
        %v1165 = vpack.c.b16 %v1093, %v1091
        %v1166 = vpack.c.b16 %v1094, %v1092
        %v1167 = vpack.c.b16 %v1097, %v1095
        %v1168 = vpack.c.b16 %v1098, %v1096
        %v1169 = vpack.c.b16 %v1101, %v1099
        %v1170 = vpack.c.b16 %v1102, %v1100
        %v1171 = vpack.c.b16 %v1105, %v1103
        %v1172 = vpack.c.b16 %v1106, %v1104
        %v1173 = vpack.c.b16 %v1109, %v1107
        %v1174 = vpack.c.b16 %v1110, %v1108
        %1239 = vmatpush.bf16.msra.mxu0 %v1125
        %1240 = vmatpush.bf16.msra.mxu0 %v1123
        %1241 = vmatpush.bf16.msra.mxu0 %v1121
        %1242 = vmatpush.bf16.msra.mxu0 %v1119
        %1243 = vmatpush.bf16.msra.mxu0 %v1117
        %1244 = vmatpush.bf16.msra.mxu0 %v1115
        %1245 = vmatpush.bf16.msra.mxu0 %v1113
        %1246 = vmatpush.bf16.msra.mxu0 %v1111
        %1247 = vmatmul.bf16.gmra.mxu0 %v817
        %v1248 = vpop.f32.mrf.mxu0
        %v1249 = vadd.f32 %v915, %v1248
        %v1250 = vpop.f32.mrf.mxu0
        %v1251 = vadd.f32 %v915, %v1250
        %1252 = vmatmul.bf16.gmra.mxu0 %v821
        %v1253 = vpop.f32.mrf.mxu0
        %v1254 = vadd.f32 %v915, %v1253
        %v1255 = vpop.f32.mrf.mxu0
        %v1256 = vadd.f32 %v915, %v1255
        %1257 = vmatmul.bf16.gmra.mxu0 %v825
        %v1258 = vpop.f32.mrf.mxu0
        %v1259 = vadd.f32 %v915, %v1258
        %v1260 = vpop.f32.mrf.mxu0
        %v1261 = vadd.f32 %v915, %v1260
        %1262 = vmatmul.bf16.gmra.mxu0 %v829
        %v1263 = vpop.f32.mrf.mxu0
        %v1264 = vadd.f32 %v915, %v1263
        %v1265 = vpop.f32.mrf.mxu0
        %v1266 = vadd.f32 %v915, %v1265
        %1267 = vmatmul.bf16.gmra.mxu0 %v833
        %v1268 = vpop.f32.mrf.mxu0
        %v1269 = vadd.f32 %v915, %v1268
        %v1270 = vpop.f32.mrf.mxu0
        %v1271 = vadd.f32 %v915, %v1270
        %1272 = vmatmul.bf16.gmra.mxu0 %v837
        %v1273 = vpop.f32.mrf.mxu0
        %v1274 = vadd.f32 %v915, %v1273
        %v1275 = vpop.f32.mrf.mxu0
        %v1276 = vadd.f32 %v915, %v1275
        %1277 = vmatmul.bf16.gmra.mxu0 %v841
        %v1278 = vpop.f32.mrf.mxu0
        %v1279 = vadd.f32 %v915, %v1278
        %v1280 = vpop.f32.mrf.mxu0
        %v1281 = vadd.f32 %v915, %v1280
        %1282 = vmatmul.bf16.gmra.mxu0 %v845
        %v1283 = vpop.f32.mrf.mxu0
        %v1284 = vadd.f32 %v915, %v1283
        %v1285 = vpop.f32.mrf.mxu0
        %v1286 = vadd.f32 %v915, %v1285
        %1287 = vdwg.mxu0
        %1288 = vmatpush.bf16.msra.mxu0 %v1141
        %1289 = vmatpush.bf16.msra.mxu0 %v1139
        %1290 = vmatpush.bf16.msra.mxu0 %v1137
        %1291 = vmatpush.bf16.msra.mxu0 %v1135
        %1292 = vmatpush.bf16.msra.mxu0 %v1133
        %1293 = vmatpush.bf16.msra.mxu0 %v1131
        %1294 = vmatpush.bf16.msra.mxu0 %v1129
        %1295 = vmatpush.bf16.msra.mxu0 %v1127
        %1296 = vmatmul.bf16.gmra.mxu0 %v818
        %v1297 = vpop.f32.mrf.mxu0
        %v1298 = vadd.f32 %v1249, %v1297
        %v1299 = vpop.f32.mrf.mxu0
        %v1300 = vadd.f32 %v1251, %v1299
        %1301 = vmatmul.bf16.gmra.mxu0 %v822
        %v1302 = vpop.f32.mrf.mxu0
        %v1303 = vadd.f32 %v1254, %v1302
        %v1304 = vpop.f32.mrf.mxu0
        %v1305 = vadd.f32 %v1256, %v1304
        %1306 = vmatmul.bf16.gmra.mxu0 %v826
        %v1307 = vpop.f32.mrf.mxu0
        %v1308 = vadd.f32 %v1259, %v1307
        %v1309 = vpop.f32.mrf.mxu0
        %v1310 = vadd.f32 %v1261, %v1309
        %1311 = vmatmul.bf16.gmra.mxu0 %v830
        %v1312 = vpop.f32.mrf.mxu0
        %v1313 = vadd.f32 %v1264, %v1312
        %v1314 = vpop.f32.mrf.mxu0
        %v1315 = vadd.f32 %v1266, %v1314
        %1316 = vmatmul.bf16.gmra.mxu0 %v834
        %v1317 = vpop.f32.mrf.mxu0
        %v1318 = vadd.f32 %v1269, %v1317
        %v1319 = vpop.f32.mrf.mxu0
        %v1320 = vadd.f32 %v1271, %v1319
        %1321 = vmatmul.bf16.gmra.mxu0 %v838
        %v1322 = vpop.f32.mrf.mxu0
        %v1323 = vadd.f32 %v1274, %v1322
        %v1324 = vpop.f32.mrf.mxu0
        %v1325 = vadd.f32 %v1276, %v1324
        %1326 = vmatmul.bf16.gmra.mxu0 %v842
        %v1327 = vpop.f32.mrf.mxu0
        %v1328 = vadd.f32 %v1279, %v1327
        %v1329 = vpop.f32.mrf.mxu0
        %v1330 = vadd.f32 %v1281, %v1329
        %1331 = vmatmul.bf16.gmra.mxu0 %v846
        %v1332 = vpop.f32.mrf.mxu0
        %v1333 = vadd.f32 %v1284, %v1332
        %v1334 = vpop.f32.mrf.mxu0
        %v1335 = vadd.f32 %v1286, %v1334
        %1336 = vdwg.mxu0
        %1337 = vmatpush.bf16.msra.mxu0 %v1157
        %1338 = vmatpush.bf16.msra.mxu0 %v1155
        %1339 = vmatpush.bf16.msra.mxu0 %v1153
        %1340 = vmatpush.bf16.msra.mxu0 %v1151
        %1341 = vmatpush.bf16.msra.mxu0 %v1149
        %1342 = vmatpush.bf16.msra.mxu0 %v1147
        %1343 = vmatpush.bf16.msra.mxu0 %v1145
        %1344 = vmatpush.bf16.msra.mxu0 %v1143
        %1345 = vmatmul.bf16.gmra.mxu0 %v819
        %v1346 = vpop.f32.mrf.mxu0
        %v1347 = vadd.f32 %v1298, %v1346
        %v1348 = vpop.f32.mrf.mxu0
        %v1349 = vadd.f32 %v1300, %v1348
        %1350 = vmatmul.bf16.gmra.mxu0 %v823
        %v1351 = vpop.f32.mrf.mxu0
        %v1352 = vadd.f32 %v1303, %v1351
        %v1353 = vpop.f32.mrf.mxu0
        %v1354 = vadd.f32 %v1305, %v1353
        %1355 = vmatmul.bf16.gmra.mxu0 %v827
        %v1356 = vpop.f32.mrf.mxu0
        %v1357 = vadd.f32 %v1308, %v1356
        %v1358 = vpop.f32.mrf.mxu0
        %v1359 = vadd.f32 %v1310, %v1358
        %1360 = vmatmul.bf16.gmra.mxu0 %v831
        %v1361 = vpop.f32.mrf.mxu0
        %v1362 = vadd.f32 %v1313, %v1361
        %v1363 = vpop.f32.mrf.mxu0
        %v1364 = vadd.f32 %v1315, %v1363
        %1365 = vmatmul.bf16.gmra.mxu0 %v835
        %v1366 = vpop.f32.mrf.mxu0
        %v1367 = vadd.f32 %v1318, %v1366
        %v1368 = vpop.f32.mrf.mxu0
        %v1369 = vadd.f32 %v1320, %v1368
        %1370 = vmatmul.bf16.gmra.mxu0 %v839
        %v1371 = vpop.f32.mrf.mxu0
        %v1372 = vadd.f32 %v1323, %v1371
        %v1373 = vpop.f32.mrf.mxu0
        %v1374 = vadd.f32 %v1325, %v1373
        %1375 = vmatmul.bf16.gmra.mxu0 %v843
        %v1376 = vpop.f32.mrf.mxu0
        %v1377 = vadd.f32 %v1328, %v1376
        %v1378 = vpop.f32.mrf.mxu0
        %v1379 = vadd.f32 %v1330, %v1378
        %1380 = vmatmul.bf16.gmra.mxu0 %v847
        %v1381 = vpop.f32.mrf.mxu0
        %v1382 = vadd.f32 %v1333, %v1381
        %v1383 = vpop.f32.mrf.mxu0
        %v1384 = vadd.f32 %v1335, %v1383
        %1385 = vdwg.mxu0
        %1386 = vmatpush.bf16.msra.mxu0 %v1173
        %1387 = vmatpush.bf16.msra.mxu0 %v1171
        %1388 = vmatpush.bf16.msra.mxu0 %v1169
        %1389 = vmatpush.bf16.msra.mxu0 %v1167
        %1390 = vmatpush.bf16.msra.mxu0 %v1165
        %1391 = vmatpush.bf16.msra.mxu0 %v1163
        %1392 = vmatpush.bf16.msra.mxu0 %v1161
        %1393 = vmatpush.bf16.msra.mxu0 %v1159
        %1394 = vmatmul.bf16.gmra.mxu0 %v820
        %v1395 = vpop.f32.mrf.mxu0
        %v1396 = vadd.f32 %v1347, %v1395
        %v1397 = vpop.f32.mrf.mxu0
        %v1398 = vadd.f32 %v1349, %v1397
        %1399 = vmatmul.bf16.gmra.mxu0 %v824
        %v1400 = vpop.f32.mrf.mxu0
        %v1401 = vadd.f32 %v1352, %v1400
        %v1402 = vpop.f32.mrf.mxu0
        %v1403 = vadd.f32 %v1354, %v1402
        %1404 = vmatmul.bf16.gmra.mxu0 %v828
        %v1405 = vpop.f32.mrf.mxu0
        %v1406 = vadd.f32 %v1357, %v1405
        %v1407 = vpop.f32.mrf.mxu0
        %v1408 = vadd.f32 %v1359, %v1407
        %1409 = vmatmul.bf16.gmra.mxu0 %v832
        %v1410 = vpop.f32.mrf.mxu0
        %v1411 = vadd.f32 %v1362, %v1410
        %v1412 = vpop.f32.mrf.mxu0
        %v1413 = vadd.f32 %v1364, %v1412
        %1414 = vmatmul.bf16.gmra.mxu0 %v836
        %v1415 = vpop.f32.mrf.mxu0
        %v1416 = vadd.f32 %v1367, %v1415
        %v1417 = vpop.f32.mrf.mxu0
        %v1418 = vadd.f32 %v1369, %v1417
        %1419 = vmatmul.bf16.gmra.mxu0 %v840
        %v1420 = vpop.f32.mrf.mxu0
        %v1421 = vadd.f32 %v1372, %v1420
        %v1422 = vpop.f32.mrf.mxu0
        %v1423 = vadd.f32 %v1374, %v1422
        %1424 = vmatmul.bf16.gmra.mxu0 %v844
        %v1425 = vpop.f32.mrf.mxu0
        %v1426 = vadd.f32 %v1377, %v1425
        %v1427 = vpop.f32.mrf.mxu0
        %v1428 = vadd.f32 %v1379, %v1427
        %1429 = vmatmul.bf16.gmra.mxu0 %v848
        %v1430 = vpop.f32.mrf.mxu0
        %v1431 = vadd.f32 %v1382, %v1430
        %v1432 = vpop.f32.mrf.mxu0
        %v1433 = vadd.f32 %v1384, %v1432
        %1434 = vdwg.mxu0
        %1435 = vmatpush.bf16.msra.mxu0 %v1126
        %1436 = vmatpush.bf16.msra.mxu0 %v1124
        %1437 = vmatpush.bf16.msra.mxu0 %v1122
        %1438 = vmatpush.bf16.msra.mxu0 %v1120
        %1439 = vmatpush.bf16.msra.mxu0 %v1118
        %1440 = vmatpush.bf16.msra.mxu0 %v1116
        %1441 = vmatpush.bf16.msra.mxu0 %v1114
        %1442 = vmatpush.bf16.msra.mxu0 %v1112
        %1443 = vmatmul.bf16.gmra.mxu0 %v817
        %v1444 = vpop.f32.mrf.mxu0
        %v1445 = vadd.f32 %v916, %v1444
        %v1446 = vpop.f32.mrf.mxu0
        %v1447 = vadd.f32 %v916, %v1446
        %1448 = vmatmul.bf16.gmra.mxu0 %v821
        %v1449 = vpop.f32.mrf.mxu0
        %v1450 = vadd.f32 %v916, %v1449
        %v1451 = vpop.f32.mrf.mxu0
        %v1452 = vadd.f32 %v916, %v1451
        %1453 = vmatmul.bf16.gmra.mxu0 %v825
        %v1454 = vpop.f32.mrf.mxu0
        %v1455 = vadd.f32 %v916, %v1454
        %v1456 = vpop.f32.mrf.mxu0
        %v1457 = vadd.f32 %v916, %v1456
        %1458 = vmatmul.bf16.gmra.mxu0 %v829
        %v1459 = vpop.f32.mrf.mxu0
        %v1460 = vadd.f32 %v916, %v1459
        %v1461 = vpop.f32.mrf.mxu0
        %v1462 = vadd.f32 %v916, %v1461
        %1463 = vmatmul.bf16.gmra.mxu0 %v833
        %v1464 = vpop.f32.mrf.mxu0
        %v1465 = vadd.f32 %v916, %v1464
        %v1466 = vpop.f32.mrf.mxu0
        %v1467 = vadd.f32 %v916, %v1466
        %1468 = vmatmul.bf16.gmra.mxu0 %v837
        %v1469 = vpop.f32.mrf.mxu0
        %v1470 = vadd.f32 %v916, %v1469
        %v1471 = vpop.f32.mrf.mxu0
        %v1472 = vadd.f32 %v916, %v1471
        %1473 = vmatmul.bf16.gmra.mxu0 %v841
        %v1474 = vpop.f32.mrf.mxu0
        %v1475 = vadd.f32 %v916, %v1474
        %v1476 = vpop.f32.mrf.mxu0
        %v1477 = vadd.f32 %v916, %v1476
        %1478 = vmatmul.bf16.gmra.mxu0 %v845
        %v1479 = vpop.f32.mrf.mxu0
        %v1480 = vadd.f32 %v916, %v1479
        %v1481 = vpop.f32.mrf.mxu0
        %v1482 = vadd.f32 %v916, %v1481
        %1483 = vdwg.mxu0
        %1484 = vmatpush.bf16.msra.mxu0 %v1142
        %1485 = vmatpush.bf16.msra.mxu0 %v1140
        %1486 = vmatpush.bf16.msra.mxu0 %v1138
        %1487 = vmatpush.bf16.msra.mxu0 %v1136
        %1488 = vmatpush.bf16.msra.mxu0 %v1134
        %1489 = vmatpush.bf16.msra.mxu0 %v1132
        %1490 = vmatpush.bf16.msra.mxu0 %v1130
        %1491 = vmatpush.bf16.msra.mxu0 %v1128
        %1492 = vmatmul.bf16.gmra.mxu0 %v818
        %v1493 = vpop.f32.mrf.mxu0
        %v1494 = vadd.f32 %v1445, %v1493
        %v1495 = vpop.f32.mrf.mxu0
        %v1496 = vadd.f32 %v1447, %v1495
        %1497 = vmatmul.bf16.gmra.mxu0 %v822
        %v1498 = vpop.f32.mrf.mxu0
        %v1499 = vadd.f32 %v1450, %v1498
        %v1500 = vpop.f32.mrf.mxu0
        %v1501 = vadd.f32 %v1452, %v1500
        %1502 = vmatmul.bf16.gmra.mxu0 %v826
        %v1503 = vpop.f32.mrf.mxu0
        %v1504 = vadd.f32 %v1455, %v1503
        %v1505 = vpop.f32.mrf.mxu0
        %v1506 = vadd.f32 %v1457, %v1505
        %1507 = vmatmul.bf16.gmra.mxu0 %v830
        %v1508 = vpop.f32.mrf.mxu0
        %v1509 = vadd.f32 %v1460, %v1508
        %v1510 = vpop.f32.mrf.mxu0
        %v1511 = vadd.f32 %v1462, %v1510
        %1512 = vmatmul.bf16.gmra.mxu0 %v834
        %v1513 = vpop.f32.mrf.mxu0
        %v1514 = vadd.f32 %v1465, %v1513
        %v1515 = vpop.f32.mrf.mxu0
        %v1516 = vadd.f32 %v1467, %v1515
        %1517 = vmatmul.bf16.gmra.mxu0 %v838
        %v1518 = vpop.f32.mrf.mxu0
        %v1519 = vadd.f32 %v1470, %v1518
        %v1520 = vpop.f32.mrf.mxu0
        %v1521 = vadd.f32 %v1472, %v1520
        %1522 = vmatmul.bf16.gmra.mxu0 %v842
        %v1523 = vpop.f32.mrf.mxu0
        %v1524 = vadd.f32 %v1475, %v1523
        %v1525 = vpop.f32.mrf.mxu0
        %v1526 = vadd.f32 %v1477, %v1525
        %1527 = vmatmul.bf16.gmra.mxu0 %v846
        %v1528 = vpop.f32.mrf.mxu0
        %v1529 = vadd.f32 %v1480, %v1528
        %v1530 = vpop.f32.mrf.mxu0
        %v1531 = vadd.f32 %v1482, %v1530
        %1532 = vdwg.mxu0
        %1533 = vmatpush.bf16.msra.mxu0 %v1158
        %1534 = vmatpush.bf16.msra.mxu0 %v1156
        %1535 = vmatpush.bf16.msra.mxu0 %v1154
        %1536 = vmatpush.bf16.msra.mxu0 %v1152
        %1537 = vmatpush.bf16.msra.mxu0 %v1150
        %1538 = vmatpush.bf16.msra.mxu0 %v1148
        %1539 = vmatpush.bf16.msra.mxu0 %v1146
        %1540 = vmatpush.bf16.msra.mxu0 %v1144
        %1541 = vmatmul.bf16.gmra.mxu0 %v819
        %v1542 = vpop.f32.mrf.mxu0
        %v1543 = vadd.f32 %v1494, %v1542
        %v1544 = vpop.f32.mrf.mxu0
        %v1545 = vadd.f32 %v1496, %v1544
        %1546 = vmatmul.bf16.gmra.mxu0 %v823
        %v1547 = vpop.f32.mrf.mxu0
        %v1548 = vadd.f32 %v1499, %v1547
        %v1549 = vpop.f32.mrf.mxu0
        %v1550 = vadd.f32 %v1501, %v1549
        %1551 = vmatmul.bf16.gmra.mxu0 %v827
        %v1552 = vpop.f32.mrf.mxu0
        %v1553 = vadd.f32 %v1504, %v1552
        %v1554 = vpop.f32.mrf.mxu0
        %v1555 = vadd.f32 %v1506, %v1554
        %1556 = vmatmul.bf16.gmra.mxu0 %v831
        %v1557 = vpop.f32.mrf.mxu0
        %v1558 = vadd.f32 %v1509, %v1557
        %v1559 = vpop.f32.mrf.mxu0
        %v1560 = vadd.f32 %v1511, %v1559
        %1561 = vmatmul.bf16.gmra.mxu0 %v835
        %v1562 = vpop.f32.mrf.mxu0
        %v1563 = vadd.f32 %v1514, %v1562
        %v1564 = vpop.f32.mrf.mxu0
        %v1565 = vadd.f32 %v1516, %v1564
        %1566 = vmatmul.bf16.gmra.mxu0 %v839
        %v1567 = vpop.f32.mrf.mxu0
        %v1568 = vadd.f32 %v1519, %v1567
        %v1569 = vpop.f32.mrf.mxu0
        %v1570 = vadd.f32 %v1521, %v1569
        %1571 = vmatmul.bf16.gmra.mxu0 %v843
        %v1572 = vpop.f32.mrf.mxu0
        %v1573 = vadd.f32 %v1524, %v1572
        %v1574 = vpop.f32.mrf.mxu0
        %v1575 = vadd.f32 %v1526, %v1574
        %1576 = vmatmul.bf16.gmra.mxu0 %v847
        %v1577 = vpop.f32.mrf.mxu0
        %v1578 = vadd.f32 %v1529, %v1577
        %v1579 = vpop.f32.mrf.mxu0
        %v1580 = vadd.f32 %v1531, %v1579
        %1581 = vdwg.mxu0
        %1582 = vmatpush.bf16.msra.mxu0 %v1174
        %1583 = vmatpush.bf16.msra.mxu0 %v1172
        %1584 = vmatpush.bf16.msra.mxu0 %v1170
        %1585 = vmatpush.bf16.msra.mxu0 %v1168
        %1586 = vmatpush.bf16.msra.mxu0 %v1166
        %1587 = vmatpush.bf16.msra.mxu0 %v1164
        %1588 = vmatpush.bf16.msra.mxu0 %v1162
        %1589 = vmatpush.bf16.msra.mxu0 %v1160
        %1590 = vmatmul.bf16.gmra.mxu0 %v820
        %v1591 = vpop.f32.mrf.mxu0
        %v1592 = vadd.f32 %v1543, %v1591
        %v1593 = vpop.f32.mrf.mxu0
        %v1594 = vadd.f32 %v1545, %v1593
        %1595 = vmatmul.bf16.gmra.mxu0 %v824
        %v1596 = vpop.f32.mrf.mxu0
        %v1597 = vadd.f32 %v1548, %v1596
        %v1598 = vpop.f32.mrf.mxu0
        %v1599 = vadd.f32 %v1550, %v1598
        %1600 = vmatmul.bf16.gmra.mxu0 %v828
        %v1601 = vpop.f32.mrf.mxu0
        %v1602 = vadd.f32 %v1553, %v1601
        %v1603 = vpop.f32.mrf.mxu0
        %v1604 = vadd.f32 %v1555, %v1603
        %1605 = vmatmul.bf16.gmra.mxu0 %v832
        %v1606 = vpop.f32.mrf.mxu0
        %v1607 = vadd.f32 %v1558, %v1606
        %v1608 = vpop.f32.mrf.mxu0
        %v1609 = vadd.f32 %v1560, %v1608
        %1610 = vmatmul.bf16.gmra.mxu0 %v836
        %v1611 = vpop.f32.mrf.mxu0
        %v1612 = vadd.f32 %v1563, %v1611
        %v1613 = vpop.f32.mrf.mxu0
        %v1614 = vadd.f32 %v1565, %v1613
        %1615 = vmatmul.bf16.gmra.mxu0 %v840
        %v1616 = vpop.f32.mrf.mxu0
        %v1617 = vadd.f32 %v1568, %v1616
        %v1618 = vpop.f32.mrf.mxu0
        %v1619 = vadd.f32 %v1570, %v1618
        %1620 = vmatmul.bf16.gmra.mxu0 %v844
        %v1621 = vpop.f32.mrf.mxu0
        %v1622 = vadd.f32 %v1573, %v1621
        %v1623 = vpop.f32.mrf.mxu0
        %v1624 = vadd.f32 %v1575, %v1623
        %1625 = vmatmul.bf16.gmra.mxu0 %v848
        %v1626 = vpop.f32.mrf.mxu0
        %v1627 = vadd.f32 %v1578, %v1626
        %v1628 = vpop.f32.mrf.mxu0
        %v1629 = vadd.f32 %v1580, %v1628
        %1630 = vdwg.mxu0
        %v1631 = vmax.f32 %v1396, 0.0
        %v1632 = vmax.f32 %v1592, 0.0
        %v1633 = vmax.f32 %v1398, 0.0
        %v1634 = vmax.f32 %v1594, 0.0
        %v1635 = vmax.f32 %v1401, 0.0
        %v1636 = vmax.f32 %v1597, 0.0
        %v1637 = vmax.f32 %v1403, 0.0
        %v1638 = vmax.f32 %v1599, 0.0
        %v1639 = vmax.f32 %v1406, 0.0
        %v1640 = vmax.f32 %v1602, 0.0
        %v1641 = vmax.f32 %v1408, 0.0
        %v1642 = vmax.f32 %v1604, 0.0
        %v1643 = vmax.f32 %v1411, 0.0
        %v1644 = vmax.f32 %v1607, 0.0
        %v1645 = vmax.f32 %v1413, 0.0
        %v1646 = vmax.f32 %v1609, 0.0
        %v1647 = vmax.f32 %v1416, 0.0
        %v1648 = vmax.f32 %v1612, 0.0
        %v1649 = vmax.f32 %v1418, 0.0
        %v1650 = vmax.f32 %v1614, 0.0
        %v1651 = vmax.f32 %v1421, 0.0
        %v1652 = vmax.f32 %v1617, 0.0
        %v1653 = vmax.f32 %v1423, 0.0
        %v1654 = vmax.f32 %v1619, 0.0
        %v1655 = vmax.f32 %v1426, 0.0
        %v1656 = vmax.f32 %v1622, 0.0
        %v1657 = vmax.f32 %v1428, 0.0
        %v1658 = vmax.f32 %v1624, 0.0
        %v1659 = vmax.f32 %v1431, 0.0
        %v1660 = vmax.f32 %v1627, 0.0
        %v1661 = vmax.f32 %v1433, 0.0
        %v1662 = vmax.f32 %v1629, 0.0
        %v1663 = vpack.c.bf16 %v1633, %v1631
        %v1664 = vpack.c.bf16 %v1634, %v1632
        %v1665 = vpack.c.bf16 %v1637, %v1635
        %v1666 = vpack.c.bf16 %v1638, %v1636
        %v1667 = vpack.c.bf16 %v1641, %v1639
        %v1668 = vpack.c.bf16 %v1642, %v1640
        %v1669 = vpack.c.bf16 %v1645, %v1643
        %v1670 = vpack.c.bf16 %v1646, %v1644
        %v1671 = vpack.c.bf16 %v1649, %v1647
        %v1672 = vpack.c.bf16 %v1650, %v1648
        %v1673 = vpack.c.bf16 %v1653, %v1651
        %v1674 = vpack.c.bf16 %v1654, %v1652
        %v1675 = vpack.c.bf16 %v1657, %v1655
        %v1676 = vpack.c.bf16 %v1658, %v1656
        %v1677 = vpack.c.bf16 %v1661, %v1659
        %v1678 = vpack.c.bf16 %v1662, %v1660
        %v1679 = vld [vmem:[#allocation8] sm:$0xff]
        %v1680 = vld [vmem:[#allocation8 + $0x8] sm:$0xff]
        %v1681 = vld [vmem:[#allocation8 + $0x10] sm:$0xff]
        %v1682 = vld [vmem:[#allocation8 + $0x18] sm:$0xff]
        %v1683 = vld [vmem:[#allocation8 + $0x20] sm:$0xff]
        %v1684 = vld [vmem:[#allocation8 + $0x28] sm:$0xff]
        %v1685 = vld [vmem:[#allocation8 + $0x30] sm:$0xff]
        %v1686 = vld [vmem:[#allocation8 + $0x38] sm:$0xff]
        %v1687 = vld [vmem:[#allocation8 + $0x40] sm:$0xff]
        %v1688 = vld [vmem:[#allocation8 + $0x48] sm:$0xff]
        %v1689 = vld [vmem:[#allocation8 + $0x50] sm:$0xff]
        %v1690 = vld [vmem:[#allocation8 + $0x58] sm:$0xff]
        %v1691 = vld [vmem:[#allocation8 + $0x60] sm:$0xff]
        %v1692 = vld [vmem:[#allocation8 + $0x68] sm:$0xff]
        %v1693 = vld [vmem:[#allocation8 + $0x70] sm:$0xff]
        %v1694 = vld [vmem:[#allocation8 + $0x78] sm:$0xff]
        %v1695 = vld [vmem:[#allocation8 + $0x80] sm:$0xff]
        %v1696 = vld [vmem:[#allocation8 + $0x88] sm:$0xff]
        %v1697 = vld [vmem:[#allocation8 + $0x90] sm:$0xff]
        %v1698 = vld [vmem:[#allocation8 + $0x98] sm:$0xff]
        %v1699 = vld [vmem:[#allocation8 + $0xa0] sm:$0xff]
        %v1700 = vld [vmem:[#allocation8 + $0xa8] sm:$0xff]
        %v1701 = vld [vmem:[#allocation8 + $0xb0] sm:$0xff]
        %v1702 = vld [vmem:[#allocation8 + $0xb8] sm:$0xff]
        %v1703 = vld [vmem:[#allocation8 + $0xc0] sm:$0xff]
        %v1704 = vld [vmem:[#allocation8 + $0xc8] sm:$0xff]
        %v1705 = vld [vmem:[#allocation8 + $0xd0] sm:$0xff]
        %v1706 = vld [vmem:[#allocation8 + $0xd8] sm:$0xff]
        %v1707 = vld [vmem:[#allocation8 + $0xe0] sm:$0xff]
        %v1708 = vld [vmem:[#allocation8 + $0xe8] sm:$0xff]
        %v1709 = vld [vmem:[#allocation8 + $0xf0] sm:$0xff]
        %v1710 = vld [vmem:[#allocation8 + $0xf8] sm:$0xff]
        %v1711 = vld [vmem:[#allocation10] sm:$0x3]
        %v1713 = vperm.slane %v1711, 0
        %v1714 = vperm.slane %v1711, 1
        %v1749 = vunpack.c.l.b16 %v1679
        %v1750 = vunpack.c.h.b16 %v1679
        %v1751 = vunpack.c.l.b16 %v1680
        %v1752 = vunpack.c.h.b16 %v1680
        %v1753 = vunpack.c.l.b16 %v1681
        %v1754 = vunpack.c.h.b16 %v1681
        %v1755 = vunpack.c.l.b16 %v1682
        %v1756 = vunpack.c.h.b16 %v1682
        %v1757 = vunpack.c.l.b16 %v1683
        %v1758 = vunpack.c.h.b16 %v1683
        %v1759 = vunpack.c.l.b16 %v1684
        %v1760 = vunpack.c.h.b16 %v1684
        %v1761 = vunpack.c.l.b16 %v1685
        %v1762 = vunpack.c.h.b16 %v1685
        %v1763 = vunpack.c.l.b16 %v1686
        %v1764 = vunpack.c.h.b16 %v1686
        %v1765 = vunpack.c.l.b16 %v1687
        %v1766 = vunpack.c.h.b16 %v1687
        %v1767 = vunpack.c.l.b16 %v1688
        %v1768 = vunpack.c.h.b16 %v1688
        %v1769 = vunpack.c.l.b16 %v1689
        %v1770 = vunpack.c.h.b16 %v1689
        %v1771 = vunpack.c.l.b16 %v1690
        %v1772 = vunpack.c.h.b16 %v1690
        %v1773 = vunpack.c.l.b16 %v1691
        %v1774 = vunpack.c.h.b16 %v1691
        %v1775 = vunpack.c.l.b16 %v1692
        %v1776 = vunpack.c.h.b16 %v1692
        %v1777 = vunpack.c.l.b16 %v1693
        %v1778 = vunpack.c.h.b16 %v1693
        %v1779 = vunpack.c.l.b16 %v1694
        %v1780 = vunpack.c.h.b16 %v1694
        %v1781 = vunpack.c.l.b16 %v1695
        %v1782 = vunpack.c.h.b16 %v1695
        %v1783 = vunpack.c.l.b16 %v1696
        %v1784 = vunpack.c.h.b16 %v1696
        %v1785 = vunpack.c.l.b16 %v1697
        %v1786 = vunpack.c.h.b16 %v1697
        %v1787 = vunpack.c.l.b16 %v1698
        %v1788 = vunpack.c.h.b16 %v1698
        %v1789 = vunpack.c.l.b16 %v1699
        %v1790 = vunpack.c.h.b16 %v1699
        %v1791 = vunpack.c.l.b16 %v1700
        %v1792 = vunpack.c.h.b16 %v1700
        %v1793 = vunpack.c.l.b16 %v1701
        %v1794 = vunpack.c.h.b16 %v1701
        %v1795 = vunpack.c.l.b16 %v1702
        %v1796 = vunpack.c.h.b16 %v1702
        %v1797 = vunpack.c.l.b16 %v1703
        %v1798 = vunpack.c.h.b16 %v1703
        %v1799 = vunpack.c.l.b16 %v1704
        %v1800 = vunpack.c.h.b16 %v1704
        %v1801 = vunpack.c.l.b16 %v1705
        %v1802 = vunpack.c.h.b16 %v1705
        %v1803 = vunpack.c.l.b16 %v1706
        %v1804 = vunpack.c.h.b16 %v1706
        %v1805 = vunpack.c.l.b16 %v1707
        %v1806 = vunpack.c.h.b16 %v1707
        %v1807 = vunpack.c.l.b16 %v1708
        %v1808 = vunpack.c.h.b16 %v1708
        %v1809 = vunpack.c.l.b16 %v1709
        %v1810 = vunpack.c.h.b16 %v1709
        %v1811 = vunpack.c.l.b16 %v1710
        %v1812 = vunpack.c.h.b16 %v1710
        %v1813 = vpack.c.b16 %v1751, %v1749
        %v1814 = vpack.c.b16 %v1752, %v1750
        %v1815 = vpack.c.b16 %v1755, %v1753
        %v1816 = vpack.c.b16 %v1756, %v1754
        %v1817 = vpack.c.b16 %v1759, %v1757
        %v1818 = vpack.c.b16 %v1760, %v1758
        %v1819 = vpack.c.b16 %v1763, %v1761
        %v1820 = vpack.c.b16 %v1764, %v1762
        %v1821 = vpack.c.b16 %v1767, %v1765
        %v1822 = vpack.c.b16 %v1768, %v1766
        %v1823 = vpack.c.b16 %v1771, %v1769
        %v1824 = vpack.c.b16 %v1772, %v1770
        %v1825 = vpack.c.b16 %v1775, %v1773
        %v1826 = vpack.c.b16 %v1776, %v1774
        %v1827 = vpack.c.b16 %v1779, %v1777
        %v1828 = vpack.c.b16 %v1780, %v1778
        %v1829 = vpack.c.b16 %v1783, %v1781
        %v1830 = vpack.c.b16 %v1784, %v1782
        %v1831 = vpack.c.b16 %v1787, %v1785
        %v1832 = vpack.c.b16 %v1788, %v1786
        %v1833 = vpack.c.b16 %v1791, %v1789
        %v1834 = vpack.c.b16 %v1792, %v1790
        %v1835 = vpack.c.b16 %v1795, %v1793
        %v1836 = vpack.c.b16 %v1796, %v1794
        %v1837 = vpack.c.b16 %v1799, %v1797
        %v1838 = vpack.c.b16 %v1800, %v1798
        %v1839 = vpack.c.b16 %v1803, %v1801
        %v1840 = vpack.c.b16 %v1804, %v1802
        %v1841 = vpack.c.b16 %v1807, %v1805
        %v1842 = vpack.c.b16 %v1808, %v1806
        %v1843 = vpack.c.b16 %v1811, %v1809
        %v1844 = vpack.c.b16 %v1812, %v1810
        %1877 = vmatpush.bf16.msra.mxu0 %v1827
        %1878 = vmatpush.bf16.msra.mxu0 %v1825
        %1879 = vmatpush.bf16.msra.mxu0 %v1823
        %1880 = vmatpush.bf16.msra.mxu0 %v1821
        %1881 = vmatpush.bf16.msra.mxu0 %v1819
        %1882 = vmatpush.bf16.msra.mxu0 %v1817
        %1883 = vmatpush.bf16.msra.mxu0 %v1815
        %1884 = vmatpush.bf16.msra.mxu0 %v1813
        %1885 = vmatmul.bf16.gmra.mxu0 %v1663
        %v1886 = vpop.f32.mrf.mxu0
        %v1887 = vadd.f32 %v1713, %v1886
        %v1888 = vpop.f32.mrf.mxu0
        %v1889 = vadd.f32 %v1713, %v1888
        %1890 = vmatmul.bf16.gmra.mxu0 %v1665
        %v1891 = vpop.f32.mrf.mxu0
        %v1892 = vadd.f32 %v1713, %v1891
        %v1893 = vpop.f32.mrf.mxu0
        %v1894 = vadd.f32 %v1713, %v1893
        %1895 = vmatmul.bf16.gmra.mxu0 %v1667
        %v1896 = vpop.f32.mrf.mxu0
        %v1897 = vadd.f32 %v1713, %v1896
        %v1898 = vpop.f32.mrf.mxu0
        %v1899 = vadd.f32 %v1713, %v1898
        %1900 = vmatmul.bf16.gmra.mxu0 %v1669
        %v1901 = vpop.f32.mrf.mxu0
        %v1902 = vadd.f32 %v1713, %v1901
        %v1903 = vpop.f32.mrf.mxu0
        %v1904 = vadd.f32 %v1713, %v1903
        %1905 = vmatmul.bf16.gmra.mxu0 %v1671
        %v1906 = vpop.f32.mrf.mxu0
        %v1907 = vadd.f32 %v1713, %v1906
        %v1908 = vpop.f32.mrf.mxu0
        %v1909 = vadd.f32 %v1713, %v1908
        %1910 = vmatmul.bf16.gmra.mxu0 %v1673
        %v1911 = vpop.f32.mrf.mxu0
        %v1912 = vadd.f32 %v1713, %v1911
        %v1913 = vpop.f32.mrf.mxu0
        %v1914 = vadd.f32 %v1713, %v1913
        %1915 = vmatmul.bf16.gmra.mxu0 %v1675
        %v1916 = vpop.f32.mrf.mxu0
        %v1917 = vadd.f32 %v1713, %v1916
        %v1918 = vpop.f32.mrf.mxu0
        %v1919 = vadd.f32 %v1713, %v1918
        %1920 = vmatmul.bf16.gmra.mxu0 %v1677
        %v1921 = vpop.f32.mrf.mxu0
        %v1922 = vadd.f32 %v1713, %v1921
        %v1923 = vpop.f32.mrf.mxu0
        %v1924 = vadd.f32 %v1713, %v1923
        %1925 = vdwg.mxu0
        %1926 = vmatpush.bf16.msra.mxu0 %v1843
        %1927 = vmatpush.bf16.msra.mxu0 %v1841
        %1928 = vmatpush.bf16.msra.mxu0 %v1839
        %1929 = vmatpush.bf16.msra.mxu0 %v1837
        %1930 = vmatpush.bf16.msra.mxu0 %v1835
        %1931 = vmatpush.bf16.msra.mxu0 %v1833
        %1932 = vmatpush.bf16.msra.mxu0 %v1831
        %1933 = vmatpush.bf16.msra.mxu0 %v1829
        %1934 = vmatmul.bf16.gmra.mxu0 %v1664
        %v1935 = vpop.f32.mrf.mxu0
        %v1936 = vadd.f32 %v1887, %v1935
        %v1937 = vpop.f32.mrf.mxu0
        %v1938 = vadd.f32 %v1889, %v1937
        %1939 = vmatmul.bf16.gmra.mxu0 %v1666
        %v1940 = vpop.f32.mrf.mxu0
        %v1941 = vadd.f32 %v1892, %v1940
        %v1942 = vpop.f32.mrf.mxu0
        %v1943 = vadd.f32 %v1894, %v1942
        %1944 = vmatmul.bf16.gmra.mxu0 %v1668
        %v1945 = vpop.f32.mrf.mxu0
        %v1946 = vadd.f32 %v1897, %v1945
        %v1947 = vpop.f32.mrf.mxu0
        %v1948 = vadd.f32 %v1899, %v1947
        %1949 = vmatmul.bf16.gmra.mxu0 %v1670
        %v1950 = vpop.f32.mrf.mxu0
        %v1951 = vadd.f32 %v1902, %v1950
        %v1952 = vpop.f32.mrf.mxu0
        %v1953 = vadd.f32 %v1904, %v1952
        %1954 = vmatmul.bf16.gmra.mxu0 %v1672
        %v1955 = vpop.f32.mrf.mxu0
        %v1956 = vadd.f32 %v1907, %v1955
        %v1957 = vpop.f32.mrf.mxu0
        %v1958 = vadd.f32 %v1909, %v1957
        %1959 = vmatmul.bf16.gmra.mxu0 %v1674
        %v1960 = vpop.f32.mrf.mxu0
        %v1961 = vadd.f32 %v1912, %v1960
        %v1962 = vpop.f32.mrf.mxu0
        %v1963 = vadd.f32 %v1914, %v1962
        %1964 = vmatmul.bf16.gmra.mxu0 %v1676
        %v1965 = vpop.f32.mrf.mxu0
        %v1966 = vadd.f32 %v1917, %v1965
        %v1967 = vpop.f32.mrf.mxu0
        %v1968 = vadd.f32 %v1919, %v1967
        %1969 = vmatmul.bf16.gmra.mxu0 %v1678
        %v1970 = vpop.f32.mrf.mxu0
        %v1971 = vadd.f32 %v1922, %v1970
        %v1972 = vpop.f32.mrf.mxu0
        %v1973 = vadd.f32 %v1924, %v1972
        %1974 = vdwg.mxu0
        %1975 = vmatpush.bf16.msra.mxu0 %v1828
        %1976 = vmatpush.bf16.msra.mxu0 %v1826
        %1977 = vmatpush.bf16.msra.mxu0 %v1824
        %1978 = vmatpush.bf16.msra.mxu0 %v1822
        %1979 = vmatpush.bf16.msra.mxu0 %v1820
        %1980 = vmatpush.bf16.msra.mxu0 %v1818
        %1981 = vmatpush.bf16.msra.mxu0 %v1816
        %1982 = vmatpush.bf16.msra.mxu0 %v1814
        %1983 = vmatmul.bf16.gmra.mxu0 %v1663
        %v1984 = vpop.f32.mrf.mxu0
        %v1985 = vadd.f32 %v1714, %v1984
        %v1986 = vpop.f32.mrf.mxu0
        %v1987 = vadd.f32 %v1714, %v1986
        %1988 = vmatmul.bf16.gmra.mxu0 %v1665
        %v1989 = vpop.f32.mrf.mxu0
        %v1990 = vadd.f32 %v1714, %v1989
        %v1991 = vpop.f32.mrf.mxu0
        %v1992 = vadd.f32 %v1714, %v1991
        %1993 = vmatmul.bf16.gmra.mxu0 %v1667
        %v1994 = vpop.f32.mrf.mxu0
        %v1995 = vadd.f32 %v1714, %v1994
        %v1996 = vpop.f32.mrf.mxu0
        %v1997 = vadd.f32 %v1714, %v1996
        %1998 = vmatmul.bf16.gmra.mxu0 %v1669
        %v1999 = vpop.f32.mrf.mxu0
        %v2000 = vadd.f32 %v1714, %v1999
        %v2001 = vpop.f32.mrf.mxu0
        %v2002 = vadd.f32 %v1714, %v2001
        %2003 = vmatmul.bf16.gmra.mxu0 %v1671
        %v2004 = vpop.f32.mrf.mxu0
        %v2005 = vadd.f32 %v1714, %v2004
        %v2006 = vpop.f32.mrf.mxu0
        %v2007 = vadd.f32 %v1714, %v2006
        %2008 = vmatmul.bf16.gmra.mxu0 %v1673
        %v2009 = vpop.f32.mrf.mxu0
        %v2010 = vadd.f32 %v1714, %v2009
        %v2011 = vpop.f32.mrf.mxu0
        %v2012 = vadd.f32 %v1714, %v2011
        %2013 = vmatmul.bf16.gmra.mxu0 %v1675
        %v2014 = vpop.f32.mrf.mxu0
        %v2015 = vadd.f32 %v1714, %v2014
        %v2016 = vpop.f32.mrf.mxu0
        %v2017 = vadd.f32 %v1714, %v2016
        %2018 = vmatmul.bf16.gmra.mxu0 %v1677
        %v2019 = vpop.f32.mrf.mxu0
        %v2020 = vadd.f32 %v1714, %v2019
        %v2021 = vpop.f32.mrf.mxu0
        %v2022 = vadd.f32 %v1714, %v2021
        %2023 = vdwg.mxu0
        %2024 = vmatpush.bf16.msra.mxu0 %v1844
        %2025 = vmatpush.bf16.msra.mxu0 %v1842
        %2026 = vmatpush.bf16.msra.mxu0 %v1840
        %2027 = vmatpush.bf16.msra.mxu0 %v1838
        %2028 = vmatpush.bf16.msra.mxu0 %v1836
        %2029 = vmatpush.bf16.msra.mxu0 %v1834
        %2030 = vmatpush.bf16.msra.mxu0 %v1832
        %2031 = vmatpush.bf16.msra.mxu0 %v1830
        %2032 = vmatmul.bf16.gmra.mxu0 %v1664
        %v2033 = vpop.f32.mrf.mxu0
        %v2034 = vadd.f32 %v1985, %v2033
        %v2035 = vpop.f32.mrf.mxu0
        %v2036 = vadd.f32 %v1987, %v2035
        %2037 = vmatmul.bf16.gmra.mxu0 %v1666
        %v2038 = vpop.f32.mrf.mxu0
        %v2039 = vadd.f32 %v1990, %v2038
        %v2040 = vpop.f32.mrf.mxu0
        %v2041 = vadd.f32 %v1992, %v2040
        %2042 = vmatmul.bf16.gmra.mxu0 %v1668
        %v2043 = vpop.f32.mrf.mxu0
        %v2044 = vadd.f32 %v1995, %v2043
        %v2045 = vpop.f32.mrf.mxu0
        %v2046 = vadd.f32 %v1997, %v2045
        %2047 = vmatmul.bf16.gmra.mxu0 %v1670
        %v2048 = vpop.f32.mrf.mxu0
        %v2049 = vadd.f32 %v2000, %v2048
        %v2050 = vpop.f32.mrf.mxu0
        %v2051 = vadd.f32 %v2002, %v2050
        %2052 = vmatmul.bf16.gmra.mxu0 %v1672
        %v2053 = vpop.f32.mrf.mxu0
        %v2054 = vadd.f32 %v2005, %v2053
        %v2055 = vpop.f32.mrf.mxu0
        %v2056 = vadd.f32 %v2007, %v2055
        %2057 = vmatmul.bf16.gmra.mxu0 %v1674
        %v2058 = vpop.f32.mrf.mxu0
        %v2059 = vadd.f32 %v2010, %v2058
        %v2060 = vpop.f32.mrf.mxu0
        %v2061 = vadd.f32 %v2012, %v2060
        %2062 = vmatmul.bf16.gmra.mxu0 %v1676
        %v2063 = vpop.f32.mrf.mxu0
        %v2064 = vadd.f32 %v2015, %v2063
        %v2065 = vpop.f32.mrf.mxu0
        %v2066 = vadd.f32 %v2017, %v2065
        %2067 = vmatmul.bf16.gmra.mxu0 %v1678
        %v2068 = vpop.f32.mrf.mxu0
        %v2069 = vadd.f32 %v2020, %v2068
        %v2070 = vpop.f32.mrf.mxu0
        %v2071 = vadd.f32 %v2022, %v2070
        %2072 = vdwg.mxu0
        %v2073 = vpack.c.bf16 %v1938, %v1936
        %v2074 = vpack.c.bf16 %v2036, %v2034
        %v2075 = vpack.c.bf16 %v1943, %v1941
        %v2076 = vpack.c.bf16 %v2041, %v2039
        %v2077 = vpack.c.bf16 %v1948, %v1946
        %v2078 = vpack.c.bf16 %v2046, %v2044
        %v2079 = vpack.c.bf16 %v1953, %v1951
        %v2080 = vpack.c.bf16 %v2051, %v2049
        %v2081 = vpack.c.bf16 %v1958, %v1956
        %v2082 = vpack.c.bf16 %v2056, %v2054
        %v2083 = vpack.c.bf16 %v1963, %v1961
        %v2084 = vpack.c.bf16 %v2061, %v2059
        %v2085 = vpack.c.bf16 %v1968, %v1966
        %v2086 = vpack.c.bf16 %v2066, %v2064
        %v2087 = vpack.c.bf16 %v1973, %v1971
        %v2088 = vpack.c.bf16 %v2071, %v2069
        %v2089 = vld [vmem:[#allocation11] sm:$0xff]
        %v2090 = vld [vmem:[#allocation11 + $0x8] sm:$0xff]
        %v2091 = vld [vmem:[#allocation11 + $0x10] sm:$0xff]
        %v2092 = vld [vmem:[#allocation11 + $0x18] sm:$0xff]
        %v2093 = vld [vmem:[#allocation11 + $0x20] sm:$0xff]
        %v2094 = vld [vmem:[#allocation11 + $0x28] sm:$0xff]
        %v2095 = vld [vmem:[#allocation11 + $0x30] sm:$0xff]
        %v2096 = vld [vmem:[#allocation11 + $0x38] sm:$0xff]
        %v2097 = vld [vmem:[#allocation11 + $0x40] sm:$0xff]
        %v2098 = vld [vmem:[#allocation11 + $0x48] sm:$0xff]
        %v2099 = vld [vmem:[#allocation11 + $0x50] sm:$0xff]
        %v2100 = vld [vmem:[#allocation11 + $0x58] sm:$0xff]
        %v2101 = vld [vmem:[#allocation11 + $0x60] sm:$0xff]
        %v2102 = vld [vmem:[#allocation11 + $0x68] sm:$0xff]
        %v2103 = vld [vmem:[#allocation11 + $0x70] sm:$0xff]
        %v2104 = vld [vmem:[#allocation11 + $0x78] sm:$0xff]
        %v2105 = vld [vmem:[#allocation11 + $0x80] sm:$0xff]
        %v2106 = vld [vmem:[#allocation11 + $0x88] sm:$0xff]
        %v2107 = vld [vmem:[#allocation11 + $0x90] sm:$0xff]
        %v2108 = vld [vmem:[#allocation11 + $0x98] sm:$0xff]
        %v2109 = vld [vmem:[#allocation11 + $0xa0] sm:$0xff]
        %v2110 = vld [vmem:[#allocation11 + $0xa8] sm:$0xff]
        %v2111 = vld [vmem:[#allocation11 + $0xb0] sm:$0xff]
        %v2112 = vld [vmem:[#allocation11 + $0xb8] sm:$0xff]
        %v2113 = vld [vmem:[#allocation11 + $0xc0] sm:$0xff]
        %v2114 = vld [vmem:[#allocation11 + $0xc8] sm:$0xff]
        %v2115 = vld [vmem:[#allocation11 + $0xd0] sm:$0xff]
        %v2116 = vld [vmem:[#allocation11 + $0xd8] sm:$0xff]
        %v2117 = vld [vmem:[#allocation11 + $0xe0] sm:$0xff]
        %v2118 = vld [vmem:[#allocation11 + $0xe8] sm:$0xff]
        %v2119 = vld [vmem:[#allocation11 + $0xf0] sm:$0xff]
        %v2120 = vld [vmem:[#allocation11 + $0xf8] sm:$0xff]
        %v2121 = vld [vmem:[#allocation13] sm:$0x3]
        %v2123 = vperm.slane %v2121, 0
        %v2124 = vperm.slane %v2121, 1
        %v2159 = vunpack.c.l.b16 %v2089
        %v2160 = vunpack.c.h.b16 %v2089
        %v2161 = vunpack.c.l.b16 %v2090
        %v2162 = vunpack.c.h.b16 %v2090
        %v2163 = vunpack.c.l.b16 %v2091
        %v2164 = vunpack.c.h.b16 %v2091
        %v2165 = vunpack.c.l.b16 %v2092
        %v2166 = vunpack.c.h.b16 %v2092
        %v2167 = vunpack.c.l.b16 %v2093
        %v2168 = vunpack.c.h.b16 %v2093
        %v2169 = vunpack.c.l.b16 %v2094
        %v2170 = vunpack.c.h.b16 %v2094
        %v2171 = vunpack.c.l.b16 %v2095
        %v2172 = vunpack.c.h.b16 %v2095
        %v2173 = vunpack.c.l.b16 %v2096
        %v2174 = vunpack.c.h.b16 %v2096
        %v2175 = vunpack.c.l.b16 %v2097
        %v2176 = vunpack.c.h.b16 %v2097
        %v2177 = vunpack.c.l.b16 %v2098
        %v2178 = vunpack.c.h.b16 %v2098
        %v2179 = vunpack.c.l.b16 %v2099
        %v2180 = vunpack.c.h.b16 %v2099
        %v2181 = vunpack.c.l.b16 %v2100
        %v2182 = vunpack.c.h.b16 %v2100
        %v2183 = vunpack.c.l.b16 %v2101
        %v2184 = vunpack.c.h.b16 %v2101
        %v2185 = vunpack.c.l.b16 %v2102
        %v2186 = vunpack.c.h.b16 %v2102
        %v2187 = vunpack.c.l.b16 %v2103
        %v2188 = vunpack.c.h.b16 %v2103
        %v2189 = vunpack.c.l.b16 %v2104
        %v2190 = vunpack.c.h.b16 %v2104
        %v2191 = vunpack.c.l.b16 %v2105
        %v2192 = vunpack.c.h.b16 %v2105
        %v2193 = vunpack.c.l.b16 %v2106
        %v2194 = vunpack.c.h.b16 %v2106
        %v2195 = vunpack.c.l.b16 %v2107
        %v2196 = vunpack.c.h.b16 %v2107
        %v2197 = vunpack.c.l.b16 %v2108
        %v2198 = vunpack.c.h.b16 %v2108
        %v2199 = vunpack.c.l.b16 %v2109
        %v2200 = vunpack.c.h.b16 %v2109
        %v2201 = vunpack.c.l.b16 %v2110
        %v2202 = vunpack.c.h.b16 %v2110
        %v2203 = vunpack.c.l.b16 %v2111
        %v2204 = vunpack.c.h.b16 %v2111
        %v2205 = vunpack.c.l.b16 %v2112
        %v2206 = vunpack.c.h.b16 %v2112
        %v2207 = vunpack.c.l.b16 %v2113
        %v2208 = vunpack.c.h.b16 %v2113
        %v2209 = vunpack.c.l.b16 %v2114
        %v2210 = vunpack.c.h.b16 %v2114
        %v2211 = vunpack.c.l.b16 %v2115
        %v2212 = vunpack.c.h.b16 %v2115
        %v2213 = vunpack.c.l.b16 %v2116
        %v2214 = vunpack.c.h.b16 %v2116
        %v2215 = vunpack.c.l.b16 %v2117
        %v2216 = vunpack.c.h.b16 %v2117
        %v2217 = vunpack.c.l.b16 %v2118
        %v2218 = vunpack.c.h.b16 %v2118
        %v2219 = vunpack.c.l.b16 %v2119
        %v2220 = vunpack.c.h.b16 %v2119
        %v2221 = vunpack.c.l.b16 %v2120
        %v2222 = vunpack.c.h.b16 %v2120
        %v2223 = vpack.c.b16 %v2161, %v2159
        %v2224 = vpack.c.b16 %v2162, %v2160
        %v2225 = vpack.c.b16 %v2165, %v2163
        %v2226 = vpack.c.b16 %v2166, %v2164
        %v2227 = vpack.c.b16 %v2169, %v2167
        %v2228 = vpack.c.b16 %v2170, %v2168
        %v2229 = vpack.c.b16 %v2173, %v2171
        %v2230 = vpack.c.b16 %v2174, %v2172
        %v2231 = vpack.c.b16 %v2177, %v2175
        %v2232 = vpack.c.b16 %v2178, %v2176
        %v2233 = vpack.c.b16 %v2181, %v2179
        %v2234 = vpack.c.b16 %v2182, %v2180
        %v2235 = vpack.c.b16 %v2185, %v2183
        %v2236 = vpack.c.b16 %v2186, %v2184
        %v2237 = vpack.c.b16 %v2189, %v2187
        %v2238 = vpack.c.b16 %v2190, %v2188
        %v2239 = vpack.c.b16 %v2193, %v2191
        %v2240 = vpack.c.b16 %v2194, %v2192
        %v2241 = vpack.c.b16 %v2197, %v2195
        %v2242 = vpack.c.b16 %v2198, %v2196
        %v2243 = vpack.c.b16 %v2201, %v2199
        %v2244 = vpack.c.b16 %v2202, %v2200
        %v2245 = vpack.c.b16 %v2205, %v2203
        %v2246 = vpack.c.b16 %v2206, %v2204
        %v2247 = vpack.c.b16 %v2209, %v2207
        %v2248 = vpack.c.b16 %v2210, %v2208
        %v2249 = vpack.c.b16 %v2213, %v2211
        %v2250 = vpack.c.b16 %v2214, %v2212
        %v2251 = vpack.c.b16 %v2217, %v2215
        %v2252 = vpack.c.b16 %v2218, %v2216
        %v2253 = vpack.c.b16 %v2221, %v2219
        %v2254 = vpack.c.b16 %v2222, %v2220
        %2287 = vmatpush.bf16.msra.mxu0 %v2237
        %2288 = vmatpush.bf16.msra.mxu0 %v2235
        %2289 = vmatpush.bf16.msra.mxu0 %v2233
        %2290 = vmatpush.bf16.msra.mxu0 %v2231
        %2291 = vmatpush.bf16.msra.mxu0 %v2229
        %2292 = vmatpush.bf16.msra.mxu0 %v2227
        %2293 = vmatpush.bf16.msra.mxu0 %v2225
        %2294 = vmatpush.bf16.msra.mxu0 %v2223
        %2295 = vmatmul.bf16.gmra.mxu0 %v2073
        %v2296 = vpop.f32.mrf.mxu0
        %v2297 = vadd.f32 %v2123, %v2296
        %v2298 = vpop.f32.mrf.mxu0
        %v2299 = vadd.f32 %v2123, %v2298
        %2300 = vmatmul.bf16.gmra.mxu0 %v2075
        %v2301 = vpop.f32.mrf.mxu0
        %v2302 = vadd.f32 %v2123, %v2301
        %v2303 = vpop.f32.mrf.mxu0
        %v2304 = vadd.f32 %v2123, %v2303
        %2305 = vmatmul.bf16.gmra.mxu0 %v2077
        %v2306 = vpop.f32.mrf.mxu0
        %v2307 = vadd.f32 %v2123, %v2306
        %v2308 = vpop.f32.mrf.mxu0
        %v2309 = vadd.f32 %v2123, %v2308
        %2310 = vmatmul.bf16.gmra.mxu0 %v2079
        %v2311 = vpop.f32.mrf.mxu0
        %v2312 = vadd.f32 %v2123, %v2311
        %v2313 = vpop.f32.mrf.mxu0
        %v2314 = vadd.f32 %v2123, %v2313
        %2315 = vmatmul.bf16.gmra.mxu0 %v2081
        %v2316 = vpop.f32.mrf.mxu0
        %v2317 = vadd.f32 %v2123, %v2316
        %v2318 = vpop.f32.mrf.mxu0
        %v2319 = vadd.f32 %v2123, %v2318
        %2320 = vmatmul.bf16.gmra.mxu0 %v2083
        %v2321 = vpop.f32.mrf.mxu0
        %v2322 = vadd.f32 %v2123, %v2321
        %v2323 = vpop.f32.mrf.mxu0
        %v2324 = vadd.f32 %v2123, %v2323
        %2325 = vmatmul.bf16.gmra.mxu0 %v2085
        %v2326 = vpop.f32.mrf.mxu0
        %v2327 = vadd.f32 %v2123, %v2326
        %v2328 = vpop.f32.mrf.mxu0
        %v2329 = vadd.f32 %v2123, %v2328
        %2330 = vmatmul.bf16.gmra.mxu0 %v2087
        %v2331 = vpop.f32.mrf.mxu0
        %v2332 = vadd.f32 %v2123, %v2331
        %v2333 = vpop.f32.mrf.mxu0
        %v2334 = vadd.f32 %v2123, %v2333
        %2335 = vdwg.mxu0
        %2336 = vmatpush.bf16.msra.mxu0 %v2253
        %2337 = vmatpush.bf16.msra.mxu0 %v2251
        %2338 = vmatpush.bf16.msra.mxu0 %v2249
        %2339 = vmatpush.bf16.msra.mxu0 %v2247
        %2340 = vmatpush.bf16.msra.mxu0 %v2245
        %2341 = vmatpush.bf16.msra.mxu0 %v2243
        %2342 = vmatpush.bf16.msra.mxu0 %v2241
        %2343 = vmatpush.bf16.msra.mxu0 %v2239
        %2344 = vmatmul.bf16.gmra.mxu0 %v2074
        %v2345 = vpop.f32.mrf.mxu0
        %v2346 = vadd.f32 %v2297, %v2345
        %v2347 = vpop.f32.mrf.mxu0
        %v2348 = vadd.f32 %v2299, %v2347
        %2349 = vmatmul.bf16.gmra.mxu0 %v2076
        %v2350 = vpop.f32.mrf.mxu0
        %v2351 = vadd.f32 %v2302, %v2350
        %v2352 = vpop.f32.mrf.mxu0
        %v2353 = vadd.f32 %v2304, %v2352
        %2354 = vmatmul.bf16.gmra.mxu0 %v2078
        %v2355 = vpop.f32.mrf.mxu0
        %v2356 = vadd.f32 %v2307, %v2355
        %v2357 = vpop.f32.mrf.mxu0
        %v2358 = vadd.f32 %v2309, %v2357
        %2359 = vmatmul.bf16.gmra.mxu0 %v2080
        %v2360 = vpop.f32.mrf.mxu0
        %v2361 = vadd.f32 %v2312, %v2360
        %v2362 = vpop.f32.mrf.mxu0
        %v2363 = vadd.f32 %v2314, %v2362
        %2364 = vmatmul.bf16.gmra.mxu0 %v2082
        %v2365 = vpop.f32.mrf.mxu0
        %v2366 = vadd.f32 %v2317, %v2365
        %v2367 = vpop.f32.mrf.mxu0
        %v2368 = vadd.f32 %v2319, %v2367
        %2369 = vmatmul.bf16.gmra.mxu0 %v2084
        %v2370 = vpop.f32.mrf.mxu0
        %v2371 = vadd.f32 %v2322, %v2370
        %v2372 = vpop.f32.mrf.mxu0
        %v2373 = vadd.f32 %v2324, %v2372
        %2374 = vmatmul.bf16.gmra.mxu0 %v2086
        %v2375 = vpop.f32.mrf.mxu0
        %v2376 = vadd.f32 %v2327, %v2375
        %v2377 = vpop.f32.mrf.mxu0
        %v2378 = vadd.f32 %v2329, %v2377
        %2379 = vmatmul.bf16.gmra.mxu0 %v2088
        %v2380 = vpop.f32.mrf.mxu0
        %v2381 = vadd.f32 %v2332, %v2380
        %v2382 = vpop.f32.mrf.mxu0
        %v2383 = vadd.f32 %v2334, %v2382
        %2384 = vdwg.mxu0
        %2385 = vmatpush.bf16.msra.mxu0 %v2238
        %2386 = vmatpush.bf16.msra.mxu0 %v2236
        %2387 = vmatpush.bf16.msra.mxu0 %v2234
        %2388 = vmatpush.bf16.msra.mxu0 %v2232
        %2389 = vmatpush.bf16.msra.mxu0 %v2230
        %2390 = vmatpush.bf16.msra.mxu0 %v2228
        %2391 = vmatpush.bf16.msra.mxu0 %v2226
        %2392 = vmatpush.bf16.msra.mxu0 %v2224
        %2393 = vmatmul.bf16.gmra.mxu0 %v2073
        %v2394 = vpop.f32.mrf.mxu0
        %v2395 = vadd.f32 %v2124, %v2394
        %v2396 = vpop.f32.mrf.mxu0
        %v2397 = vadd.f32 %v2124, %v2396
        %2398 = vmatmul.bf16.gmra.mxu0 %v2075
        %v2399 = vpop.f32.mrf.mxu0
        %v2400 = vadd.f32 %v2124, %v2399
        %v2401 = vpop.f32.mrf.mxu0
        %v2402 = vadd.f32 %v2124, %v2401
        %2403 = vmatmul.bf16.gmra.mxu0 %v2077
        %v2404 = vpop.f32.mrf.mxu0
        %v2405 = vadd.f32 %v2124, %v2404
        %v2406 = vpop.f32.mrf.mxu0
        %v2407 = vadd.f32 %v2124, %v2406
        %2408 = vmatmul.bf16.gmra.mxu0 %v2079
        %v2409 = vpop.f32.mrf.mxu0
        %v2410 = vadd.f32 %v2124, %v2409
        %v2411 = vpop.f32.mrf.mxu0
        %v2412 = vadd.f32 %v2124, %v2411
        %2413 = vmatmul.bf16.gmra.mxu0 %v2081
        %v2414 = vpop.f32.mrf.mxu0
        %v2415 = vadd.f32 %v2124, %v2414
        %v2416 = vpop.f32.mrf.mxu0
        %v2417 = vadd.f32 %v2124, %v2416
        %2418 = vmatmul.bf16.gmra.mxu0 %v2083
        %v2419 = vpop.f32.mrf.mxu0
        %v2420 = vadd.f32 %v2124, %v2419
        %v2421 = vpop.f32.mrf.mxu0
        %v2422 = vadd.f32 %v2124, %v2421
        %2423 = vmatmul.bf16.gmra.mxu0 %v2085
        %v2424 = vpop.f32.mrf.mxu0
        %v2425 = vadd.f32 %v2124, %v2424
        %v2426 = vpop.f32.mrf.mxu0
        %v2427 = vadd.f32 %v2124, %v2426
        %2428 = vmatmul.bf16.gmra.mxu0 %v2087
        %v2429 = vpop.f32.mrf.mxu0
        %v2430 = vadd.f32 %v2124, %v2429
        %v2431 = vpop.f32.mrf.mxu0
        %v2432 = vadd.f32 %v2124, %v2431
        %2433 = vdwg.mxu0
        %2434 = vmatpush.bf16.msra.mxu0 %v2254
        %2435 = vmatpush.bf16.msra.mxu0 %v2252
        %2436 = vmatpush.bf16.msra.mxu0 %v2250
        %2437 = vmatpush.bf16.msra.mxu0 %v2248
        %2438 = vmatpush.bf16.msra.mxu0 %v2246
        %2439 = vmatpush.bf16.msra.mxu0 %v2244
        %2440 = vmatpush.bf16.msra.mxu0 %v2242
        %2441 = vmatpush.bf16.msra.mxu0 %v2240
        %2442 = vmatmul.bf16.gmra.mxu0 %v2074
        %v2443 = vpop.f32.mrf.mxu0
        %v2444 = vadd.f32 %v2395, %v2443
        %v2445 = vpop.f32.mrf.mxu0
        %v2446 = vadd.f32 %v2397, %v2445
        %2447 = vmatmul.bf16.gmra.mxu0 %v2076
        %v2448 = vpop.f32.mrf.mxu0
        %v2449 = vadd.f32 %v2400, %v2448
        %v2450 = vpop.f32.mrf.mxu0
        %v2451 = vadd.f32 %v2402, %v2450
        %2452 = vmatmul.bf16.gmra.mxu0 %v2078
        %v2453 = vpop.f32.mrf.mxu0
        %v2454 = vadd.f32 %v2405, %v2453
        %v2455 = vpop.f32.mrf.mxu0
        %v2456 = vadd.f32 %v2407, %v2455
        %2457 = vmatmul.bf16.gmra.mxu0 %v2080
        %v2458 = vpop.f32.mrf.mxu0
        %v2459 = vadd.f32 %v2410, %v2458
        %v2460 = vpop.f32.mrf.mxu0
        %v2461 = vadd.f32 %v2412, %v2460
        %2462 = vmatmul.bf16.gmra.mxu0 %v2082
        %v2463 = vpop.f32.mrf.mxu0
        %v2464 = vadd.f32 %v2415, %v2463
        %v2465 = vpop.f32.mrf.mxu0
        %v2466 = vadd.f32 %v2417, %v2465
        %2467 = vmatmul.bf16.gmra.mxu0 %v2084
        %v2468 = vpop.f32.mrf.mxu0
        %v2469 = vadd.f32 %v2420, %v2468
        %v2470 = vpop.f32.mrf.mxu0
        %v2471 = vadd.f32 %v2422, %v2470
        %2472 = vmatmul.bf16.gmra.mxu0 %v2086
        %v2473 = vpop.f32.mrf.mxu0
        %v2474 = vadd.f32 %v2425, %v2473
        %v2475 = vpop.f32.mrf.mxu0
        %v2476 = vadd.f32 %v2427, %v2475
        %2477 = vmatmul.bf16.gmra.mxu0 %v2088
        %v2478 = vpop.f32.mrf.mxu0
        %v2479 = vadd.f32 %v2430, %v2478
        %v2480 = vpop.f32.mrf.mxu0
        %v2481 = vadd.f32 %v2432, %v2480
        %2482 = vdwg.mxu0
        %v2483 = vmax.f32 %v2346, 0.0
        %v2484 = vmax.f32 %v2444, 0.0
        %v2485 = vmax.f32 %v2348, 0.0
        %v2486 = vmax.f32 %v2446, 0.0
        %v2487 = vmax.f32 %v2351, 0.0
        %v2488 = vmax.f32 %v2449, 0.0
        %v2489 = vmax.f32 %v2353, 0.0
        %v2490 = vmax.f32 %v2451, 0.0
        %v2491 = vmax.f32 %v2356, 0.0
        %v2492 = vmax.f32 %v2454, 0.0
        %v2493 = vmax.f32 %v2358, 0.0
        %v2494 = vmax.f32 %v2456, 0.0
        %v2495 = vmax.f32 %v2361, 0.0
        %v2496 = vmax.f32 %v2459, 0.0
        %v2497 = vmax.f32 %v2363, 0.0
        %v2498 = vmax.f32 %v2461, 0.0
        %v2499 = vmax.f32 %v2366, 0.0
        %v2500 = vmax.f32 %v2464, 0.0
        %v2501 = vmax.f32 %v2368, 0.0
        %v2502 = vmax.f32 %v2466, 0.0
        %v2503 = vmax.f32 %v2371, 0.0
        %v2504 = vmax.f32 %v2469, 0.0
        %v2505 = vmax.f32 %v2373, 0.0
        %v2506 = vmax.f32 %v2471, 0.0
        %v2507 = vmax.f32 %v2376, 0.0
        %v2508 = vmax.f32 %v2474, 0.0
        %v2509 = vmax.f32 %v2378, 0.0
        %v2510 = vmax.f32 %v2476, 0.0
        %v2511 = vmax.f32 %v2381, 0.0
        %v2512 = vmax.f32 %v2479, 0.0
        %v2513 = vmax.f32 %v2383, 0.0
        %v2514 = vmax.f32 %v2481, 0.0
        %v2515 = vpack.c.bf16 %v2485, %v2483
        %v2516 = vpack.c.bf16 %v2486, %v2484
        %v2517 = vpack.c.bf16 %v2489, %v2487
        %v2518 = vpack.c.bf16 %v2490, %v2488
        %v2519 = vpack.c.bf16 %v2493, %v2491
        %v2520 = vpack.c.bf16 %v2494, %v2492
        %v2521 = vpack.c.bf16 %v2497, %v2495
        %v2522 = vpack.c.bf16 %v2498, %v2496
        %v2523 = vpack.c.bf16 %v2501, %v2499
        %v2524 = vpack.c.bf16 %v2502, %v2500
        %v2525 = vpack.c.bf16 %v2505, %v2503
        %v2526 = vpack.c.bf16 %v2506, %v2504
        %v2527 = vpack.c.bf16 %v2509, %v2507
        %v2528 = vpack.c.bf16 %v2510, %v2508
        %v2529 = vpack.c.bf16 %v2513, %v2511
        %v2530 = vpack.c.bf16 %v2514, %v2512
        %v2531 = vld [vmem:[#allocation14] sm:$0xff]
        %v2532 = vld [vmem:[#allocation14 + $0x8] sm:$0xff]
        %v2533 = vld [vmem:[#allocation14 + $0x10] sm:$0xff]
        %v2534 = vld [vmem:[#allocation14 + $0x18] sm:$0xff]
        %v2535 = vld [vmem:[#allocation14 + $0x20] sm:$0xff]
        %v2536 = vld [vmem:[#allocation14 + $0x28] sm:$0xff]
        %v2537 = vld [vmem:[#allocation14 + $0x30] sm:$0xff]
        %v2538 = vld [vmem:[#allocation14 + $0x38] sm:$0xff]
        %v2539 = vld [vmem:[#allocation14 + $0x40] sm:$0xff]
        %v2540 = vld [vmem:[#allocation14 + $0x48] sm:$0xff]
        %v2541 = vld [vmem:[#allocation14 + $0x50] sm:$0xff]
        %v2542 = vld [vmem:[#allocation14 + $0x58] sm:$0xff]
        %v2543 = vld [vmem:[#allocation14 + $0x60] sm:$0xff]
        %v2544 = vld [vmem:[#allocation14 + $0x68] sm:$0xff]
        %v2545 = vld [vmem:[#allocation14 + $0x70] sm:$0xff]
        %v2546 = vld [vmem:[#allocation14 + $0x78] sm:$0xff]
        %v2547 = vld [vmem:[#allocation14 + $0x80] sm:$0xff]
        %v2548 = vld [vmem:[#allocation14 + $0x88] sm:$0xff]
        %v2549 = vld [vmem:[#allocation14 + $0x90] sm:$0xff]
        %v2550 = vld [vmem:[#allocation14 + $0x98] sm:$0xff]
        %v2551 = vld [vmem:[#allocation14 + $0xa0] sm:$0xff]
        %v2552 = vld [vmem:[#allocation14 + $0xa8] sm:$0xff]
        %v2553 = vld [vmem:[#allocation14 + $0xb0] sm:$0xff]
        %v2554 = vld [vmem:[#allocation14 + $0xb8] sm:$0xff]
        %v2555 = vld [vmem:[#allocation14 + $0xc0] sm:$0xff]
        %v2556 = vld [vmem:[#allocation14 + $0xc8] sm:$0xff]
        %v2557 = vld [vmem:[#allocation14 + $0xd0] sm:$0xff]
        %v2558 = vld [vmem:[#allocation14 + $0xd8] sm:$0xff]
        %v2559 = vld [vmem:[#allocation14 + $0xe0] sm:$0xff]
        %v2560 = vld [vmem:[#allocation14 + $0xe8] sm:$0xff]
        %v2561 = vld [vmem:[#allocation14 + $0xf0] sm:$0xff]
        %v2562 = vld [vmem:[#allocation14 + $0xf8] sm:$0xff]
        %v2563 = vld [vmem:[#allocation14 + $0x100] sm:$0xff]
        %v2564 = vld [vmem:[#allocation14 + $0x108] sm:$0xff]
        %v2565 = vld [vmem:[#allocation14 + $0x110] sm:$0xff]
        %v2566 = vld [vmem:[#allocation14 + $0x118] sm:$0xff]
        %v2567 = vld [vmem:[#allocation14 + $0x120] sm:$0xff]
        %v2568 = vld [vmem:[#allocation14 + $0x128] sm:$0xff]
        %v2569 = vld [vmem:[#allocation14 + $0x130] sm:$0xff]
        %v2570 = vld [vmem:[#allocation14 + $0x138] sm:$0xff]
        %v2571 = vld [vmem:[#allocation14 + $0x140] sm:$0xff]
        %v2572 = vld [vmem:[#allocation14 + $0x148] sm:$0xff]
        %v2573 = vld [vmem:[#allocation14 + $0x150] sm:$0xff]
        %v2574 = vld [vmem:[#allocation14 + $0x158] sm:$0xff]
        %v2575 = vld [vmem:[#allocation14 + $0x160] sm:$0xff]
        %v2576 = vld [vmem:[#allocation14 + $0x168] sm:$0xff]
        %v2577 = vld [vmem:[#allocation14 + $0x170] sm:$0xff]
        %v2578 = vld [vmem:[#allocation14 + $0x178] sm:$0xff]
        %v2579 = vld [vmem:[#allocation14 + $0x180] sm:$0xff]
        %v2580 = vld [vmem:[#allocation14 + $0x188] sm:$0xff]
        %v2581 = vld [vmem:[#allocation14 + $0x190] sm:$0xff]
        %v2582 = vld [vmem:[#allocation14 + $0x198] sm:$0xff]
        %v2583 = vld [vmem:[#allocation14 + $0x1a0] sm:$0xff]
        %v2584 = vld [vmem:[#allocation14 + $0x1a8] sm:$0xff]
        %v2585 = vld [vmem:[#allocation14 + $0x1b0] sm:$0xff]
        %v2586 = vld [vmem:[#allocation14 + $0x1b8] sm:$0xff]
        %v2587 = vld [vmem:[#allocation14 + $0x1c0] sm:$0xff]
        %v2588 = vld [vmem:[#allocation14 + $0x1c8] sm:$0xff]
        %v2589 = vld [vmem:[#allocation14 + $0x1d0] sm:$0xff]
        %v2590 = vld [vmem:[#allocation14 + $0x1d8] sm:$0xff]
        %v2591 = vld [vmem:[#allocation14 + $0x1e0] sm:$0xff]
        %v2592 = vld [vmem:[#allocation14 + $0x1e8] sm:$0xff]
        %v2593 = vld [vmem:[#allocation14 + $0x1f0] sm:$0xff]
        %v2594 = vld [vmem:[#allocation14 + $0x1f8] sm:$0xff]
        %v2595 = vld [vmem:[%s9] sm:$0xf]
        %v2597 = vperm.slane %v2595, 0
        %v2598 = vperm.slane %v2595, 1
        %v2599 = vperm.slane %v2595, 2
        %v2600 = vperm.slane %v2595, 3
        %v2669 = vunpack.c.l.b16 %v2531
        %v2670 = vunpack.c.h.b16 %v2531
        %v2671 = vunpack.c.l.b16 %v2532
        %v2672 = vunpack.c.h.b16 %v2532
        %v2673 = vunpack.c.l.b16 %v2533
        %v2674 = vunpack.c.h.b16 %v2533
        %v2675 = vunpack.c.l.b16 %v2534
        %v2676 = vunpack.c.h.b16 %v2534
        %v2677 = vunpack.c.l.b16 %v2535
        %v2678 = vunpack.c.h.b16 %v2535
        %v2679 = vunpack.c.l.b16 %v2536
        %v2680 = vunpack.c.h.b16 %v2536
        %v2681 = vunpack.c.l.b16 %v2537
        %v2682 = vunpack.c.h.b16 %v2537
        %v2683 = vunpack.c.l.b16 %v2538
        %v2684 = vunpack.c.h.b16 %v2538
        %v2685 = vunpack.c.l.b16 %v2539
        %v2686 = vunpack.c.h.b16 %v2539
        %v2687 = vunpack.c.l.b16 %v2540
        %v2688 = vunpack.c.h.b16 %v2540
        %v2689 = vunpack.c.l.b16 %v2541
        %v2690 = vunpack.c.h.b16 %v2541
        %v2691 = vunpack.c.l.b16 %v2542
        %v2692 = vunpack.c.h.b16 %v2542
        %v2693 = vunpack.c.l.b16 %v2543
        %v2694 = vunpack.c.h.b16 %v2543
        %v2695 = vunpack.c.l.b16 %v2544
        %v2696 = vunpack.c.h.b16 %v2544
        %v2697 = vunpack.c.l.b16 %v2545
        %v2698 = vunpack.c.h.b16 %v2545
        %v2699 = vunpack.c.l.b16 %v2546
        %v2700 = vunpack.c.h.b16 %v2546
        %v2701 = vunpack.c.l.b16 %v2547
        %v2702 = vunpack.c.h.b16 %v2547
        %v2703 = vunpack.c.l.b16 %v2548
        %v2704 = vunpack.c.h.b16 %v2548
        %v2705 = vunpack.c.l.b16 %v2549
        %v2706 = vunpack.c.h.b16 %v2549
        %v2707 = vunpack.c.l.b16 %v2550
        %v2708 = vunpack.c.h.b16 %v2550
        %v2709 = vunpack.c.l.b16 %v2551
        %v2710 = vunpack.c.h.b16 %v2551
        %v2711 = vunpack.c.l.b16 %v2552
        %v2712 = vunpack.c.h.b16 %v2552
        %v2713 = vunpack.c.l.b16 %v2553
        %v2714 = vunpack.c.h.b16 %v2553
        %v2715 = vunpack.c.l.b16 %v2554
        %v2716 = vunpack.c.h.b16 %v2554
        %v2717 = vunpack.c.l.b16 %v2555
        %v2718 = vunpack.c.h.b16 %v2555
        %v2719 = vunpack.c.l.b16 %v2556
        %v2720 = vunpack.c.h.b16 %v2556
        %v2721 = vunpack.c.l.b16 %v2557
        %v2722 = vunpack.c.h.b16 %v2557
        %v2723 = vunpack.c.l.b16 %v2558
        %v2724 = vunpack.c.h.b16 %v2558
        %v2725 = vunpack.c.l.b16 %v2559
        %v2726 = vunpack.c.h.b16 %v2559
        %v2727 = vunpack.c.l.b16 %v2560
        %v2728 = vunpack.c.h.b16 %v2560
        %v2729 = vunpack.c.l.b16 %v2561
        %v2730 = vunpack.c.h.b16 %v2561
        %v2731 = vunpack.c.l.b16 %v2562
        %v2732 = vunpack.c.h.b16 %v2562
        %v2733 = vunpack.c.l.b16 %v2563
        %v2734 = vunpack.c.h.b16 %v2563
        %v2735 = vunpack.c.l.b16 %v2564
        %v2736 = vunpack.c.h.b16 %v2564
        %v2737 = vunpack.c.l.b16 %v2565
        %v2738 = vunpack.c.h.b16 %v2565
        %v2739 = vunpack.c.l.b16 %v2566
        %v2740 = vunpack.c.h.b16 %v2566
        %v2741 = vunpack.c.l.b16 %v2567
        %v2742 = vunpack.c.h.b16 %v2567
        %v2743 = vunpack.c.l.b16 %v2568
        %v2744 = vunpack.c.h.b16 %v2568
        %v2745 = vunpack.c.l.b16 %v2569
        %v2746 = vunpack.c.h.b16 %v2569
        %v2747 = vunpack.c.l.b16 %v2570
        %v2748 = vunpack.c.h.b16 %v2570
        %v2749 = vunpack.c.l.b16 %v2571
        %v2750 = vunpack.c.h.b16 %v2571
        %v2751 = vunpack.c.l.b16 %v2572
        %v2752 = vunpack.c.h.b16 %v2572
        %v2753 = vunpack.c.l.b16 %v2573
        %v2754 = vunpack.c.h.b16 %v2573
        %v2755 = vunpack.c.l.b16 %v2574
        %v2756 = vunpack.c.h.b16 %v2574
        %v2757 = vunpack.c.l.b16 %v2575
        %v2758 = vunpack.c.h.b16 %v2575
        %v2759 = vunpack.c.l.b16 %v2576
        %v2760 = vunpack.c.h.b16 %v2576
        %v2761 = vunpack.c.l.b16 %v2577
        %v2762 = vunpack.c.h.b16 %v2577
        %v2763 = vunpack.c.l.b16 %v2578
        %v2764 = vunpack.c.h.b16 %v2578
        %v2765 = vunpack.c.l.b16 %v2579
        %v2766 = vunpack.c.h.b16 %v2579
        %v2767 = vunpack.c.l.b16 %v2580
        %v2768 = vunpack.c.h.b16 %v2580
        %v2769 = vunpack.c.l.b16 %v2581
        %v2770 = vunpack.c.h.b16 %v2581
        %v2771 = vunpack.c.l.b16 %v2582
        %v2772 = vunpack.c.h.b16 %v2582
        %v2773 = vunpack.c.l.b16 %v2583
        %v2774 = vunpack.c.h.b16 %v2583
        %v2775 = vunpack.c.l.b16 %v2584
        %v2776 = vunpack.c.h.b16 %v2584
        %v2777 = vunpack.c.l.b16 %v2585
        %v2778 = vunpack.c.h.b16 %v2585
        %v2779 = vunpack.c.l.b16 %v2586
        %v2780 = vunpack.c.h.b16 %v2586
        %v2781 = vunpack.c.l.b16 %v2587
        %v2782 = vunpack.c.h.b16 %v2587
        %v2783 = vunpack.c.l.b16 %v2588
        %v2784 = vunpack.c.h.b16 %v2588
        %v2785 = vunpack.c.l.b16 %v2589
        %v2786 = vunpack.c.h.b16 %v2589
        %v2787 = vunpack.c.l.b16 %v2590
        %v2788 = vunpack.c.h.b16 %v2590
        %v2789 = vunpack.c.l.b16 %v2591
        %v2790 = vunpack.c.h.b16 %v2591
        %v2791 = vunpack.c.l.b16 %v2592
        %v2792 = vunpack.c.h.b16 %v2592
        %v2793 = vunpack.c.l.b16 %v2593
        %v2794 = vunpack.c.h.b16 %v2593
        %v2795 = vunpack.c.l.b16 %v2594
        %v2796 = vunpack.c.h.b16 %v2594
        %v2797 = vpack.c.b16 %v2673, %v2669
        %v2798 = vpack.c.b16 %v2674, %v2670
        %v2799 = vpack.c.b16 %v2675, %v2671
        %v2800 = vpack.c.b16 %v2676, %v2672
        %v2801 = vpack.c.b16 %v2681, %v2677
        %v2802 = vpack.c.b16 %v2682, %v2678
        %v2803 = vpack.c.b16 %v2683, %v2679
        %v2804 = vpack.c.b16 %v2684, %v2680
        %v2805 = vpack.c.b16 %v2689, %v2685
        %v2806 = vpack.c.b16 %v2690, %v2686
        %v2807 = vpack.c.b16 %v2691, %v2687
        %v2808 = vpack.c.b16 %v2692, %v2688
        %v2809 = vpack.c.b16 %v2697, %v2693
        %v2810 = vpack.c.b16 %v2698, %v2694
        %v2811 = vpack.c.b16 %v2699, %v2695
        %v2812 = vpack.c.b16 %v2700, %v2696
        %v2813 = vpack.c.b16 %v2705, %v2701
        %v2814 = vpack.c.b16 %v2706, %v2702
        %v2815 = vpack.c.b16 %v2707, %v2703
        %v2816 = vpack.c.b16 %v2708, %v2704
        %v2817 = vpack.c.b16 %v2713, %v2709
        %v2818 = vpack.c.b16 %v2714, %v2710
        %v2819 = vpack.c.b16 %v2715, %v2711
        %v2820 = vpack.c.b16 %v2716, %v2712
        %v2821 = vpack.c.b16 %v2721, %v2717
        %v2822 = vpack.c.b16 %v2722, %v2718
        %v2823 = vpack.c.b16 %v2723, %v2719
        %v2824 = vpack.c.b16 %v2724, %v2720
        %v2825 = vpack.c.b16 %v2729, %v2725
        %v2826 = vpack.c.b16 %v2730, %v2726
        %v2827 = vpack.c.b16 %v2731, %v2727
        %v2828 = vpack.c.b16 %v2732, %v2728
        %v2829 = vpack.c.b16 %v2737, %v2733
        %v2830 = vpack.c.b16 %v2738, %v2734
        %v2831 = vpack.c.b16 %v2739, %v2735
        %v2832 = vpack.c.b16 %v2740, %v2736
        %v2833 = vpack.c.b16 %v2745, %v2741
        %v2834 = vpack.c.b16 %v2746, %v2742
        %v2835 = vpack.c.b16 %v2747, %v2743
        %v2836 = vpack.c.b16 %v2748, %v2744
        %v2837 = vpack.c.b16 %v2753, %v2749
        %v2838 = vpack.c.b16 %v2754, %v2750
        %v2839 = vpack.c.b16 %v2755, %v2751
        %v2840 = vpack.c.b16 %v2756, %v2752
        %v2841 = vpack.c.b16 %v2761, %v2757
        %v2842 = vpack.c.b16 %v2762, %v2758
        %v2843 = vpack.c.b16 %v2763, %v2759
        %v2844 = vpack.c.b16 %v2764, %v2760
        %v2845 = vpack.c.b16 %v2769, %v2765
        %v2846 = vpack.c.b16 %v2770, %v2766
        %v2847 = vpack.c.b16 %v2771, %v2767
        %v2848 = vpack.c.b16 %v2772, %v2768
        %v2849 = vpack.c.b16 %v2777, %v2773
        %v2850 = vpack.c.b16 %v2778, %v2774
        %v2851 = vpack.c.b16 %v2779, %v2775
        %v2852 = vpack.c.b16 %v2780, %v2776
        %v2853 = vpack.c.b16 %v2785, %v2781
        %v2854 = vpack.c.b16 %v2786, %v2782
        %v2855 = vpack.c.b16 %v2787, %v2783
        %v2856 = vpack.c.b16 %v2788, %v2784
        %v2857 = vpack.c.b16 %v2793, %v2789
        %v2858 = vpack.c.b16 %v2794, %v2790
        %v2859 = vpack.c.b16 %v2795, %v2791
        %v2860 = vpack.c.b16 %v2796, %v2792
        %2925 = vmatpush.bf16.msra.mxu0 %v2825
        %2926 = vmatpush.bf16.msra.mxu0 %v2821
        %2927 = vmatpush.bf16.msra.mxu0 %v2817
        %2928 = vmatpush.bf16.msra.mxu0 %v2813
        %2929 = vmatpush.bf16.msra.mxu0 %v2809
        %2930 = vmatpush.bf16.msra.mxu0 %v2805
        %2931 = vmatpush.bf16.msra.mxu0 %v2801
        %2932 = vmatpush.bf16.msra.mxu0 %v2797
        %2933 = vmatmul.bf16.gmra.mxu0 %v2515
        %v2934 = vpop.f32.mrf.mxu0
        %v2935 = vadd.f32 %v2597, %v2934
        %v2936 = vpop.f32.mrf.mxu0
        %v2937 = vadd.f32 %v2597, %v2936
        %2938 = vmatmul.bf16.gmra.mxu0 %v2517
        %v2939 = vpop.f32.mrf.mxu0
        %v2940 = vadd.f32 %v2597, %v2939
        %v2941 = vpop.f32.mrf.mxu0
        %v2942 = vadd.f32 %v2597, %v2941
        %2943 = vmatmul.bf16.gmra.mxu0 %v2519
        %v2944 = vpop.f32.mrf.mxu0
        %v2945 = vadd.f32 %v2597, %v2944
        %v2946 = vpop.f32.mrf.mxu0
        %v2947 = vadd.f32 %v2597, %v2946
        %2948 = vmatmul.bf16.gmra.mxu0 %v2521
        %v2949 = vpop.f32.mrf.mxu0
        %v2950 = vadd.f32 %v2597, %v2949
        %v2951 = vpop.f32.mrf.mxu0
        %v2952 = vadd.f32 %v2597, %v2951
        %2953 = vmatmul.bf16.gmra.mxu0 %v2523
        %v2954 = vpop.f32.mrf.mxu0
        %v2955 = vadd.f32 %v2597, %v2954
        %v2956 = vpop.f32.mrf.mxu0
        %v2957 = vadd.f32 %v2597, %v2956
        %2958 = vmatmul.bf16.gmra.mxu0 %v2525
        %v2959 = vpop.f32.mrf.mxu0
        %v2960 = vadd.f32 %v2597, %v2959
        %v2961 = vpop.f32.mrf.mxu0
        %v2962 = vadd.f32 %v2597, %v2961
        %2963 = vmatmul.bf16.gmra.mxu0 %v2527
        %v2964 = vpop.f32.mrf.mxu0
        %v2965 = vadd.f32 %v2597, %v2964
        %v2966 = vpop.f32.mrf.mxu0
        %v2967 = vadd.f32 %v2597, %v2966
        %2968 = vmatmul.bf16.gmra.mxu0 %v2529
        %v2969 = vpop.f32.mrf.mxu0
        %v2970 = vadd.f32 %v2597, %v2969
        %v2971 = vpop.f32.mrf.mxu0
        %v2972 = vadd.f32 %v2597, %v2971
        %2973 = vdwg.mxu0
        %2974 = vmatpush.bf16.msra.mxu0 %v2857
        %2975 = vmatpush.bf16.msra.mxu0 %v2853
        %2976 = vmatpush.bf16.msra.mxu0 %v2849
        %2977 = vmatpush.bf16.msra.mxu0 %v2845
        %2978 = vmatpush.bf16.msra.mxu0 %v2841
        %2979 = vmatpush.bf16.msra.mxu0 %v2837
        %2980 = vmatpush.bf16.msra.mxu0 %v2833
        %2981 = vmatpush.bf16.msra.mxu0 %v2829
        %2982 = vmatmul.bf16.gmra.mxu0 %v2516
        %v2983 = vpop.f32.mrf.mxu0
        %v2984 = vadd.f32 %v2935, %v2983
        %v2985 = vpop.f32.mrf.mxu0
        %v2986 = vadd.f32 %v2937, %v2985
        %2987 = vmatmul.bf16.gmra.mxu0 %v2518
        %v2988 = vpop.f32.mrf.mxu0
        %v2989 = vadd.f32 %v2940, %v2988
        %v2990 = vpop.f32.mrf.mxu0
        %v2991 = vadd.f32 %v2942, %v2990
        %2992 = vmatmul.bf16.gmra.mxu0 %v2520
        %v2993 = vpop.f32.mrf.mxu0
        %v2994 = vadd.f32 %v2945, %v2993
        %v2995 = vpop.f32.mrf.mxu0
        %v2996 = vadd.f32 %v2947, %v2995
        %2997 = vmatmul.bf16.gmra.mxu0 %v2522
        %v2998 = vpop.f32.mrf.mxu0
        %v2999 = vadd.f32 %v2950, %v2998
        %v3000 = vpop.f32.mrf.mxu0
        %v3001 = vadd.f32 %v2952, %v3000
        %3002 = vmatmul.bf16.gmra.mxu0 %v2524
        %v3003 = vpop.f32.mrf.mxu0
        %v3004 = vadd.f32 %v2955, %v3003
        %v3005 = vpop.f32.mrf.mxu0
        %v3006 = vadd.f32 %v2957, %v3005
        %3007 = vmatmul.bf16.gmra.mxu0 %v2526
        %v3008 = vpop.f32.mrf.mxu0
        %v3009 = vadd.f32 %v2960, %v3008
        %v3010 = vpop.f32.mrf.mxu0
        %v3011 = vadd.f32 %v2962, %v3010
        %3012 = vmatmul.bf16.gmra.mxu0 %v2528
        %v3013 = vpop.f32.mrf.mxu0
        %v3014 = vadd.f32 %v2965, %v3013
        %v3015 = vpop.f32.mrf.mxu0
        %v3016 = vadd.f32 %v2967, %v3015
        %3017 = vmatmul.bf16.gmra.mxu0 %v2530
        %v3018 = vpop.f32.mrf.mxu0
        %v3019 = vadd.f32 %v2970, %v3018
        %v3020 = vpop.f32.mrf.mxu0
        %v3021 = vadd.f32 %v2972, %v3020
        %3022 = vdwg.mxu0
        %3023 = vmatpush.bf16.msra.mxu0 %v2826
        %3024 = vmatpush.bf16.msra.mxu0 %v2822
        %3025 = vmatpush.bf16.msra.mxu0 %v2818
        %3026 = vmatpush.bf16.msra.mxu0 %v2814
        %3027 = vmatpush.bf16.msra.mxu0 %v2810
        %3028 = vmatpush.bf16.msra.mxu0 %v2806
        %3029 = vmatpush.bf16.msra.mxu0 %v2802
        %3030 = vmatpush.bf16.msra.mxu0 %v2798
        %3031 = vmatmul.bf16.gmra.mxu0 %v2515
        %v3032 = vpop.f32.mrf.mxu0
        %v3033 = vadd.f32 %v2598, %v3032
        %v3034 = vpop.f32.mrf.mxu0
        %v3035 = vadd.f32 %v2598, %v3034
        %3036 = vmatmul.bf16.gmra.mxu0 %v2517
        %v3037 = vpop.f32.mrf.mxu0
        %v3038 = vadd.f32 %v2598, %v3037
        %v3039 = vpop.f32.mrf.mxu0
        %v3040 = vadd.f32 %v2598, %v3039
        %3041 = vmatmul.bf16.gmra.mxu0 %v2519
        %v3042 = vpop.f32.mrf.mxu0
        %v3043 = vadd.f32 %v2598, %v3042
        %v3044 = vpop.f32.mrf.mxu0
        %v3045 = vadd.f32 %v2598, %v3044
        %3046 = vmatmul.bf16.gmra.mxu0 %v2521
        %v3047 = vpop.f32.mrf.mxu0
        %v3048 = vadd.f32 %v2598, %v3047
        %v3049 = vpop.f32.mrf.mxu0
        %v3050 = vadd.f32 %v2598, %v3049
        %3051 = vmatmul.bf16.gmra.mxu0 %v2523
        %v3052 = vpop.f32.mrf.mxu0
        %v3053 = vadd.f32 %v2598, %v3052
        %v3054 = vpop.f32.mrf.mxu0
        %v3055 = vadd.f32 %v2598, %v3054
        %3056 = vmatmul.bf16.gmra.mxu0 %v2525
        %v3057 = vpop.f32.mrf.mxu0
        %v3058 = vadd.f32 %v2598, %v3057
        %v3059 = vpop.f32.mrf.mxu0
        %v3060 = vadd.f32 %v2598, %v3059
        %3061 = vmatmul.bf16.gmra.mxu0 %v2527
        %v3062 = vpop.f32.mrf.mxu0
        %v3063 = vadd.f32 %v2598, %v3062
        %v3064 = vpop.f32.mrf.mxu0
        %v3065 = vadd.f32 %v2598, %v3064
        %3066 = vmatmul.bf16.gmra.mxu0 %v2529
        %v3067 = vpop.f32.mrf.mxu0
        %v3068 = vadd.f32 %v2598, %v3067
        %v3069 = vpop.f32.mrf.mxu0
        %v3070 = vadd.f32 %v2598, %v3069
        %3071 = vdwg.mxu0
        %3072 = vmatpush.bf16.msra.mxu0 %v2858
        %3073 = vmatpush.bf16.msra.mxu0 %v2854
        %3074 = vmatpush.bf16.msra.mxu0 %v2850
        %3075 = vmatpush.bf16.msra.mxu0 %v2846
        %3076 = vmatpush.bf16.msra.mxu0 %v2842
        %3077 = vmatpush.bf16.msra.mxu0 %v2838
        %3078 = vmatpush.bf16.msra.mxu0 %v2834
        %3079 = vmatpush.bf16.msra.mxu0 %v2830
        %3080 = vmatmul.bf16.gmra.mxu0 %v2516
        %v3081 = vpop.f32.mrf.mxu0
        %v3082 = vadd.f32 %v3033, %v3081
        %v3083 = vpop.f32.mrf.mxu0
        %v3084 = vadd.f32 %v3035, %v3083
        %3085 = vmatmul.bf16.gmra.mxu0 %v2518
        %v3086 = vpop.f32.mrf.mxu0
        %v3087 = vadd.f32 %v3038, %v3086
        %v3088 = vpop.f32.mrf.mxu0
        %v3089 = vadd.f32 %v3040, %v3088
        %3090 = vmatmul.bf16.gmra.mxu0 %v2520
        %v3091 = vpop.f32.mrf.mxu0
        %v3092 = vadd.f32 %v3043, %v3091
        %v3093 = vpop.f32.mrf.mxu0
        %v3094 = vadd.f32 %v3045, %v3093
        %3095 = vmatmul.bf16.gmra.mxu0 %v2522
        %v3096 = vpop.f32.mrf.mxu0
        %v3097 = vadd.f32 %v3048, %v3096
        %v3098 = vpop.f32.mrf.mxu0
        %v3099 = vadd.f32 %v3050, %v3098
        %3100 = vmatmul.bf16.gmra.mxu0 %v2524
        %v3101 = vpop.f32.mrf.mxu0
        %v3102 = vadd.f32 %v3053, %v3101
        %v3103 = vpop.f32.mrf.mxu0
        %v3104 = vadd.f32 %v3055, %v3103
        %3105 = vmatmul.bf16.gmra.mxu0 %v2526
        %v3106 = vpop.f32.mrf.mxu0
        %v3107 = vadd.f32 %v3058, %v3106
        %v3108 = vpop.f32.mrf.mxu0
        %v3109 = vadd.f32 %v3060, %v3108
        %3110 = vmatmul.bf16.gmra.mxu0 %v2528
        %v3111 = vpop.f32.mrf.mxu0
        %v3112 = vadd.f32 %v3063, %v3111
        %v3113 = vpop.f32.mrf.mxu0
        %v3114 = vadd.f32 %v3065, %v3113
        %3115 = vmatmul.bf16.gmra.mxu0 %v2530
        %v3116 = vpop.f32.mrf.mxu0
        %v3117 = vadd.f32 %v3068, %v3116
        %v3118 = vpop.f32.mrf.mxu0
        %v3119 = vadd.f32 %v3070, %v3118
        %3120 = vdwg.mxu0
        %3121 = vmatpush.bf16.msra.mxu0 %v2827
        %3122 = vmatpush.bf16.msra.mxu0 %v2823
        %3123 = vmatpush.bf16.msra.mxu0 %v2819
        %3124 = vmatpush.bf16.msra.mxu0 %v2815
        %3125 = vmatpush.bf16.msra.mxu0 %v2811
        %3126 = vmatpush.bf16.msra.mxu0 %v2807
        %3127 = vmatpush.bf16.msra.mxu0 %v2803
        %3128 = vmatpush.bf16.msra.mxu0 %v2799
        %3129 = vmatmul.bf16.gmra.mxu0 %v2515
        %v3130 = vpop.f32.mrf.mxu0
        %v3131 = vadd.f32 %v2599, %v3130
        %v3132 = vpop.f32.mrf.mxu0
        %v3133 = vadd.f32 %v2599, %v3132
        %3134 = vmatmul.bf16.gmra.mxu0 %v2517
        %v3135 = vpop.f32.mrf.mxu0
        %v3136 = vadd.f32 %v2599, %v3135
        %v3137 = vpop.f32.mrf.mxu0
        %v3138 = vadd.f32 %v2599, %v3137
        %3139 = vmatmul.bf16.gmra.mxu0 %v2519
        %v3140 = vpop.f32.mrf.mxu0
        %v3141 = vadd.f32 %v2599, %v3140
        %v3142 = vpop.f32.mrf.mxu0
        %v3143 = vadd.f32 %v2599, %v3142
        %3144 = vmatmul.bf16.gmra.mxu0 %v2521
        %v3145 = vpop.f32.mrf.mxu0
        %v3146 = vadd.f32 %v2599, %v3145
        %v3147 = vpop.f32.mrf.mxu0
        %v3148 = vadd.f32 %v2599, %v3147
        %3149 = vmatmul.bf16.gmra.mxu0 %v2523
        %v3150 = vpop.f32.mrf.mxu0
        %v3151 = vadd.f32 %v2599, %v3150
        %v3152 = vpop.f32.mrf.mxu0
        %v3153 = vadd.f32 %v2599, %v3152
        %3154 = vmatmul.bf16.gmra.mxu0 %v2525
        %v3155 = vpop.f32.mrf.mxu0
        %v3156 = vadd.f32 %v2599, %v3155
        %v3157 = vpop.f32.mrf.mxu0
        %v3158 = vadd.f32 %v2599, %v3157
        %3159 = vmatmul.bf16.gmra.mxu0 %v2527
        %v3160 = vpop.f32.mrf.mxu0
        %v3161 = vadd.f32 %v2599, %v3160
        %v3162 = vpop.f32.mrf.mxu0
        %v3163 = vadd.f32 %v2599, %v3162
        %3164 = vmatmul.bf16.gmra.mxu0 %v2529
        %v3165 = vpop.f32.mrf.mxu0
        %v3166 = vadd.f32 %v2599, %v3165
        %v3167 = vpop.f32.mrf.mxu0
        %v3168 = vadd.f32 %v2599, %v3167
        %3169 = vdwg.mxu0
        %3170 = vmatpush.bf16.msra.mxu0 %v2859
        %3171 = vmatpush.bf16.msra.mxu0 %v2855
        %3172 = vmatpush.bf16.msra.mxu0 %v2851
        %3173 = vmatpush.bf16.msra.mxu0 %v2847
        %3174 = vmatpush.bf16.msra.mxu0 %v2843
        %3175 = vmatpush.bf16.msra.mxu0 %v2839
        %3176 = vmatpush.bf16.msra.mxu0 %v2835
        %3177 = vmatpush.bf16.msra.mxu0 %v2831
        %3178 = vmatmul.bf16.gmra.mxu0 %v2516
        %v3179 = vpop.f32.mrf.mxu0
        %v3180 = vadd.f32 %v3131, %v3179
        %v3181 = vpop.f32.mrf.mxu0
        %v3182 = vadd.f32 %v3133, %v3181
        %3183 = vmatmul.bf16.gmra.mxu0 %v2518
        %v3184 = vpop.f32.mrf.mxu0
        %v3185 = vadd.f32 %v3136, %v3184
        %v3186 = vpop.f32.mrf.mxu0
        %v3187 = vadd.f32 %v3138, %v3186
        %3188 = vmatmul.bf16.gmra.mxu0 %v2520
        %v3189 = vpop.f32.mrf.mxu0
        %v3190 = vadd.f32 %v3141, %v3189
        %v3191 = vpop.f32.mrf.mxu0
        %v3192 = vadd.f32 %v3143, %v3191
        %3193 = vmatmul.bf16.gmra.mxu0 %v2522
        %v3194 = vpop.f32.mrf.mxu0
        %v3195 = vadd.f32 %v3146, %v3194
        %v3196 = vpop.f32.mrf.mxu0
        %v3197 = vadd.f32 %v3148, %v3196
        %3198 = vmatmul.bf16.gmra.mxu0 %v2524
        %v3199 = vpop.f32.mrf.mxu0
        %v3200 = vadd.f32 %v3151, %v3199
        %v3201 = vpop.f32.mrf.mxu0
        %v3202 = vadd.f32 %v3153, %v3201
        %3203 = vmatmul.bf16.gmra.mxu0 %v2526
        %v3204 = vpop.f32.mrf.mxu0
        %v3205 = vadd.f32 %v3156, %v3204
        %v3206 = vpop.f32.mrf.mxu0
        %v3207 = vadd.f32 %v3158, %v3206
        %3208 = vmatmul.bf16.gmra.mxu0 %v2528
        %v3209 = vpop.f32.mrf.mxu0
        %v3210 = vadd.f32 %v3161, %v3209
        %v3211 = vpop.f32.mrf.mxu0
        %v3212 = vadd.f32 %v3163, %v3211
        %3213 = vmatmul.bf16.gmra.mxu0 %v2530
        %v3214 = vpop.f32.mrf.mxu0
        %v3215 = vadd.f32 %v3166, %v3214
        %v3216 = vpop.f32.mrf.mxu0
        %v3217 = vadd.f32 %v3168, %v3216
        %3218 = vdwg.mxu0
        %3219 = vmatpush.bf16.msra.mxu0 %v2828
        %3220 = vmatpush.bf16.msra.mxu0 %v2824
        %3221 = vmatpush.bf16.msra.mxu0 %v2820
        %3222 = vmatpush.bf16.msra.mxu0 %v2816
        %3223 = vmatpush.bf16.msra.mxu0 %v2812
        %3224 = vmatpush.bf16.msra.mxu0 %v2808
        %3225 = vmatpush.bf16.msra.mxu0 %v2804
        %3226 = vmatpush.bf16.msra.mxu0 %v2800
        %3227 = vmatmul.bf16.gmra.mxu0 %v2515
        %v3228 = vpop.f32.mrf.mxu0
        %v3229 = vadd.f32 %v2600, %v3228
        %v3230 = vpop.f32.mrf.mxu0
        %v3231 = vadd.f32 %v2600, %v3230
        %3232 = vmatmul.bf16.gmra.mxu0 %v2517
        %v3233 = vpop.f32.mrf.mxu0
        %v3234 = vadd.f32 %v2600, %v3233
        %v3235 = vpop.f32.mrf.mxu0
        %v3236 = vadd.f32 %v2600, %v3235
        %3237 = vmatmul.bf16.gmra.mxu0 %v2519
        %v3238 = vpop.f32.mrf.mxu0
        %v3239 = vadd.f32 %v2600, %v3238
        %v3240 = vpop.f32.mrf.mxu0
        %v3241 = vadd.f32 %v2600, %v3240
        %3242 = vmatmul.bf16.gmra.mxu0 %v2521
        %v3243 = vpop.f32.mrf.mxu0
        %v3244 = vadd.f32 %v2600, %v3243
        %v3245 = vpop.f32.mrf.mxu0
        %v3246 = vadd.f32 %v2600, %v3245
        %3247 = vmatmul.bf16.gmra.mxu0 %v2523
        %v3248 = vpop.f32.mrf.mxu0
        %v3249 = vadd.f32 %v2600, %v3248
        %v3250 = vpop.f32.mrf.mxu0
        %v3251 = vadd.f32 %v2600, %v3250
        %3252 = vmatmul.bf16.gmra.mxu0 %v2525
        %v3253 = vpop.f32.mrf.mxu0
        %v3254 = vadd.f32 %v2600, %v3253
        %v3255 = vpop.f32.mrf.mxu0
        %v3256 = vadd.f32 %v2600, %v3255
        %3257 = vmatmul.bf16.gmra.mxu0 %v2527
        %v3258 = vpop.f32.mrf.mxu0
        %v3259 = vadd.f32 %v2600, %v3258
        %v3260 = vpop.f32.mrf.mxu0
        %v3261 = vadd.f32 %v2600, %v3260
        %3262 = vmatmul.bf16.gmra.mxu0 %v2529
        %v3263 = vpop.f32.mrf.mxu0
        %v3264 = vadd.f32 %v2600, %v3263
        %v3265 = vpop.f32.mrf.mxu0
        %v3266 = vadd.f32 %v2600, %v3265
        %3267 = vdwg.mxu0
        %3268 = vmatpush.bf16.msra.mxu0 %v2860
        %3269 = vmatpush.bf16.msra.mxu0 %v2856
        %3270 = vmatpush.bf16.msra.mxu0 %v2852
        %3271 = vmatpush.bf16.msra.mxu0 %v2848
        %3272 = vmatpush.bf16.msra.mxu0 %v2844
        %3273 = vmatpush.bf16.msra.mxu0 %v2840
        %3274 = vmatpush.bf16.msra.mxu0 %v2836
        %3275 = vmatpush.bf16.msra.mxu0 %v2832
        %3276 = vmatmul.bf16.gmra.mxu0 %v2516
        %v3277 = vpop.f32.mrf.mxu0
        %v3278 = vadd.f32 %v3229, %v3277
        %v3279 = vpop.f32.mrf.mxu0
        %v3280 = vadd.f32 %v3231, %v3279
        %3281 = vmatmul.bf16.gmra.mxu0 %v2518
        %v3282 = vpop.f32.mrf.mxu0
        %v3283 = vadd.f32 %v3234, %v3282
        %v3284 = vpop.f32.mrf.mxu0
        %v3285 = vadd.f32 %v3236, %v3284
        %3286 = vmatmul.bf16.gmra.mxu0 %v2520
        %v3287 = vpop.f32.mrf.mxu0
        %v3288 = vadd.f32 %v3239, %v3287
        %v3289 = vpop.f32.mrf.mxu0
        %v3290 = vadd.f32 %v3241, %v3289
        %3291 = vmatmul.bf16.gmra.mxu0 %v2522
        %v3292 = vpop.f32.mrf.mxu0
        %v3293 = vadd.f32 %v3244, %v3292
        %v3294 = vpop.f32.mrf.mxu0
        %v3295 = vadd.f32 %v3246, %v3294
        %3296 = vmatmul.bf16.gmra.mxu0 %v2524
        %v3297 = vpop.f32.mrf.mxu0
        %v3298 = vadd.f32 %v3249, %v3297
        %v3299 = vpop.f32.mrf.mxu0
        %v3300 = vadd.f32 %v3251, %v3299
        %3301 = vmatmul.bf16.gmra.mxu0 %v2526
        %v3302 = vpop.f32.mrf.mxu0
        %v3303 = vadd.f32 %v3254, %v3302
        %v3304 = vpop.f32.mrf.mxu0
        %v3305 = vadd.f32 %v3256, %v3304
        %3306 = vmatmul.bf16.gmra.mxu0 %v2528
        %v3307 = vpop.f32.mrf.mxu0
        %v3308 = vadd.f32 %v3259, %v3307
        %v3309 = vpop.f32.mrf.mxu0
        %v3310 = vadd.f32 %v3261, %v3309
        %3311 = vmatmul.bf16.gmra.mxu0 %v2530
        %v3312 = vpop.f32.mrf.mxu0
        %v3313 = vadd.f32 %v3264, %v3312
        %v3314 = vpop.f32.mrf.mxu0
        %v3315 = vadd.f32 %v3266, %v3314
        %3316 = vdwg.mxu0
        %3317 = vst [vmem:[%s556] sm:$0xff] %v1936
        %3318 = vst [vmem:[%s556 + $0x8] sm:$0xff] %v2034
        %3319 = vst [vmem:[%s556 + $0x10] sm:$0xff] %v1938
        %3320 = vst [vmem:[%s556 + $0x18] sm:$0xff] %v2036
        %3321 = vst [vmem:[%s556 + $0x20] sm:$0xff] %v1941
        %3322 = vst [vmem:[%s556 + $0x28] sm:$0xff] %v2039
        %3323 = vst [vmem:[%s556 + $0x30] sm:$0xff] %v1943
        %3324 = vst [vmem:[%s556 + $0x38] sm:$0xff] %v2041
        %3325 = vst [vmem:[%s556 + $0x40] sm:$0xff] %v1946
        %3326 = vst [vmem:[%s556 + $0x48] sm:$0xff] %v2044
        %3327 = vst [vmem:[%s556 + $0x50] sm:$0xff] %v1948
        %3328 = vst [vmem:[%s556 + $0x58] sm:$0xff] %v2046
        %3329 = vst [vmem:[%s556 + $0x60] sm:$0xff] %v1951
        %3330 = vst [vmem:[%s556 + $0x68] sm:$0xff] %v2049
        %3331 = vst [vmem:[%s556 + $0x70] sm:$0xff] %v1953
        %3332 = vst [vmem:[%s556 + $0x78] sm:$0xff] %v2051
        %3333 = vst [vmem:[%s556 + $0x80] sm:$0xff] %v1956
        %3334 = vst [vmem:[%s556 + $0x88] sm:$0xff] %v2054
        %3335 = vst [vmem:[%s556 + $0x90] sm:$0xff] %v1958
        %3336 = vst [vmem:[%s556 + $0x98] sm:$0xff] %v2056
        %3337 = vst [vmem:[%s556 + $0xa0] sm:$0xff] %v1961
        %3338 = vst [vmem:[%s556 + $0xa8] sm:$0xff] %v2059
        %3339 = vst [vmem:[%s556 + $0xb0] sm:$0xff] %v1963
        %3340 = vst [vmem:[%s556 + $0xb8] sm:$0xff] %v2061
        %3341 = vst [vmem:[%s556 + $0xc0] sm:$0xff] %v1966
        %3342 = vst [vmem:[%s556 + $0xc8] sm:$0xff] %v2064
        %3343 = vst [vmem:[%s556 + $0xd0] sm:$0xff] %v1968
        %3344 = vst [vmem:[%s556 + $0xd8] sm:$0xff] %v2066
        %3345 = vst [vmem:[%s556 + $0xe0] sm:$0xff] %v1971
        %3346 = vst [vmem:[%s556 + $0xe8] sm:$0xff] %v2069
        %3347 = vst [vmem:[%s556 + $0xf0] sm:$0xff] %v1973
        %3348 = vst [vmem:[%s556 + $0xf8] sm:$0xff] %v2071
        %3349 = vst [vmem:[%s549] sm:$0xff] %v2984
        %3350 = vst [vmem:[%s549 + $0x8] sm:$0xff] %v3082
        %3351 = vst [vmem:[%s549 + $0x10] sm:$0xff] %v3180
        %3352 = vst [vmem:[%s549 + $0x18] sm:$0xff] %v3278
        %3353 = vst [vmem:[%s549 + $0x20] sm:$0xff] %v2986
        %3354 = vst [vmem:[%s549 + $0x28] sm:$0xff] %v3084
        %3355 = vst [vmem:[%s549 + $0x30] sm:$0xff] %v3182
        %3356 = vst [vmem:[%s549 + $0x38] sm:$0xff] %v3280
        %3357 = vst [vmem:[%s549 + $0x40] sm:$0xff] %v2989
        %3358 = vst [vmem:[%s549 + $0x48] sm:$0xff] %v3087
        %3359 = vst [vmem:[%s549 + $0x50] sm:$0xff] %v3185
        %3360 = vst [vmem:[%s549 + $0x58] sm:$0xff] %v3283
        %3361 = vst [vmem:[%s549 + $0x60] sm:$0xff] %v2991
        %3362 = vst [vmem:[%s549 + $0x68] sm:$0xff] %v3089
        %3363 = vst [vmem:[%s549 + $0x70] sm:$0xff] %v3187
        %3364 = vst [vmem:[%s549 + $0x78] sm:$0xff] %v3285
        %3365 = vst [vmem:[%s549 + $0x80] sm:$0xff] %v2994
        %3366 = vst [vmem:[%s549 + $0x88] sm:$0xff] %v3092
        %3367 = vst [vmem:[%s549 + $0x90] sm:$0xff] %v3190
        %3368 = vst [vmem:[%s549 + $0x98] sm:$0xff] %v3288
        %3369 = vst [vmem:[%s549 + $0xa0] sm:$0xff] %v2996
        %3370 = vst [vmem:[%s549 + $0xa8] sm:$0xff] %v3094
        %3371 = vst [vmem:[%s549 + $0xb0] sm:$0xff] %v3192
        %3372 = vst [vmem:[%s549 + $0xb8] sm:$0xff] %v3290
        %3373 = vst [vmem:[%s549 + $0xc0] sm:$0xff] %v2999
        %3374 = vst [vmem:[%s549 + $0xc8] sm:$0xff] %v3097
        %3375 = vst [vmem:[%s549 + $0xd0] sm:$0xff] %v3195
        %3376 = vst [vmem:[%s549 + $0xd8] sm:$0xff] %v3293
        %3377 = vst [vmem:[%s549 + $0xe0] sm:$0xff] %v3001
        %3378 = vst [vmem:[%s549 + $0xe8] sm:$0xff] %v3099
        %3379 = vst [vmem:[%s549 + $0xf0] sm:$0xff] %v3197
        %3380 = vst [vmem:[%s549 + $0xf8] sm:$0xff] %v3295
        %3381 = vst [vmem:[%s549 + $0x100] sm:$0xff] %v3004
        %3382 = vst [vmem:[%s549 + $0x108] sm:$0xff] %v3102
        %3383 = vst [vmem:[%s549 + $0x110] sm:$0xff] %v3200
        %3384 = vst [vmem:[%s549 + $0x118] sm:$0xff] %v3298
        %3385 = vst [vmem:[%s549 + $0x120] sm:$0xff] %v3006
        %3386 = vst [vmem:[%s549 + $0x128] sm:$0xff] %v3104
        %3387 = vst [vmem:[%s549 + $0x130] sm:$0xff] %v3202
        %3388 = vst [vmem:[%s549 + $0x138] sm:$0xff] %v3300
        %3389 = vst [vmem:[%s549 + $0x140] sm:$0xff] %v3009
        %3390 = vst [vmem:[%s549 + $0x148] sm:$0xff] %v3107
        %3391 = vst [vmem:[%s549 + $0x150] sm:$0xff] %v3205
        %3392 = vst [vmem:[%s549 + $0x158] sm:$0xff] %v3303
        %3393 = vst [vmem:[%s549 + $0x160] sm:$0xff] %v3011
        %3394 = vst [vmem:[%s549 + $0x168] sm:$0xff] %v3109
        %3395 = vst [vmem:[%s549 + $0x170] sm:$0xff] %v3207
        %3396 = vst [vmem:[%s549 + $0x178] sm:$0xff] %v3305
        %3397 = vst [vmem:[%s549 + $0x180] sm:$0xff] %v3014
        %3398 = vst [vmem:[%s549 + $0x188] sm:$0xff] %v3112
        %3399 = vst [vmem:[%s549 + $0x190] sm:$0xff] %v3210
        %3400 = vst [vmem:[%s549 + $0x198] sm:$0xff] %v3308
        %3401 = vst [vmem:[%s549 + $0x1a0] sm:$0xff] %v3016
        %3402 = vst [vmem:[%s549 + $0x1a8] sm:$0xff] %v3114
        %3403 = vst [vmem:[%s549 + $0x1b0] sm:$0xff] %v3212
        %3404 = vst [vmem:[%s549 + $0x1b8] sm:$0xff] %v3310
        %3405 = vst [vmem:[%s549 + $0x1c0] sm:$0xff] %v3019
        %3406 = vst [vmem:[%s549 + $0x1c8] sm:$0xff] %v3117
        %3407 = vst [vmem:[%s549 + $0x1d0] sm:$0xff] %v3215
        %3408 = vst [vmem:[%s549 + $0x1d8] sm:$0xff] %v3313
        %3409 = vst [vmem:[%s549 + $0x1e0] sm:$0xff] %v3021
        %3410 = vst [vmem:[%s549 + $0x1e8] sm:$0xff] %v3119
        %3411 = vst [vmem:[%s549 + $0x1f0] sm:$0xff] %v3217
        %3412 = vst [vmem:[%s549 + $0x1f8] sm:$0xff] %v3315
        %s3413 = sand.u32 %s266, 1
        %s3414 = scalar_lea.sflag [#allocation4], %s3413
        %s3415 = sand.u32 %s266, 1
        %s3416 = smul.addr %s3415, 512
        %s3417 = scalar_lea.vmem [#allocation16], %s3416
        %s3418 = sand.u32 %s292, 1
        %s3419 = scalar_lea.sflag [#allocation18], %s3418
        %s3420 = sand.u32 %s292, 1
        %s3421 = smul.addr %s3420, 256
        %s3422 = scalar_lea.vmem [#allocation17], %s3421
        // Predicated region
        $region93: #{tpu_custom_call.1} parent=59 // pred_check
          %p3423 = pneg %p276
        $region94: #{tpu_custom_call.1} parent=59 // pred_check_branch
          %3425 = sbr.rel (%p3423) target = $region96
        $region95: #{tpu_custom_call.1} parent=59 // pred_region
          %s3426 = smul.u32 16, %s38
          %3428 = vsyncadd %s3414, 0
          %s3429 = smul.addr %s3426, 4
          %s3430 = smul.addr %s3429, 8
          %s3431 = scalar_lea.hbm %s10, %s3430
          %s3432 = sshll.u32 %s3417, 4
          %s3433 = int_to_ptr.vmem [resolvable:$true] %s3432
          %s3434 = sshll.u32 %s3431, 4
          %s3435 = int_to_ptr.hbm [resolvable:$true] %s3434
          %3440 = dma.vmem_to_hbm [thread:$0]  %s3433, 8192, %s3435, %s3414, 512, 512, 32
        $region96: #{tpu_custom_call.1} parent=59 // pred_fallthru
          _
        // Predicated region
        $region97: #{tpu_custom_call.1} parent=59 // pred_check
          %p3441 = pneg %p302
        $region98: #{tpu_custom_call.1} parent=59 // pred_check_branch
          %3443 = sbr.rel (%p3441) target = $region100
        $region99: #{tpu_custom_call.1} parent=59 // pred_region
          %s3444 = smul.u32 16, %s38
          %3446 = vsyncadd %s3419, 0
          %s3447 = smul.addr %s3444, 2
          %s3448 = smul.addr %s3447, 8
          %s3449 = scalar_lea.hbm %s11, %s3448
          %s3450 = sshll.u32 %s3422, 4
          %s3451 = int_to_ptr.vmem [resolvable:$true] %s3450
          %s3452 = sshll.u32 %s3449, 4
          %s3453 = int_to_ptr.hbm [resolvable:$true] %s3452
          %3458 = dma.vmem_to_hbm [thread:$0]  %s3451, 4096, %s3453, %s3419, 256, 256, 16
        $region100: #{tpu_custom_call.1} parent=59 // pred_fallthru
          _
      $region60: #{tpu_custom_call.1} parent=5 // pred_fallthru
        _
      %p3459 = scmp.le.s32.totalorder 2, %s33
      // Predicated region
      $region101: #{tpu_custom_call.1} parent=5 // pred_check
        %p3460 = pneg %p3459
      $region102: #{tpu_custom_call.1} parent=5 // pred_check_branch
        %3462 = sbr.rel (%p3460) target = $region104
      $region103: #{tpu_custom_call.1} parent=5 // pred_region
        %s3463 = ssub.s32 %s33, 2
        // Predicated region
        $region105: #{tpu_custom_call.1} parent=103 // pred_check
          %p3464 = pneg %p282
        $region106: #{tpu_custom_call.1} parent=103 // pred_check_branch
          %3466 = sbr.rel (%p3464) target = $region108
        $region107: #{tpu_custom_call.1} parent=103 // pred_region
          %s3467 = sand.u32 %s267, 1
          %s3468 = scalar_lea.sflag [#allocation4], %s3467
          %s3469 = sand.u32 %s267, 1
          %s3470 = smul.addr %s3469, 512
          %s3471 = scalar_lea.vmem [#allocation16], %s3470
          %3473 = dma.done %s3468, 8192
        $region108: #{tpu_custom_call.1} parent=103 // pred_fallthru
          _
        // Predicated region
        $region109: #{tpu_custom_call.1} parent=103 // pred_check
          %p3474 = pneg %p308
        $region110: #{tpu_custom_call.1} parent=103 // pred_check_branch
          %3476 = sbr.rel (%p3474) target = $region112
        $region111: #{tpu_custom_call.1} parent=103 // pred_region
          %s3477 = sand.u32 %s293, 1
          %s3478 = scalar_lea.sflag [#allocation18], %s3477
          %s3479 = sand.u32 %s293, 1
          %s3480 = smul.addr %s3479, 256
          %s3481 = scalar_lea.vmem [#allocation17], %s3480
          %3483 = dma.done %s3478, 4096
        $region112: #{tpu_custom_call.1} parent=103 // pred_fallthru
          _
      $region104: #{tpu_custom_call.1} parent=5 // pred_fallthru
        _
    $region6: #{tpu_custom_call.1} parent=1 // loop_footer
      %s37 = sadd.s32 1, %s33
    $region7: #{tpu_custom_call.1} parent=1 // loop_footer_branch
      %32 = sbr.rel target = $region3
    $region8: #{tpu_custom_call.1} parent=1 // loop_exit
      _
    %3484 = vsyncpa [#allocation3], 1
    %s3485 = scalar_lea.sflag [#allocation3], 1
    %3486 = vsyncpa %s3485, 1
    %3487 = vsyncpa [#allocation6], 1
    %s3488 = scalar_lea.sflag [#allocation6], 1
    %3489 = vsyncpa %s3488, 1
    %3490 = vsyncpa [#allocation9], 1
    %3491 = vsyncpa [#allocation12], 1
    %3492 = vsyncpa [#allocation15], 1
    %3493 = vsyncpa [#allocation4], 1
    %s3494 = scalar_lea.sflag [#allocation4], 1
    %3495 = vsyncpa %s3494, 1
    %3496 = vsyncpa [#allocation18], 1
    %s3497 = scalar_lea.sflag [#allocation18], 1
    %3498 = vsyncpa %s3497, 1

</llo_original>
